<compile_context>
chip_gen: v5e
topology: v5e:2x2
jax: 0.10.0
libtpu: 0.0.40
codegen_flags: <defaults>
</compile_context>

<pallas_src>
import functools

import jax
import jax.numpy as jnp
from jax.experimental import pallas as pl
from jax.experimental.pallas import tpu as pltpu


# Below this many elements the fixed pallas_call launch + reshape overhead
# dominates a fully-fused XLA elementwise computation.
_SMALL_INPUT_ELEMS = 128 * 1024
_SUBLANE_ALIGN = 32  # multiple of 32 sublanes keeps f32/bf16/int8 vregs packed


def _threshold_relu_kernel(x_ref, o_ref, *, slope, max_val):
    x = x_ref[...]
    if slope != 1.0:  # static Python check; skips the VPU mul when slope == 1
        x = x * jnp.asarray(slope, dtype=x.dtype)
    y = jnp.maximum(x, jnp.asarray(0, dtype=x.dtype))
    o_ref[...] = jnp.minimum(y, jnp.asarray(max_val, dtype=x.dtype))


def _threshold_relu_jnp(z, max_val, slope):
    """Plain fused-elementwise fallback for tiny inputs / ragged tails."""
    dt = z.dtype
    x = z * jnp.asarray(slope, dtype=dt) if slope != 1.0 else z
    return jnp.minimum(jnp.maximum(x, jnp.asarray(0, dtype=dt)),
                       jnp.asarray(max_val, dtype=dt))


def _vmem_capacity_bytes():
    """Physical VMEM of the current generation; conservative 64 MiB default."""
    try:
        cap = getattr(pltpu.get_tpu_info(), "vmem_capacity_bytes", None)
        if cap:
            return int(cap)
    except Exception:
        pass
    return 64 << 20  # v7x-sized fallback


def _choose_tile_rows(rows, lane, itemsize, vmem_cap_bytes):
    """Pick the block row count for a (rows, lane) streaming slab."""
    SUB = _SUBLANE_ALIGN
    # Generation-aware block target: v5e/v6e (128 MiB VMEM) comfortably afford
    # 16 MiB blocks; v7x (64 MiB) targets ~10 MiB so the double-buffered
    # in + out footprint (4x block) stays well under ~56 MiB.
    if vmem_cap_bytes >= (96 << 20):
        target_bytes = 16 << 20
    else:
        target_bytes = 10 << 20
    target_rows = max(SUB, (target_bytes // (lane * itemsize)) // SUB * SUB)

    if rows <= 2 * SUB:
        return rows  # too small to split usefully; single full-array block

    # Cap at rows//2 (32-sublane aligned) so there are always >= 2 grid steps
    # -> dimension_semantics=("parallel",) can use both v7x TensorCores.
    half_rows = max(SUB, (rows // 2) // SUB * SUB)
    tile_rows = min(target_rows, half_rows)

    # Nudge toward an even number of grid steps for 2-core balance (best
    # effort; an odd count only costs a little imbalance, never correctness).
    steps = pl.cdiv(rows, tile_rows)
    if steps % 2 == 1:
        steps += 1
        tile_rows = min(tile_rows,
                        max(SUB, pl.cdiv(pl.cdiv(rows, steps), SUB) * SUB))
    return tile_rows


def _threshold_relu_2d(x2d, max_val, slope, donate_input=False):
    """Run the streaming kernel on a lane-dense (rows, lane) slab."""
    rows, lane = x2d.shape
    itemsize = jnp.dtype(x2d.dtype).itemsize
    vmem_cap = _vmem_capacity_bytes()
    tile_rows = _choose_tile_rows(rows, lane, itemsize, vmem_cap)
    block_bytes = tile_rows * lane * itemsize

    # 2x-buffered input + 2x-buffered output + a few MiB scratch headroom,
    # capped comfortably under the detected generation's physical VMEM.
    vmem_limit = int(min(4 * block_bytes + (8 << 20), vmem_cap * 7 // 8))

    kernel = functools.partial(
        _threshold_relu_kernel, slope=float(slope), max_val=float(max_val)
    )

    return pl.pallas_call(
        kernel,
        out_shape=jax.ShapeDtypeStruct((rows, lane), x2d.dtype),
        grid_spec=pltpu.PrefetchScalarGridSpec(
            num_scalar_prefetch=0,
            grid=(pl.cdiv(rows, tile_rows),),
            in_specs=[pl.BlockSpec((tile_rows, lane), lambda i: (i, 0))],
            out_specs=pl.BlockSpec((tile_rows, lane), lambda i: (i, 0)),
        ),
        compiler_params=pltpu.CompilerParams(
            dimension_semantics=("parallel",),  # shards steps across v7x's 2 TCs
            vmem_limit_bytes=vmem_limit,
        ),
        # Lets XLA reuse the input buffer when the caller donates it; otherwise
        # XLA inserts a protective copy and behaviour is unchanged.
        input_output_aliases=({0: 0} if donate_input else {}),
    )(x2d)


def threshold_relu(z, max_val=1.0, slope=1.0, donate_input=False):
    """Elementwise ThresholdReLU via Pallas; any shape, same shape/dtype out."""
    orig_shape = z.shape
    n = int(z.size)
    if n == 0:
        return z

    # Tiny tensors: pallas_call launch overhead dominates; XLA fuses this.
    if n < _SMALL_INPUT_ELEMS:
        return _threshold_relu_jnp(z, max_val, slope)

    flat = z.reshape(-1)

    # Prefer a lane width that divides n exactly -> no pad / slice copies.
    lane = next((l for l in (1024, 512, 256, 128) if n % l == 0), None)
    if lane is not None:
        out2d = _threshold_relu_2d(flat.reshape(n // lane, lane),
                                   max_val, slope, donate_input)
        return out2d.reshape(orig_shape)

    # Ragged size: kernel on the 1024-aligned prefix, tiny (<1024-elem) tail
    # via jnp. Avoids jnp.pad + output slicing which would roughly triple the
    # HBM traffic of this bandwidth-bound op.
    n_main = (n // 1024) * 1024
    out_main = _threshold_relu_2d(flat[:n_main].reshape(n_main // 1024, 1024),
                                  max_val, slope, donate_input)
    out_tail = _threshold_relu_jnp(flat[n_main:], max_val, slope)
    out_flat = jnp.concatenate([out_main.reshape(-1), out_tail])
    return out_flat.reshape(orig_shape)


if __name__ == "__main__":
    key = jax.random.PRNGKey(0)
    k1, k2, k3 = jax.random.split(key, 3)
    max_val, slope = 1.0, 1.5  # exercise the slope != 1 path

    # 1) Small NCHW input matching the module's intended use (fast jnp path).
    x = jax.random.normal(k1, (2, 4, 16, 16), dtype=jnp.float32) * 2.0
    out = jax.block_until_ready(threshold_relu(x, max_val=max_val, slope=slope))
    ref = jnp.minimum(jnp.maximum(x * slope, 0.0), max_val)
    assert out.shape == x.shape and out.dtype == x.dtype
    assert jnp.allclose(out, ref, atol=1e-6), "mismatch vs reference (small)"

    # 2) Larger input exercising the Pallas path: lane=1024, >=2 even grid steps.
    x_big = jax.random.normal(k2, (8, 16, 128, 128), dtype=jnp.float32) * 2.0
    out_big = jax.block_until_ready(threshold_relu(x_big, max_val=max_val, slope=slope))
    ref_big = jnp.minimum(jnp.maximum(x_big * slope, 0.0), max_val)
    assert out_big.shape == x_big.shape and out_big.dtype == x_big.dtype
    assert jnp.allclose(out_big, ref_big, atol=1e-6), "mismatch vs reference (large)"

    # 2b) Same input through the optional output-aliasing path.
    out_alias = jax.block_until_ready(
        threshold_relu(x_big, max_val=max_val, slope=slope, donate_input=True))
    assert jnp.allclose(out_alias, ref_big, atol=1e-6), "mismatch vs reference (alias)"

    # 3) Ragged size (not a multiple of 128): kernel prefix + jnp tail path.
    x_rag = jax.random.normal(k3, (131075,), dtype=jnp.float32) * 2.0
    out_rag = jax.block_until_ready(threshold_relu(x_rag, max_val=0.8, slope=1.0))
    ref_rag = jnp.minimum(jnp.maximum(x_rag, 0.0), 0.8)
    assert out_rag.shape == x_rag.shape
    assert jnp.allclose(out_rag, ref_rag, atol=1e-6), "mismatch vs reference (ragged)"

    print("KERNEL_OK")
</pallas_src>

<mosaic_0001>
module attributes {stable_mosaic.version = 11 : i64} {
  func.func @_threshold_relu_kernel(%arg0: i32, %arg1: memref<1024x1024xf32, #tpu.memory_space<vmem>>, %arg2: memref<1024x1024xf32, #tpu.memory_space<vmem>>) attributes {dimension_semantics = [#tpu.dimension_semantics<parallel>], iteration_bounds = array<i64: 2>, scalar_prefetch = 0 : i64, scratch_operands = 0 : i64, tpu.core_type = #tpu.core_type<tc>, window_params = [{transform_indices = @transform_0, window_bounds = array<i64: 1024, 1024>}, {transform_indices = @transform_1, window_bounds = array<i64: 1024, 1024>}]} {
    %c0 = arith.constant 0 : index
    %c0_0 = arith.constant 0 : index
    %0 = vector.load %arg1[%c0, %c0_0] : memref<1024x1024xf32, #tpu.memory_space<vmem>>, vector<1024x1024xf32>
    %cst = arith.constant 1.500000e+00 : f32
    %1 = vector.broadcast %cst : f32 to vector<1024x1024xf32>
    %2 = arith.mulf %0, %1 : vector<1024x1024xf32>
    %cst_1 = arith.constant 0.000000e+00 : f32
    %3 = vector.broadcast %cst_1 : f32 to vector<1024x1024xf32>
    %4 = arith.maximumf %2, %3 : vector<1024x1024xf32>
    %cst_2 = arith.constant 1.000000e+00 : f32
    %5 = vector.broadcast %cst_2 : f32 to vector<1024x1024xf32>
    %6 = arith.minimumf %4, %5 : vector<1024x1024xf32>
    %c0_3 = arith.constant 0 : index
    %c0_4 = arith.constant 0 : index
    %7 = vector.load %arg2[%c0_3, %c0_4] : memref<1024x1024xf32, #tpu.memory_space<vmem>>, vector<1024x1024xf32>
    tpu.vector_store %arg2[%c0_3, %c0_4], %6 {strides = array<i32>} : memref<1024x1024xf32, #tpu.memory_space<vmem>>, vector<1024x1024xf32>,
    return
  }
  func.func @transform_0(%arg0: i32) -> (i32, i32) {
    %c0_i32 = arith.constant 0 : i32
    %c0_i32_0 = arith.constant 0 : i32
    return %arg0, %c0_i32 : i32, i32
  }
  func.func @transform_1(%arg0: i32) -> (i32, i32) {
    %c0_i32 = arith.constant 0 : i32
    %c0_i32_0 = arith.constant 0 : i32
    return %arg0, %c0_i32 : i32, i32
  }
}

</mosaic_0001>

<llo_original>
// kernel: tpu_custom_call.1
$region0: #{tpu_custom_call.1}
  #allocation0 [shape = 'u32[]', space=smem, size = 0x4, offset = 0x4, fixed_abs, tag = 'smem constant byte address 0x4 - core index']
  #allocation1 [shape = 'u32[72,128]{1,0:T(1,128)}', space=vmem, size = 0x9000, scoped, tag = 'internal scratch']
  %s0 = inlined_call_operand.hbm [shape: f32[2048,1024], index: 0, kind: input, shape index: {}]
  %s1 = inlined_call_operand.hbm [shape: f32[2048,1024], index: 1, kind: output, shape index: {}]
  %s2 = sld [smem:[#allocation0]]
  $region41: #{tpu_custom_call.1} parent=0
    _
  %s4 = ssub.s32 1, %s2
  %s5 = scalar_select 0, %s4, %s2
  $region1: #{tpu_custom_call.1} parent=0
    #allocation2 [shape = 'u8[8388608]{0}', space=vmem, size = 0x800000, scoped, tag = 'input window, operand 0']
    #allocation3 [shape = 's32[2]{0}', space=sflag, size = 0x8, scoped, tag = 'scoped memory for tpu_custom_call.1']
    #allocation4 [shape = 's32[2]{0}', space=sflag, size = 0x8, scoped, tag = 'scoped memory for tpu_custom_call.1']
    #allocation5 [shape = 'u8[8388608]{0}', space=vmem, size = 0x800000, scoped, tag = 'output window, operand 0']
    %6 = vsyncpa [#allocation3], 0
    %s7 = scalar_lea.sflag [#allocation3], 1
    %8 = vsyncpa %s7, 0
    %9 = vsyncpa [#allocation4], 0
    %s10 = scalar_lea.sflag [#allocation4], 1
    %11 = vsyncpa %s10, 0
    loop: start=0, step=1, limit=4
    $region2: #{tpu_custom_call.1} parent=1 // loop_pre_header
      _
    $region3: #{tpu_custom_call.1} parent=1 // loop_header
      %s13 = sphi 0, %s17
      %p14 = scmp.ge.s32.totalorder %s13, 4
      %s23 = sphi 0, %s25
      %s26 = sphi 0, %s23
      %s27 = sphi 0, %s26
      %s43 = sphi 0, %s27
      %s49 = sphi 0, %s51
      %s52 = sphi 0, %s49
      %s53 = sphi 0, %s52
      %s69 = sphi 0, %s53
    $region4: #{tpu_custom_call.1} parent=1 // loop_header_branch
      %16 = sbr.rel (%p14) target = $region8
    $region5: #{tpu_custom_call.1} parent=1 // loop_body
      %s18 = ssub.s32 %s13, 1
      %s19 = ssub.s32 %s13, 2
      %s20 = sadd.s32 %s13, 1
      %s21 = ssub.s32 %s13, %s20
      %p22 = scmp.eq.s32.totalorder %s21, 0
      %s24 = sadd.s32 %s23, 1
      %s25 = scalar_select %p22, %s23, %s24
      %p28 = pneg %p22
      %p29 = scmp.eq.s32.totalorder %s13, 1
      %p30 = por %p28, %p29
      %p31 = scmp.ne.s32.totalorder %s23, %s26
      %p32 = scmp.eq.s32.totalorder %s13, 0
      %p33 = por %p31, %p32
      %p34 = scmp.ne.s32.totalorder %s23, %s26
      %p35 = scmp.eq.s32.totalorder %s18, 1
      %p36 = por %p34, %p35
      %p37 = scmp.ne.s32.totalorder %s26, %s27
      %p38 = scmp.eq.s32.totalorder %s18, 0
      %p39 = por %p37, %p38
      %p40 = scmp.ne.s32.totalorder %s26, %s27
      %p41 = scmp.eq.s32.totalorder %s19, 1
      %p42 = por %p40, %p41
      %p44 = scmp.ne.s32.totalorder %s27, %s43
      %p45 = scmp.eq.s32.totalorder %s19, 0
      %p46 = por %p44, %p45
      %s47 = ssub.s32 %s13, %s20
      %p48 = scmp.eq.s32.totalorder %s47, 0
      %s50 = sadd.s32 %s49, 1
      %s51 = scalar_select %p48, %s49, %s50
      %p54 = pneg %p48
      %p55 = scmp.eq.s32.totalorder %s13, 1
      %p56 = por %p54, %p55
      %p57 = scmp.ne.s32.totalorder %s49, %s52
      %p58 = scmp.eq.s32.totalorder %s13, 0
      %p59 = por %p57, %p58
      %p60 = scmp.ne.s32.totalorder %s49, %s52
      %p61 = scmp.eq.s32.totalorder %s18, 1
      %p62 = por %p60, %p61
      %p63 = scmp.ne.s32.totalorder %s52, %s53
      %p64 = scmp.eq.s32.totalorder %s18, 0
      %p65 = por %p63, %p64
      %p66 = scmp.ne.s32.totalorder %s52, %s53
      %p67 = scmp.eq.s32.totalorder %s19, 1
      %p68 = por %p66, %p67
      %p70 = scmp.ne.s32.totalorder %s53, %s69
      %p71 = scmp.eq.s32.totalorder %s19, 0
      %p72 = por %p70, %p71
      %p73 = scmp.le.s32.totalorder 1, %s13
      %p74 = scmp.lt.s32.totalorder %s13, 3
      %p75 = pnand %p73, %p74
      %p76 = pneg %p75
      // Predicated region
      $region9: #{tpu_custom_call.1} parent=5 // pred_check
        _
      $region10: #{tpu_custom_call.1} parent=5 // pred_check_branch
        %78 = sbr.rel (%p75) target = $region12
      $region11: #{tpu_custom_call.1} parent=5 // pred_region
        %s79 = ssub.s32 %s13, 1
      $region12: #{tpu_custom_call.1} parent=5 // pred_fallthru
        _
      %p80 = scmp.lt.s32.totalorder %s13, 2
      // Predicated region
      $region13: #{tpu_custom_call.1} parent=5 // pred_check
        %p81 = pneg %p80
      $region14: #{tpu_custom_call.1} parent=5 // pred_check_branch
        %83 = sbr.rel (%p81) target = $region16
      $region15: #{tpu_custom_call.1} parent=5 // pred_region
        // Predicated region
        $region17: #{tpu_custom_call.1} parent=15 // pred_check
          %p84 = pneg %p33
        $region18: #{tpu_custom_call.1} parent=15 // pred_check_branch
          %86 = sbr.rel (%p84) target = $region20
        $region19: #{tpu_custom_call.1} parent=15 // pred_region
          %s87 = sand.u32 %s23, 1
          %s88 = scalar_lea.sflag [#allocation3], %s87
          %s89 = sand.u32 %s23, 1
          %s90 = smul.addr %s89, 8192
          %s91 = scalar_lea.vmem [#allocation2], %s90
          %s92 = smul.u32 128, %s13
          %94 = vsyncadd %s88, 0
          %s95 = smul.addr %s92, 8
          %s96 = smul.addr %s95, 8
          %s97 = scalar_lea.hbm %s0, %s96
          %s98 = sshll.u32 %s97, 4
          %s99 = int_to_ptr.hbm [resolvable:$true] %s98
          %s100 = sshll.u32 %s91, 4
          %s101 = int_to_ptr.vmem [resolvable:$true] %s100
          %106 = dma.hbm_to_vmem [thread:$0]  %s99, 131072, %s101, %s88, 1024, 1024, 64
        $region20: #{tpu_custom_call.1} parent=15 // pred_fallthru
          _
      $region16: #{tpu_custom_call.1} parent=5 // pred_fallthru
        _
      %p107 = scmp.le.s32.totalorder 1, %s13
      %p108 = scmp.lt.s32.totalorder %s13, 3
      %p109 = pnand %p107, %p108
      %p110 = pneg %p109
      // Predicated region
      $region21: #{tpu_custom_call.1} parent=5 // pred_check
        _
      $region22: #{tpu_custom_call.1} parent=5 // pred_check_branch
        %112 = sbr.rel (%p109) target = $region24
      $region23: #{tpu_custom_call.1} parent=5 // pred_region
        %s113 = ssub.s32 %s13, 1
        %s114 = sand.u32 %s26, 1
        %s115 = scalar_lea.sflag [#allocation3], %s114
        %s116 = sand.u32 %s26, 1
        %s117 = smul.addr %s116, 8192
        %s118 = scalar_lea.vmem [#allocation2], %s117
        // Predicated region
        $region25: #{tpu_custom_call.1} parent=23 // pred_check
          %p119 = pneg %p39
        $region26: #{tpu_custom_call.1} parent=23 // pred_check_branch
          %121 = sbr.rel (%p119) target = $region28
        $region27: #{tpu_custom_call.1} parent=23 // pred_region
          %123 = dma.done %s115, 131072
        $region28: #{tpu_custom_call.1} parent=23 // pred_fallthru
          _
        %s124 = sand.u32 %s26, 1
        %s125 = scalar_lea.sflag [#allocation3], %s124
        %s126 = sand.u32 %s26, 1
        %s127 = smul.addr %s126, 8192
        %s128 = scalar_lea.vmem [#allocation2], %s127
        %p129 = pneg %p39
        %p130 = pneg %p36
        %p131 = pneg %p65
        %p132 = pneg %p62
        %s133 = sand.u32 %s52, 1
        %s134 = scalar_lea.sflag [#allocation4], %s133
        %s135 = sand.u32 %s52, 1
        %s136 = smul.addr %s135, 8192
        %s137 = scalar_lea.vmem [#allocation5], %s136
        %s138 = smul.u32 128, %s18
        %s139 = smul.u32 128, %s18
        %v140 = vld [vmem:[%s118] sm:$0xff]
        %v141 = vld [vmem:[%s118 + $0x8] sm:$0xff]
        %v142 = vld [vmem:[%s118 + $0x10] sm:$0xff]
        %v143 = vld [vmem:[%s118 + $0x18] sm:$0xff]
        %v144 = vld [vmem:[%s118 + $0x20] sm:$0xff]
        %v145 = vld [vmem:[%s118 + $0x28] sm:$0xff]
        %v146 = vld [vmem:[%s118 + $0x30] sm:$0xff]
        %v147 = vld [vmem:[%s118 + $0x38] sm:$0xff]
        %v148 = vld [vmem:[%s118 + $0x40] sm:$0xff]
        %v149 = vld [vmem:[%s118 + $0x48] sm:$0xff]
        %v150 = vld [vmem:[%s118 + $0x50] sm:$0xff]
        %v151 = vld [vmem:[%s118 + $0x58] sm:$0xff]
        %v152 = vld [vmem:[%s118 + $0x60] sm:$0xff]
        %v153 = vld [vmem:[%s118 + $0x68] sm:$0xff]
        %v154 = vld [vmem:[%s118 + $0x70] sm:$0xff]
        %v155 = vld [vmem:[%s118 + $0x78] sm:$0xff]
        %v156 = vld [vmem:[%s118 + $0x80] sm:$0xff]
        %v157 = vld [vmem:[%s118 + $0x88] sm:$0xff]
        %v158 = vld [vmem:[%s118 + $0x90] sm:$0xff]
        %v159 = vld [vmem:[%s118 + $0x98] sm:$0xff]
        %v160 = vld [vmem:[%s118 + $0xa0] sm:$0xff]
        %v161 = vld [vmem:[%s118 + $0xa8] sm:$0xff]
        %v162 = vld [vmem:[%s118 + $0xb0] sm:$0xff]
        %v163 = vld [vmem:[%s118 + $0xb8] sm:$0xff]
        %v164 = vld [vmem:[%s118 + $0xc0] sm:$0xff]
        %v165 = vld [vmem:[%s118 + $0xc8] sm:$0xff]
        %v166 = vld [vmem:[%s118 + $0xd0] sm:$0xff]
        %v167 = vld [vmem:[%s118 + $0xd8] sm:$0xff]
        %v168 = vld [vmem:[%s118 + $0xe0] sm:$0xff]
        %v169 = vld [vmem:[%s118 + $0xe8] sm:$0xff]
        %v170 = vld [vmem:[%s118 + $0xf0] sm:$0xff]
        %v171 = vld [vmem:[%s118 + $0xf8] sm:$0xff]
        %v172 = vld [vmem:[%s118 + $0x100] sm:$0xff]
        %v173 = vld [vmem:[%s118 + $0x108] sm:$0xff]
        %v174 = vld [vmem:[%s118 + $0x110] sm:$0xff]
        %v175 = vld [vmem:[%s118 + $0x118] sm:$0xff]
        %v176 = vld [vmem:[%s118 + $0x120] sm:$0xff]
        %v177 = vld [vmem:[%s118 + $0x128] sm:$0xff]
        %v178 = vld [vmem:[%s118 + $0x130] sm:$0xff]
        %v179 = vld [vmem:[%s118 + $0x138] sm:$0xff]
        %v180 = vld [vmem:[%s118 + $0x140] sm:$0xff]
        %v181 = vld [vmem:[%s118 + $0x148] sm:$0xff]
        %v182 = vld [vmem:[%s118 + $0x150] sm:$0xff]
        %v183 = vld [vmem:[%s118 + $0x158] sm:$0xff]
        %v184 = vld [vmem:[%s118 + $0x160] sm:$0xff]
        %v185 = vld [vmem:[%s118 + $0x168] sm:$0xff]
        %v186 = vld [vmem:[%s118 + $0x170] sm:$0xff]
        %v187 = vld [vmem:[%s118 + $0x178] sm:$0xff]
        %v188 = vld [vmem:[%s118 + $0x180] sm:$0xff]
        %v189 = vld [vmem:[%s118 + $0x188] sm:$0xff]
        %v190 = vld [vmem:[%s118 + $0x190] sm:$0xff]
        %v191 = vld [vmem:[%s118 + $0x198] sm:$0xff]
        %v192 = vld [vmem:[%s118 + $0x1a0] sm:$0xff]
        %v193 = vld [vmem:[%s118 + $0x1a8] sm:$0xff]
        %v194 = vld [vmem:[%s118 + $0x1b0] sm:$0xff]
        %v195 = vld [vmem:[%s118 + $0x1b8] sm:$0xff]
        %v196 = vld [vmem:[%s118 + $0x1c0] sm:$0xff]
        %v197 = vld [vmem:[%s118 + $0x1c8] sm:$0xff]
        %v198 = vld [vmem:[%s118 + $0x1d0] sm:$0xff]
        %v199 = vld [vmem:[%s118 + $0x1d8] sm:$0xff]
        %v200 = vld [vmem:[%s118 + $0x1e0] sm:$0xff]
        %v201 = vld [vmem:[%s118 + $0x1e8] sm:$0xff]
        %v202 = vld [vmem:[%s118 + $0x1f0] sm:$0xff]
        %v203 = vld [vmem:[%s118 + $0x1f8] sm:$0xff]
        %v204 = vld [vmem:[%s118 + $0x200] sm:$0xff]
        %v205 = vld [vmem:[%s118 + $0x208] sm:$0xff]
        %v206 = vld [vmem:[%s118 + $0x210] sm:$0xff]
        %v207 = vld [vmem:[%s118 + $0x218] sm:$0xff]
        %v208 = vld [vmem:[%s118 + $0x220] sm:$0xff]
        %v209 = vld [vmem:[%s118 + $0x228] sm:$0xff]
        %v210 = vld [vmem:[%s118 + $0x230] sm:$0xff]
        %v211 = vld [vmem:[%s118 + $0x238] sm:$0xff]
        %v212 = vld [vmem:[%s118 + $0x240] sm:$0xff]
        %v213 = vld [vmem:[%s118 + $0x248] sm:$0xff]
        %v214 = vld [vmem:[%s118 + $0x250] sm:$0xff]
        %v215 = vld [vmem:[%s118 + $0x258] sm:$0xff]
        %v216 = vld [vmem:[%s118 + $0x260] sm:$0xff]
        %v217 = vld [vmem:[%s118 + $0x268] sm:$0xff]
        %v218 = vld [vmem:[%s118 + $0x270] sm:$0xff]
        %v219 = vld [vmem:[%s118 + $0x278] sm:$0xff]
        %v220 = vld [vmem:[%s118 + $0x280] sm:$0xff]
        %v221 = vld [vmem:[%s118 + $0x288] sm:$0xff]
        %v222 = vld [vmem:[%s118 + $0x290] sm:$0xff]
        %v223 = vld [vmem:[%s118 + $0x298] sm:$0xff]
        %v224 = vld [vmem:[%s118 + $0x2a0] sm:$0xff]
        %v225 = vld [vmem:[%s118 + $0x2a8] sm:$0xff]
        %v226 = vld [vmem:[%s118 + $0x2b0] sm:$0xff]
        %v227 = vld [vmem:[%s118 + $0x2b8] sm:$0xff]
        %v228 = vld [vmem:[%s118 + $0x2c0] sm:$0xff]
        %v229 = vld [vmem:[%s118 + $0x2c8] sm:$0xff]
        %v230 = vld [vmem:[%s118 + $0x2d0] sm:$0xff]
        %v231 = vld [vmem:[%s118 + $0x2d8] sm:$0xff]
        %v232 = vld [vmem:[%s118 + $0x2e0] sm:$0xff]
        %v233 = vld [vmem:[%s118 + $0x2e8] sm:$0xff]
        %v234 = vld [vmem:[%s118 + $0x2f0] sm:$0xff]
        %v235 = vld [vmem:[%s118 + $0x2f8] sm:$0xff]
        %v236 = vld [vmem:[%s118 + $0x300] sm:$0xff]
        %v237 = vld [vmem:[%s118 + $0x308] sm:$0xff]
        %v238 = vld [vmem:[%s118 + $0x310] sm:$0xff]
        %v239 = vld [vmem:[%s118 + $0x318] sm:$0xff]
        %v240 = vld [vmem:[%s118 + $0x320] sm:$0xff]
        %v241 = vld [vmem:[%s118 + $0x328] sm:$0xff]
        %v242 = vld [vmem:[%s118 + $0x330] sm:$0xff]
        %v243 = vld [vmem:[%s118 + $0x338] sm:$0xff]
        %v244 = vld [vmem:[%s118 + $0x340] sm:$0xff]
        %v245 = vld [vmem:[%s118 + $0x348] sm:$0xff]
        %v246 = vld [vmem:[%s118 + $0x350] sm:$0xff]
        %v247 = vld [vmem:[%s118 + $0x358] sm:$0xff]
        %v248 = vld [vmem:[%s118 + $0x360] sm:$0xff]
        %v249 = vld [vmem:[%s118 + $0x368] sm:$0xff]
        %v250 = vld [vmem:[%s118 + $0x370] sm:$0xff]
        %v251 = vld [vmem:[%s118 + $0x378] sm:$0xff]
        %v252 = vld [vmem:[%s118 + $0x380] sm:$0xff]
        %v253 = vld [vmem:[%s118 + $0x388] sm:$0xff]
        %v254 = vld [vmem:[%s118 + $0x390] sm:$0xff]
        %v255 = vld [vmem:[%s118 + $0x398] sm:$0xff]
        %v256 = vld [vmem:[%s118 + $0x3a0] sm:$0xff]
        %v257 = vld [vmem:[%s118 + $0x3a8] sm:$0xff]
        %v258 = vld [vmem:[%s118 + $0x3b0] sm:$0xff]
        %v259 = vld [vmem:[%s118 + $0x3b8] sm:$0xff]
        %v260 = vld [vmem:[%s118 + $0x3c0] sm:$0xff]
        %v261 = vld [vmem:[%s118 + $0x3c8] sm:$0xff]
        %v262 = vld [vmem:[%s118 + $0x3d0] sm:$0xff]
        %v263 = vld [vmem:[%s118 + $0x3d8] sm:$0xff]
        %v264 = vld [vmem:[%s118 + $0x3e0] sm:$0xff]
        %v265 = vld [vmem:[%s118 + $0x3e8] sm:$0xff]
        %v266 = vld [vmem:[%s118 + $0x3f0] sm:$0xff]
        %v267 = vld [vmem:[%s118 + $0x3f8] sm:$0xff]
        %v268 = vld [vmem:[%s118 + $0x400] sm:$0xff]
        %v269 = vld [vmem:[%s118 + $0x408] sm:$0xff]
        %v270 = vld [vmem:[%s118 + $0x410] sm:$0xff]
        %v271 = vld [vmem:[%s118 + $0x418] sm:$0xff]
        %v272 = vld [vmem:[%s118 + $0x420] sm:$0xff]
        %v273 = vld [vmem:[%s118 + $0x428] sm:$0xff]
        %v274 = vld [vmem:[%s118 + $0x430] sm:$0xff]
        %v275 = vld [vmem:[%s118 + $0x438] sm:$0xff]
        %v276 = vld [vmem:[%s118 + $0x440] sm:$0xff]
        %v277 = vld [vmem:[%s118 + $0x448] sm:$0xff]
        %v278 = vld [vmem:[%s118 + $0x450] sm:$0xff]
        %v279 = vld [vmem:[%s118 + $0x458] sm:$0xff]
        %v280 = vld [vmem:[%s118 + $0x460] sm:$0xff]
        %v281 = vld [vmem:[%s118 + $0x468] sm:$0xff]
        %v282 = vld [vmem:[%s118 + $0x470] sm:$0xff]
        %v283 = vld [vmem:[%s118 + $0x478] sm:$0xff]
        %v284 = vld [vmem:[%s118 + $0x480] sm:$0xff]
        %v285 = vld [vmem:[%s118 + $0x488] sm:$0xff]
        %v286 = vld [vmem:[%s118 + $0x490] sm:$0xff]
        %v287 = vld [vmem:[%s118 + $0x498] sm:$0xff]
        %v288 = vld [vmem:[%s118 + $0x4a0] sm:$0xff]
        %v289 = vld [vmem:[%s118 + $0x4a8] sm:$0xff]
        %v290 = vld [vmem:[%s118 + $0x4b0] sm:$0xff]
        %v291 = vld [vmem:[%s118 + $0x4b8] sm:$0xff]
        %v292 = vld [vmem:[%s118 + $0x4c0] sm:$0xff]
        %v293 = vld [vmem:[%s118 + $0x4c8] sm:$0xff]
        %v294 = vld [vmem:[%s118 + $0x4d0] sm:$0xff]
        %v295 = vld [vmem:[%s118 + $0x4d8] sm:$0xff]
        %v296 = vld [vmem:[%s118 + $0x4e0] sm:$0xff]
        %v297 = vld [vmem:[%s118 + $0x4e8] sm:$0xff]
        %v298 = vld [vmem:[%s118 + $0x4f0] sm:$0xff]
        %v299 = vld [vmem:[%s118 + $0x4f8] sm:$0xff]
        %v300 = vld [vmem:[%s118 + $0x500] sm:$0xff]
        %v301 = vld [vmem:[%s118 + $0x508] sm:$0xff]
        %v302 = vld [vmem:[%s118 + $0x510] sm:$0xff]
        %v303 = vld [vmem:[%s118 + $0x518] sm:$0xff]
        %v304 = vld [vmem:[%s118 + $0x520] sm:$0xff]
        %v305 = vld [vmem:[%s118 + $0x528] sm:$0xff]
        %v306 = vld [vmem:[%s118 + $0x530] sm:$0xff]
        %v307 = vld [vmem:[%s118 + $0x538] sm:$0xff]
        %v308 = vld [vmem:[%s118 + $0x540] sm:$0xff]
        %v309 = vld [vmem:[%s118 + $0x548] sm:$0xff]
        %v310 = vld [vmem:[%s118 + $0x550] sm:$0xff]
        %v311 = vld [vmem:[%s118 + $0x558] sm:$0xff]
        %v312 = vld [vmem:[%s118 + $0x560] sm:$0xff]
        %v313 = vld [vmem:[%s118 + $0x568] sm:$0xff]
        %v314 = vld [vmem:[%s118 + $0x570] sm:$0xff]
        %v315 = vld [vmem:[%s118 + $0x578] sm:$0xff]
        %v316 = vld [vmem:[%s118 + $0x580] sm:$0xff]
        %v317 = vld [vmem:[%s118 + $0x588] sm:$0xff]
        %v318 = vld [vmem:[%s118 + $0x590] sm:$0xff]
        %v319 = vld [vmem:[%s118 + $0x598] sm:$0xff]
        %v320 = vld [vmem:[%s118 + $0x5a0] sm:$0xff]
        %v321 = vld [vmem:[%s118 + $0x5a8] sm:$0xff]
        %v322 = vld [vmem:[%s118 + $0x5b0] sm:$0xff]
        %v323 = vld [vmem:[%s118 + $0x5b8] sm:$0xff]
        %v324 = vld [vmem:[%s118 + $0x5c0] sm:$0xff]
        %v325 = vld [vmem:[%s118 + $0x5c8] sm:$0xff]
        %v326 = vld [vmem:[%s118 + $0x5d0] sm:$0xff]
        %v327 = vld [vmem:[%s118 + $0x5d8] sm:$0xff]
        %v328 = vld [vmem:[%s118 + $0x5e0] sm:$0xff]
        %v329 = vld [vmem:[%s118 + $0x5e8] sm:$0xff]
        %v330 = vld [vmem:[%s118 + $0x5f0] sm:$0xff]
        %v331 = vld [vmem:[%s118 + $0x5f8] sm:$0xff]
        %v332 = vld [vmem:[%s118 + $0x600] sm:$0xff]
        %v333 = vld [vmem:[%s118 + $0x608] sm:$0xff]
        %v334 = vld [vmem:[%s118 + $0x610] sm:$0xff]
        %v335 = vld [vmem:[%s118 + $0x618] sm:$0xff]
        %v336 = vld [vmem:[%s118 + $0x620] sm:$0xff]
        %v337 = vld [vmem:[%s118 + $0x628] sm:$0xff]
        %v338 = vld [vmem:[%s118 + $0x630] sm:$0xff]
        %v339 = vld [vmem:[%s118 + $0x638] sm:$0xff]
        %v340 = vld [vmem:[%s118 + $0x640] sm:$0xff]
        %v341 = vld [vmem:[%s118 + $0x648] sm:$0xff]
        %v342 = vld [vmem:[%s118 + $0x650] sm:$0xff]
        %v343 = vld [vmem:[%s118 + $0x658] sm:$0xff]
        %v344 = vld [vmem:[%s118 + $0x660] sm:$0xff]
        %v345 = vld [vmem:[%s118 + $0x668] sm:$0xff]
        %v346 = vld [vmem:[%s118 + $0x670] sm:$0xff]
        %v347 = vld [vmem:[%s118 + $0x678] sm:$0xff]
        %v348 = vld [vmem:[%s118 + $0x680] sm:$0xff]
        %v349 = vld [vmem:[%s118 + $0x688] sm:$0xff]
        %v350 = vld [vmem:[%s118 + $0x690] sm:$0xff]
        %v351 = vld [vmem:[%s118 + $0x698] sm:$0xff]
        %v352 = vld [vmem:[%s118 + $0x6a0] sm:$0xff]
        %v353 = vld [vmem:[%s118 + $0x6a8] sm:$0xff]
        %v354 = vld [vmem:[%s118 + $0x6b0] sm:$0xff]
        %v355 = vld [vmem:[%s118 + $0x6b8] sm:$0xff]
        %v356 = vld [vmem:[%s118 + $0x6c0] sm:$0xff]
        %v357 = vld [vmem:[%s118 + $0x6c8] sm:$0xff]
        %v358 = vld [vmem:[%s118 + $0x6d0] sm:$0xff]
        %v359 = vld [vmem:[%s118 + $0x6d8] sm:$0xff]
        %v360 = vld [vmem:[%s118 + $0x6e0] sm:$0xff]
        %v361 = vld [vmem:[%s118 + $0x6e8] sm:$0xff]
        %v362 = vld [vmem:[%s118 + $0x6f0] sm:$0xff]
        %v363 = vld [vmem:[%s118 + $0x6f8] sm:$0xff]
        %v364 = vld [vmem:[%s118 + $0x700] sm:$0xff]
        %v365 = vld [vmem:[%s118 + $0x708] sm:$0xff]
        %v366 = vld [vmem:[%s118 + $0x710] sm:$0xff]
        %v367 = vld [vmem:[%s118 + $0x718] sm:$0xff]
        %v368 = vld [vmem:[%s118 + $0x720] sm:$0xff]
        %v369 = vld [vmem:[%s118 + $0x728] sm:$0xff]
        %v370 = vld [vmem:[%s118 + $0x730] sm:$0xff]
        %v371 = vld [vmem:[%s118 + $0x738] sm:$0xff]
        %v372 = vld [vmem:[%s118 + $0x740] sm:$0xff]
        %v373 = vld [vmem:[%s118 + $0x748] sm:$0xff]
        %v374 = vld [vmem:[%s118 + $0x750] sm:$0xff]
        %v375 = vld [vmem:[%s118 + $0x758] sm:$0xff]
        %v376 = vld [vmem:[%s118 + $0x760] sm:$0xff]
        %v377 = vld [vmem:[%s118 + $0x768] sm:$0xff]
        %v378 = vld [vmem:[%s118 + $0x770] sm:$0xff]
        %v379 = vld [vmem:[%s118 + $0x778] sm:$0xff]
        %v380 = vld [vmem:[%s118 + $0x780] sm:$0xff]
        %v381 = vld [vmem:[%s118 + $0x788] sm:$0xff]
        %v382 = vld [vmem:[%s118 + $0x790] sm:$0xff]
        %v383 = vld [vmem:[%s118 + $0x798] sm:$0xff]
        %v384 = vld [vmem:[%s118 + $0x7a0] sm:$0xff]
        %v385 = vld [vmem:[%s118 + $0x7a8] sm:$0xff]
        %v386 = vld [vmem:[%s118 + $0x7b0] sm:$0xff]
        %v387 = vld [vmem:[%s118 + $0x7b8] sm:$0xff]
        %v388 = vld [vmem:[%s118 + $0x7c0] sm:$0xff]
        %v389 = vld [vmem:[%s118 + $0x7c8] sm:$0xff]
        %v390 = vld [vmem:[%s118 + $0x7d0] sm:$0xff]
        %v391 = vld [vmem:[%s118 + $0x7d8] sm:$0xff]
        %v392 = vld [vmem:[%s118 + $0x7e0] sm:$0xff]
        %v393 = vld [vmem:[%s118 + $0x7e8] sm:$0xff]
        %v394 = vld [vmem:[%s118 + $0x7f0] sm:$0xff]
        %v395 = vld [vmem:[%s118 + $0x7f8] sm:$0xff]
        %v396 = vld [vmem:[%s118 + $0x800] sm:$0xff]
        %v397 = vld [vmem:[%s118 + $0x808] sm:$0xff]
        %v398 = vld [vmem:[%s118 + $0x810] sm:$0xff]
        %v399 = vld [vmem:[%s118 + $0x818] sm:$0xff]
        %v400 = vld [vmem:[%s118 + $0x820] sm:$0xff]
        %v401 = vld [vmem:[%s118 + $0x828] sm:$0xff]
        %v402 = vld [vmem:[%s118 + $0x830] sm:$0xff]
        %v403 = vld [vmem:[%s118 + $0x838] sm:$0xff]
        %v404 = vld [vmem:[%s118 + $0x840] sm:$0xff]
        %v405 = vld [vmem:[%s118 + $0x848] sm:$0xff]
        %v406 = vld [vmem:[%s118 + $0x850] sm:$0xff]
        %v407 = vld [vmem:[%s118 + $0x858] sm:$0xff]
        %v408 = vld [vmem:[%s118 + $0x860] sm:$0xff]
        %v409 = vld [vmem:[%s118 + $0x868] sm:$0xff]
        %v410 = vld [vmem:[%s118 + $0x870] sm:$0xff]
        %v411 = vld [vmem:[%s118 + $0x878] sm:$0xff]
        %v412 = vld [vmem:[%s118 + $0x880] sm:$0xff]
        %v413 = vld [vmem:[%s118 + $0x888] sm:$0xff]
        %v414 = vld [vmem:[%s118 + $0x890] sm:$0xff]
        %v415 = vld [vmem:[%s118 + $0x898] sm:$0xff]
        %v416 = vld [vmem:[%s118 + $0x8a0] sm:$0xff]
        %v417 = vld [vmem:[%s118 + $0x8a8] sm:$0xff]
        %v418 = vld [vmem:[%s118 + $0x8b0] sm:$0xff]
        %v419 = vld [vmem:[%s118 + $0x8b8] sm:$0xff]
        %v420 = vld [vmem:[%s118 + $0x8c0] sm:$0xff]
        %v421 = vld [vmem:[%s118 + $0x8c8] sm:$0xff]
        %v422 = vld [vmem:[%s118 + $0x8d0] sm:$0xff]
        %v423 = vld [vmem:[%s118 + $0x8d8] sm:$0xff]
        %v424 = vld [vmem:[%s118 + $0x8e0] sm:$0xff]
        %v425 = vld [vmem:[%s118 + $0x8e8] sm:$0xff]
        %v426 = vld [vmem:[%s118 + $0x8f0] sm:$0xff]
        %v427 = vld [vmem:[%s118 + $0x8f8] sm:$0xff]
        %v428 = vld [vmem:[%s118 + $0x900] sm:$0xff]
        %v429 = vld [vmem:[%s118 + $0x908] sm:$0xff]
        %v430 = vld [vmem:[%s118 + $0x910] sm:$0xff]
        %v431 = vld [vmem:[%s118 + $0x918] sm:$0xff]
        %v432 = vld [vmem:[%s118 + $0x920] sm:$0xff]
        %v433 = vld [vmem:[%s118 + $0x928] sm:$0xff]
        %v434 = vld [vmem:[%s118 + $0x930] sm:$0xff]
        %v435 = vld [vmem:[%s118 + $0x938] sm:$0xff]
        %v436 = vld [vmem:[%s118 + $0x940] sm:$0xff]
        %v437 = vld [vmem:[%s118 + $0x948] sm:$0xff]
        %v438 = vld [vmem:[%s118 + $0x950] sm:$0xff]
        %v439 = vld [vmem:[%s118 + $0x958] sm:$0xff]
        %v440 = vld [vmem:[%s118 + $0x960] sm:$0xff]
        %v441 = vld [vmem:[%s118 + $0x968] sm:$0xff]
        %v442 = vld [vmem:[%s118 + $0x970] sm:$0xff]
        %v443 = vld [vmem:[%s118 + $0x978] sm:$0xff]
        %v444 = vld [vmem:[%s118 + $0x980] sm:$0xff]
        %v445 = vld [vmem:[%s118 + $0x988] sm:$0xff]
        %v446 = vld [vmem:[%s118 + $0x990] sm:$0xff]
        %v447 = vld [vmem:[%s118 + $0x998] sm:$0xff]
        %v448 = vld [vmem:[%s118 + $0x9a0] sm:$0xff]
        %v449 = vld [vmem:[%s118 + $0x9a8] sm:$0xff]
        %v450 = vld [vmem:[%s118 + $0x9b0] sm:$0xff]
        %v451 = vld [vmem:[%s118 + $0x9b8] sm:$0xff]
        %v452 = vld [vmem:[%s118 + $0x9c0] sm:$0xff]
        %v453 = vld [vmem:[%s118 + $0x9c8] sm:$0xff]
        %v454 = vld [vmem:[%s118 + $0x9d0] sm:$0xff]
        %v455 = vld [vmem:[%s118 + $0x9d8] sm:$0xff]
        %v456 = vld [vmem:[%s118 + $0x9e0] sm:$0xff]
        %v457 = vld [vmem:[%s118 + $0x9e8] sm:$0xff]
        %v458 = vld [vmem:[%s118 + $0x9f0] sm:$0xff]
        %v459 = vld [vmem:[%s118 + $0x9f8] sm:$0xff]
        %v460 = vld [vmem:[%s118 + $0xa00] sm:$0xff]
        %v461 = vld [vmem:[%s118 + $0xa08] sm:$0xff]
        %v462 = vld [vmem:[%s118 + $0xa10] sm:$0xff]
        %v463 = vld [vmem:[%s118 + $0xa18] sm:$0xff]
        %v464 = vld [vmem:[%s118 + $0xa20] sm:$0xff]
        %v465 = vld [vmem:[%s118 + $0xa28] sm:$0xff]
        %v466 = vld [vmem:[%s118 + $0xa30] sm:$0xff]
        %v467 = vld [vmem:[%s118 + $0xa38] sm:$0xff]
        %v468 = vld [vmem:[%s118 + $0xa40] sm:$0xff]
        %v469 = vld [vmem:[%s118 + $0xa48] sm:$0xff]
        %v470 = vld [vmem:[%s118 + $0xa50] sm:$0xff]
        %v471 = vld [vmem:[%s118 + $0xa58] sm:$0xff]
        %v472 = vld [vmem:[%s118 + $0xa60] sm:$0xff]
        %v473 = vld [vmem:[%s118 + $0xa68] sm:$0xff]
        %v474 = vld [vmem:[%s118 + $0xa70] sm:$0xff]
        %v475 = vld [vmem:[%s118 + $0xa78] sm:$0xff]
        %v476 = vld [vmem:[%s118 + $0xa80] sm:$0xff]
        %v477 = vld [vmem:[%s118 + $0xa88] sm:$0xff]
        %v478 = vld [vmem:[%s118 + $0xa90] sm:$0xff]
        %v479 = vld [vmem:[%s118 + $0xa98] sm:$0xff]
        %v480 = vld [vmem:[%s118 + $0xaa0] sm:$0xff]
        %v481 = vld [vmem:[%s118 + $0xaa8] sm:$0xff]
        %v482 = vld [vmem:[%s118 + $0xab0] sm:$0xff]
        %v483 = vld [vmem:[%s118 + $0xab8] sm:$0xff]
        %v484 = vld [vmem:[%s118 + $0xac0] sm:$0xff]
        %v485 = vld [vmem:[%s118 + $0xac8] sm:$0xff]
        %v486 = vld [vmem:[%s118 + $0xad0] sm:$0xff]
        %v487 = vld [vmem:[%s118 + $0xad8] sm:$0xff]
        %v488 = vld [vmem:[%s118 + $0xae0] sm:$0xff]
        %v489 = vld [vmem:[%s118 + $0xae8] sm:$0xff]
        %v490 = vld [vmem:[%s118 + $0xaf0] sm:$0xff]
        %v491 = vld [vmem:[%s118 + $0xaf8] sm:$0xff]
        %v492 = vld [vmem:[%s118 + $0xb00] sm:$0xff]
        %v493 = vld [vmem:[%s118 + $0xb08] sm:$0xff]
        %v494 = vld [vmem:[%s118 + $0xb10] sm:$0xff]
        %v495 = vld [vmem:[%s118 + $0xb18] sm:$0xff]
        %v496 = vld [vmem:[%s118 + $0xb20] sm:$0xff]
        %v497 = vld [vmem:[%s118 + $0xb28] sm:$0xff]
        %v498 = vld [vmem:[%s118 + $0xb30] sm:$0xff]
        %v499 = vld [vmem:[%s118 + $0xb38] sm:$0xff]
        %v500 = vld [vmem:[%s118 + $0xb40] sm:$0xff]
        %v501 = vld [vmem:[%s118 + $0xb48] sm:$0xff]
        %v502 = vld [vmem:[%s118 + $0xb50] sm:$0xff]
        %v503 = vld [vmem:[%s118 + $0xb58] sm:$0xff]
        %v504 = vld [vmem:[%s118 + $0xb60] sm:$0xff]
        %v505 = vld [vmem:[%s118 + $0xb68] sm:$0xff]
        %v506 = vld [vmem:[%s118 + $0xb70] sm:$0xff]
        %v507 = vld [vmem:[%s118 + $0xb78] sm:$0xff]
        %v508 = vld [vmem:[%s118 + $0xb80] sm:$0xff]
        %v509 = vld [vmem:[%s118 + $0xb88] sm:$0xff]
        %v510 = vld [vmem:[%s118 + $0xb90] sm:$0xff]
        %v511 = vld [vmem:[%s118 + $0xb98] sm:$0xff]
        %v512 = vld [vmem:[%s118 + $0xba0] sm:$0xff]
        %v513 = vld [vmem:[%s118 + $0xba8] sm:$0xff]
        %v514 = vld [vmem:[%s118 + $0xbb0] sm:$0xff]
        %v515 = vld [vmem:[%s118 + $0xbb8] sm:$0xff]
        %v516 = vld [vmem:[%s118 + $0xbc0] sm:$0xff]
        %v517 = vld [vmem:[%s118 + $0xbc8] sm:$0xff]
        %v518 = vld [vmem:[%s118 + $0xbd0] sm:$0xff]
        %v519 = vld [vmem:[%s118 + $0xbd8] sm:$0xff]
        %v520 = vld [vmem:[%s118 + $0xbe0] sm:$0xff]
        %v521 = vld [vmem:[%s118 + $0xbe8] sm:$0xff]
        %v522 = vld [vmem:[%s118 + $0xbf0] sm:$0xff]
        %v523 = vld [vmem:[%s118 + $0xbf8] sm:$0xff]
        %v524 = vld [vmem:[%s118 + $0xc00] sm:$0xff]
        %v525 = vld [vmem:[%s118 + $0xc08] sm:$0xff]
        %v526 = vld [vmem:[%s118 + $0xc10] sm:$0xff]
        %v527 = vld [vmem:[%s118 + $0xc18] sm:$0xff]
        %v528 = vld [vmem:[%s118 + $0xc20] sm:$0xff]
        %v529 = vld [vmem:[%s118 + $0xc28] sm:$0xff]
        %v530 = vld [vmem:[%s118 + $0xc30] sm:$0xff]
        %v531 = vld [vmem:[%s118 + $0xc38] sm:$0xff]
        %v532 = vld [vmem:[%s118 + $0xc40] sm:$0xff]
        %v533 = vld [vmem:[%s118 + $0xc48] sm:$0xff]
        %v534 = vld [vmem:[%s118 + $0xc50] sm:$0xff]
        %v535 = vld [vmem:[%s118 + $0xc58] sm:$0xff]
        %v536 = vld [vmem:[%s118 + $0xc60] sm:$0xff]
        %v537 = vld [vmem:[%s118 + $0xc68] sm:$0xff]
        %v538 = vld [vmem:[%s118 + $0xc70] sm:$0xff]
        %v539 = vld [vmem:[%s118 + $0xc78] sm:$0xff]
        %v540 = vld [vmem:[%s118 + $0xc80] sm:$0xff]
        %v541 = vld [vmem:[%s118 + $0xc88] sm:$0xff]
        %v542 = vld [vmem:[%s118 + $0xc90] sm:$0xff]
        %v543 = vld [vmem:[%s118 + $0xc98] sm:$0xff]
        %v544 = vld [vmem:[%s118 + $0xca0] sm:$0xff]
        %v545 = vld [vmem:[%s118 + $0xca8] sm:$0xff]
        %v546 = vld [vmem:[%s118 + $0xcb0] sm:$0xff]
        %v547 = vld [vmem:[%s118 + $0xcb8] sm:$0xff]
        %v548 = vld [vmem:[%s118 + $0xcc0] sm:$0xff]
        %v549 = vld [vmem:[%s118 + $0xcc8] sm:$0xff]
        %v550 = vld [vmem:[%s118 + $0xcd0] sm:$0xff]
        %v551 = vld [vmem:[%s118 + $0xcd8] sm:$0xff]
        %v552 = vld [vmem:[%s118 + $0xce0] sm:$0xff]
        %v553 = vld [vmem:[%s118 + $0xce8] sm:$0xff]
        %v554 = vld [vmem:[%s118 + $0xcf0] sm:$0xff]
        %v555 = vld [vmem:[%s118 + $0xcf8] sm:$0xff]
        %v556 = vld [vmem:[%s118 + $0xd00] sm:$0xff]
        %v557 = vld [vmem:[%s118 + $0xd08] sm:$0xff]
        %v558 = vld [vmem:[%s118 + $0xd10] sm:$0xff]
        %v559 = vld [vmem:[%s118 + $0xd18] sm:$0xff]
        %v560 = vld [vmem:[%s118 + $0xd20] sm:$0xff]
        %v561 = vld [vmem:[%s118 + $0xd28] sm:$0xff]
        %v562 = vld [vmem:[%s118 + $0xd30] sm:$0xff]
        %v563 = vld [vmem:[%s118 + $0xd38] sm:$0xff]
        %v564 = vld [vmem:[%s118 + $0xd40] sm:$0xff]
        %v565 = vld [vmem:[%s118 + $0xd48] sm:$0xff]
        %v566 = vld [vmem:[%s118 + $0xd50] sm:$0xff]
        %v567 = vld [vmem:[%s118 + $0xd58] sm:$0xff]
        %v568 = vld [vmem:[%s118 + $0xd60] sm:$0xff]
        %v569 = vld [vmem:[%s118 + $0xd68] sm:$0xff]
        %v570 = vld [vmem:[%s118 + $0xd70] sm:$0xff]
        %v571 = vld [vmem:[%s118 + $0xd78] sm:$0xff]
        %v572 = vld [vmem:[%s118 + $0xd80] sm:$0xff]
        %v573 = vld [vmem:[%s118 + $0xd88] sm:$0xff]
        %v574 = vld [vmem:[%s118 + $0xd90] sm:$0xff]
        %v575 = vld [vmem:[%s118 + $0xd98] sm:$0xff]
        %v576 = vld [vmem:[%s118 + $0xda0] sm:$0xff]
        %v577 = vld [vmem:[%s118 + $0xda8] sm:$0xff]
        %v578 = vld [vmem:[%s118 + $0xdb0] sm:$0xff]
        %v579 = vld [vmem:[%s118 + $0xdb8] sm:$0xff]
        %v580 = vld [vmem:[%s118 + $0xdc0] sm:$0xff]
        %v581 = vld [vmem:[%s118 + $0xdc8] sm:$0xff]
        %v582 = vld [vmem:[%s118 + $0xdd0] sm:$0xff]
        %v583 = vld [vmem:[%s118 + $0xdd8] sm:$0xff]
        %v584 = vld [vmem:[%s118 + $0xde0] sm:$0xff]
        %v585 = vld [vmem:[%s118 + $0xde8] sm:$0xff]
        %v586 = vld [vmem:[%s118 + $0xdf0] sm:$0xff]
        %v587 = vld [vmem:[%s118 + $0xdf8] sm:$0xff]
        %v588 = vld [vmem:[%s118 + $0xe00] sm:$0xff]
        %v589 = vld [vmem:[%s118 + $0xe08] sm:$0xff]
        %v590 = vld [vmem:[%s118 + $0xe10] sm:$0xff]
        %v591 = vld [vmem:[%s118 + $0xe18] sm:$0xff]
        %v592 = vld [vmem:[%s118 + $0xe20] sm:$0xff]
        %v593 = vld [vmem:[%s118 + $0xe28] sm:$0xff]
        %v594 = vld [vmem:[%s118 + $0xe30] sm:$0xff]
        %v595 = vld [vmem:[%s118 + $0xe38] sm:$0xff]
        %v596 = vld [vmem:[%s118 + $0xe40] sm:$0xff]
        %v597 = vld [vmem:[%s118 + $0xe48] sm:$0xff]
        %v598 = vld [vmem:[%s118 + $0xe50] sm:$0xff]
        %v599 = vld [vmem:[%s118 + $0xe58] sm:$0xff]
        %v600 = vld [vmem:[%s118 + $0xe60] sm:$0xff]
        %v601 = vld [vmem:[%s118 + $0xe68] sm:$0xff]
        %v602 = vld [vmem:[%s118 + $0xe70] sm:$0xff]
        %v603 = vld [vmem:[%s118 + $0xe78] sm:$0xff]
        %v604 = vld [vmem:[%s118 + $0xe80] sm:$0xff]
        %v605 = vld [vmem:[%s118 + $0xe88] sm:$0xff]
        %v606 = vld [vmem:[%s118 + $0xe90] sm:$0xff]
        %v607 = vld [vmem:[%s118 + $0xe98] sm:$0xff]
        %v608 = vld [vmem:[%s118 + $0xea0] sm:$0xff]
        %v609 = vld [vmem:[%s118 + $0xea8] sm:$0xff]
        %v610 = vld [vmem:[%s118 + $0xeb0] sm:$0xff]
        %v611 = vld [vmem:[%s118 + $0xeb8] sm:$0xff]
        %v612 = vld [vmem:[%s118 + $0xec0] sm:$0xff]
        %v613 = vld [vmem:[%s118 + $0xec8] sm:$0xff]
        %v614 = vld [vmem:[%s118 + $0xed0] sm:$0xff]
        %v615 = vld [vmem:[%s118 + $0xed8] sm:$0xff]
        %v616 = vld [vmem:[%s118 + $0xee0] sm:$0xff]
        %v617 = vld [vmem:[%s118 + $0xee8] sm:$0xff]
        %v618 = vld [vmem:[%s118 + $0xef0] sm:$0xff]
        %v619 = vld [vmem:[%s118 + $0xef8] sm:$0xff]
        %v620 = vld [vmem:[%s118 + $0xf00] sm:$0xff]
        %v621 = vld [vmem:[%s118 + $0xf08] sm:$0xff]
        %v622 = vld [vmem:[%s118 + $0xf10] sm:$0xff]
        %v623 = vld [vmem:[%s118 + $0xf18] sm:$0xff]
        %v624 = vld [vmem:[%s118 + $0xf20] sm:$0xff]
        %v625 = vld [vmem:[%s118 + $0xf28] sm:$0xff]
        %v626 = vld [vmem:[%s118 + $0xf30] sm:$0xff]
        %v627 = vld [vmem:[%s118 + $0xf38] sm:$0xff]
        %v628 = vld [vmem:[%s118 + $0xf40] sm:$0xff]
        %v629 = vld [vmem:[%s118 + $0xf48] sm:$0xff]
        %v630 = vld [vmem:[%s118 + $0xf50] sm:$0xff]
        %v631 = vld [vmem:[%s118 + $0xf58] sm:$0xff]
        %v632 = vld [vmem:[%s118 + $0xf60] sm:$0xff]
        %v633 = vld [vmem:[%s118 + $0xf68] sm:$0xff]
        %v634 = vld [vmem:[%s118 + $0xf70] sm:$0xff]
        %v635 = vld [vmem:[%s118 + $0xf78] sm:$0xff]
        %v636 = vld [vmem:[%s118 + $0xf80] sm:$0xff]
        %v637 = vld [vmem:[%s118 + $0xf88] sm:$0xff]
        %v638 = vld [vmem:[%s118 + $0xf90] sm:$0xff]
        %v639 = vld [vmem:[%s118 + $0xf98] sm:$0xff]
        %v640 = vld [vmem:[%s118 + $0xfa0] sm:$0xff]
        %v641 = vld [vmem:[%s118 + $0xfa8] sm:$0xff]
        %v642 = vld [vmem:[%s118 + $0xfb0] sm:$0xff]
        %v643 = vld [vmem:[%s118 + $0xfb8] sm:$0xff]
        %v644 = vld [vmem:[%s118 + $0xfc0] sm:$0xff]
        %v645 = vld [vmem:[%s118 + $0xfc8] sm:$0xff]
        %v646 = vld [vmem:[%s118 + $0xfd0] sm:$0xff]
        %v647 = vld [vmem:[%s118 + $0xfd8] sm:$0xff]
        %v648 = vld [vmem:[%s118 + $0xfe0] sm:$0xff]
        %v649 = vld [vmem:[%s118 + $0xfe8] sm:$0xff]
        %v650 = vld [vmem:[%s118 + $0xff0] sm:$0xff]
        %v651 = vld [vmem:[%s118 + $0xff8] sm:$0xff]
        %v652 = vld [vmem:[%s118 + $0x1000] sm:$0xff]
        %v653 = vld [vmem:[%s118 + $0x1008] sm:$0xff]
        %v654 = vld [vmem:[%s118 + $0x1010] sm:$0xff]
        %v655 = vld [vmem:[%s118 + $0x1018] sm:$0xff]
        %v656 = vld [vmem:[%s118 + $0x1020] sm:$0xff]
        %v657 = vld [vmem:[%s118 + $0x1028] sm:$0xff]
        %v658 = vld [vmem:[%s118 + $0x1030] sm:$0xff]
        %v659 = vld [vmem:[%s118 + $0x1038] sm:$0xff]
        %v660 = vld [vmem:[%s118 + $0x1040] sm:$0xff]
        %v661 = vld [vmem:[%s118 + $0x1048] sm:$0xff]
        %v662 = vld [vmem:[%s118 + $0x1050] sm:$0xff]
        %v663 = vld [vmem:[%s118 + $0x1058] sm:$0xff]
        %v664 = vld [vmem:[%s118 + $0x1060] sm:$0xff]
        %v665 = vld [vmem:[%s118 + $0x1068] sm:$0xff]
        %v666 = vld [vmem:[%s118 + $0x1070] sm:$0xff]
        %v667 = vld [vmem:[%s118 + $0x1078] sm:$0xff]
        %v668 = vld [vmem:[%s118 + $0x1080] sm:$0xff]
        %v669 = vld [vmem:[%s118 + $0x1088] sm:$0xff]
        %v670 = vld [vmem:[%s118 + $0x1090] sm:$0xff]
        %v671 = vld [vmem:[%s118 + $0x1098] sm:$0xff]
        %v672 = vld [vmem:[%s118 + $0x10a0] sm:$0xff]
        %v673 = vld [vmem:[%s118 + $0x10a8] sm:$0xff]
        %v674 = vld [vmem:[%s118 + $0x10b0] sm:$0xff]
        %v675 = vld [vmem:[%s118 + $0x10b8] sm:$0xff]
        %v676 = vld [vmem:[%s118 + $0x10c0] sm:$0xff]
        %v677 = vld [vmem:[%s118 + $0x10c8] sm:$0xff]
        %v678 = vld [vmem:[%s118 + $0x10d0] sm:$0xff]
        %v679 = vld [vmem:[%s118 + $0x10d8] sm:$0xff]
        %v680 = vld [vmem:[%s118 + $0x10e0] sm:$0xff]
        %v681 = vld [vmem:[%s118 + $0x10e8] sm:$0xff]
        %v682 = vld [vmem:[%s118 + $0x10f0] sm:$0xff]
        %v683 = vld [vmem:[%s118 + $0x10f8] sm:$0xff]
        %v684 = vld [vmem:[%s118 + $0x1100] sm:$0xff]
        %v685 = vld [vmem:[%s118 + $0x1108] sm:$0xff]
        %v686 = vld [vmem:[%s118 + $0x1110] sm:$0xff]
        %v687 = vld [vmem:[%s118 + $0x1118] sm:$0xff]
        %v688 = vld [vmem:[%s118 + $0x1120] sm:$0xff]
        %v689 = vld [vmem:[%s118 + $0x1128] sm:$0xff]
        %v690 = vld [vmem:[%s118 + $0x1130] sm:$0xff]
        %v691 = vld [vmem:[%s118 + $0x1138] sm:$0xff]
        %v692 = vld [vmem:[%s118 + $0x1140] sm:$0xff]
        %v693 = vld [vmem:[%s118 + $0x1148] sm:$0xff]
        %v694 = vld [vmem:[%s118 + $0x1150] sm:$0xff]
        %v695 = vld [vmem:[%s118 + $0x1158] sm:$0xff]
        %v696 = vld [vmem:[%s118 + $0x1160] sm:$0xff]
        %v697 = vld [vmem:[%s118 + $0x1168] sm:$0xff]
        %v698 = vld [vmem:[%s118 + $0x1170] sm:$0xff]
        %v699 = vld [vmem:[%s118 + $0x1178] sm:$0xff]
        %v700 = vld [vmem:[%s118 + $0x1180] sm:$0xff]
        %v701 = vld [vmem:[%s118 + $0x1188] sm:$0xff]
        %v702 = vld [vmem:[%s118 + $0x1190] sm:$0xff]
        %v703 = vld [vmem:[%s118 + $0x1198] sm:$0xff]
        %v704 = vld [vmem:[%s118 + $0x11a0] sm:$0xff]
        %v705 = vld [vmem:[%s118 + $0x11a8] sm:$0xff]
        %v706 = vld [vmem:[%s118 + $0x11b0] sm:$0xff]
        %v707 = vld [vmem:[%s118 + $0x11b8] sm:$0xff]
        %v708 = vld [vmem:[%s118 + $0x11c0] sm:$0xff]
        %v709 = vld [vmem:[%s118 + $0x11c8] sm:$0xff]
        %v710 = vld [vmem:[%s118 + $0x11d0] sm:$0xff]
        %v711 = vld [vmem:[%s118 + $0x11d8] sm:$0xff]
        %v712 = vld [vmem:[%s118 + $0x11e0] sm:$0xff]
        %v713 = vld [vmem:[%s118 + $0x11e8] sm:$0xff]
        %v714 = vld [vmem:[%s118 + $0x11f0] sm:$0xff]
        %v715 = vld [vmem:[%s118 + $0x11f8] sm:$0xff]
        %v716 = vld [vmem:[%s118 + $0x1200] sm:$0xff]
        %v717 = vld [vmem:[%s118 + $0x1208] sm:$0xff]
        %v718 = vld [vmem:[%s118 + $0x1210] sm:$0xff]
        %v719 = vld [vmem:[%s118 + $0x1218] sm:$0xff]
        %v720 = vld [vmem:[%s118 + $0x1220] sm:$0xff]
        %v721 = vld [vmem:[%s118 + $0x1228] sm:$0xff]
        %v722 = vld [vmem:[%s118 + $0x1230] sm:$0xff]
        %v723 = vld [vmem:[%s118 + $0x1238] sm:$0xff]
        %v724 = vld [vmem:[%s118 + $0x1240] sm:$0xff]
        %v725 = vld [vmem:[%s118 + $0x1248] sm:$0xff]
        %v726 = vld [vmem:[%s118 + $0x1250] sm:$0xff]
        %v727 = vld [vmem:[%s118 + $0x1258] sm:$0xff]
        %v728 = vld [vmem:[%s118 + $0x1260] sm:$0xff]
        %v729 = vld [vmem:[%s118 + $0x1268] sm:$0xff]
        %v730 = vld [vmem:[%s118 + $0x1270] sm:$0xff]
        %v731 = vld [vmem:[%s118 + $0x1278] sm:$0xff]
        %v732 = vld [vmem:[%s118 + $0x1280] sm:$0xff]
        %v733 = vld [vmem:[%s118 + $0x1288] sm:$0xff]
        %v734 = vld [vmem:[%s118 + $0x1290] sm:$0xff]
        %v735 = vld [vmem:[%s118 + $0x1298] sm:$0xff]
        %v736 = vld [vmem:[%s118 + $0x12a0] sm:$0xff]
        %v737 = vld [vmem:[%s118 + $0x12a8] sm:$0xff]
        %v738 = vld [vmem:[%s118 + $0x12b0] sm:$0xff]
        %v739 = vld [vmem:[%s118 + $0x12b8] sm:$0xff]
        %v740 = vld [vmem:[%s118 + $0x12c0] sm:$0xff]
        %v741 = vld [vmem:[%s118 + $0x12c8] sm:$0xff]
        %v742 = vld [vmem:[%s118 + $0x12d0] sm:$0xff]
        %v743 = vld [vmem:[%s118 + $0x12d8] sm:$0xff]
        %v744 = vld [vmem:[%s118 + $0x12e0] sm:$0xff]
        %v745 = vld [vmem:[%s118 + $0x12e8] sm:$0xff]
        %v746 = vld [vmem:[%s118 + $0x12f0] sm:$0xff]
        %v747 = vld [vmem:[%s118 + $0x12f8] sm:$0xff]
        %v748 = vld [vmem:[%s118 + $0x1300] sm:$0xff]
        %v749 = vld [vmem:[%s118 + $0x1308] sm:$0xff]
        %v750 = vld [vmem:[%s118 + $0x1310] sm:$0xff]
        %v751 = vld [vmem:[%s118 + $0x1318] sm:$0xff]
        %v752 = vld [vmem:[%s118 + $0x1320] sm:$0xff]
        %v753 = vld [vmem:[%s118 + $0x1328] sm:$0xff]
        %v754 = vld [vmem:[%s118 + $0x1330] sm:$0xff]
        %v755 = vld [vmem:[%s118 + $0x1338] sm:$0xff]
        %v756 = vld [vmem:[%s118 + $0x1340] sm:$0xff]
        %v757 = vld [vmem:[%s118 + $0x1348] sm:$0xff]
        %v758 = vld [vmem:[%s118 + $0x1350] sm:$0xff]
        %v759 = vld [vmem:[%s118 + $0x1358] sm:$0xff]
        %v760 = vld [vmem:[%s118 + $0x1360] sm:$0xff]
        %v761 = vld [vmem:[%s118 + $0x1368] sm:$0xff]
        %v762 = vld [vmem:[%s118 + $0x1370] sm:$0xff]
        %v763 = vld [vmem:[%s118 + $0x1378] sm:$0xff]
        %v764 = vld [vmem:[%s118 + $0x1380] sm:$0xff]
        %v765 = vld [vmem:[%s118 + $0x1388] sm:$0xff]
        %v766 = vld [vmem:[%s118 + $0x1390] sm:$0xff]
        %v767 = vld [vmem:[%s118 + $0x1398] sm:$0xff]
        %v768 = vld [vmem:[%s118 + $0x13a0] sm:$0xff]
        %v769 = vld [vmem:[%s118 + $0x13a8] sm:$0xff]
        %v770 = vld [vmem:[%s118 + $0x13b0] sm:$0xff]
        %v771 = vld [vmem:[%s118 + $0x13b8] sm:$0xff]
        %v772 = vld [vmem:[%s118 + $0x13c0] sm:$0xff]
        %v773 = vld [vmem:[%s118 + $0x13c8] sm:$0xff]
        %v774 = vld [vmem:[%s118 + $0x13d0] sm:$0xff]
        %v775 = vld [vmem:[%s118 + $0x13d8] sm:$0xff]
        %v776 = vld [vmem:[%s118 + $0x13e0] sm:$0xff]
        %v777 = vld [vmem:[%s118 + $0x13e8] sm:$0xff]
        %v778 = vld [vmem:[%s118 + $0x13f0] sm:$0xff]
        %v779 = vld [vmem:[%s118 + $0x13f8] sm:$0xff]
        %v780 = vld [vmem:[%s118 + $0x1400] sm:$0xff]
        %v781 = vld [vmem:[%s118 + $0x1408] sm:$0xff]
        %v782 = vld [vmem:[%s118 + $0x1410] sm:$0xff]
        %v783 = vld [vmem:[%s118 + $0x1418] sm:$0xff]
        %v784 = vld [vmem:[%s118 + $0x1420] sm:$0xff]
        %v785 = vld [vmem:[%s118 + $0x1428] sm:$0xff]
        %v786 = vld [vmem:[%s118 + $0x1430] sm:$0xff]
        %v787 = vld [vmem:[%s118 + $0x1438] sm:$0xff]
        %v788 = vld [vmem:[%s118 + $0x1440] sm:$0xff]
        %v789 = vld [vmem:[%s118 + $0x1448] sm:$0xff]
        %v790 = vld [vmem:[%s118 + $0x1450] sm:$0xff]
        %v791 = vld [vmem:[%s118 + $0x1458] sm:$0xff]
        %v792 = vld [vmem:[%s118 + $0x1460] sm:$0xff]
        %v793 = vld [vmem:[%s118 + $0x1468] sm:$0xff]
        %v794 = vld [vmem:[%s118 + $0x1470] sm:$0xff]
        %v795 = vld [vmem:[%s118 + $0x1478] sm:$0xff]
        %v796 = vld [vmem:[%s118 + $0x1480] sm:$0xff]
        %v797 = vld [vmem:[%s118 + $0x1488] sm:$0xff]
        %v798 = vld [vmem:[%s118 + $0x1490] sm:$0xff]
        %v799 = vld [vmem:[%s118 + $0x1498] sm:$0xff]
        %v800 = vld [vmem:[%s118 + $0x14a0] sm:$0xff]
        %v801 = vld [vmem:[%s118 + $0x14a8] sm:$0xff]
        %v802 = vld [vmem:[%s118 + $0x14b0] sm:$0xff]
        %v803 = vld [vmem:[%s118 + $0x14b8] sm:$0xff]
        %v804 = vld [vmem:[%s118 + $0x14c0] sm:$0xff]
        %v805 = vld [vmem:[%s118 + $0x14c8] sm:$0xff]
        %v806 = vld [vmem:[%s118 + $0x14d0] sm:$0xff]
        %v807 = vld [vmem:[%s118 + $0x14d8] sm:$0xff]
        %v808 = vld [vmem:[%s118 + $0x14e0] sm:$0xff]
        %v809 = vld [vmem:[%s118 + $0x14e8] sm:$0xff]
        %v810 = vld [vmem:[%s118 + $0x14f0] sm:$0xff]
        %v811 = vld [vmem:[%s118 + $0x14f8] sm:$0xff]
        %v812 = vld [vmem:[%s118 + $0x1500] sm:$0xff]
        %v813 = vld [vmem:[%s118 + $0x1508] sm:$0xff]
        %v814 = vld [vmem:[%s118 + $0x1510] sm:$0xff]
        %v815 = vld [vmem:[%s118 + $0x1518] sm:$0xff]
        %v816 = vld [vmem:[%s118 + $0x1520] sm:$0xff]
        %v817 = vld [vmem:[%s118 + $0x1528] sm:$0xff]
        %v818 = vld [vmem:[%s118 + $0x1530] sm:$0xff]
        %v819 = vld [vmem:[%s118 + $0x1538] sm:$0xff]
        %v820 = vld [vmem:[%s118 + $0x1540] sm:$0xff]
        %v821 = vld [vmem:[%s118 + $0x1548] sm:$0xff]
        %v822 = vld [vmem:[%s118 + $0x1550] sm:$0xff]
        %v823 = vld [vmem:[%s118 + $0x1558] sm:$0xff]
        %v824 = vld [vmem:[%s118 + $0x1560] sm:$0xff]
        %v825 = vld [vmem:[%s118 + $0x1568] sm:$0xff]
        %v826 = vld [vmem:[%s118 + $0x1570] sm:$0xff]
        %v827 = vld [vmem:[%s118 + $0x1578] sm:$0xff]
        %v828 = vld [vmem:[%s118 + $0x1580] sm:$0xff]
        %v829 = vld [vmem:[%s118 + $0x1588] sm:$0xff]
        %v830 = vld [vmem:[%s118 + $0x1590] sm:$0xff]
        %v831 = vld [vmem:[%s118 + $0x1598] sm:$0xff]
        %v832 = vld [vmem:[%s118 + $0x15a0] sm:$0xff]
        %v833 = vld [vmem:[%s118 + $0x15a8] sm:$0xff]
        %v834 = vld [vmem:[%s118 + $0x15b0] sm:$0xff]
        %v835 = vld [vmem:[%s118 + $0x15b8] sm:$0xff]
        %v836 = vld [vmem:[%s118 + $0x15c0] sm:$0xff]
        %v837 = vld [vmem:[%s118 + $0x15c8] sm:$0xff]
        %v838 = vld [vmem:[%s118 + $0x15d0] sm:$0xff]
        %v839 = vld [vmem:[%s118 + $0x15d8] sm:$0xff]
        %v840 = vld [vmem:[%s118 + $0x15e0] sm:$0xff]
        %v841 = vld [vmem:[%s118 + $0x15e8] sm:$0xff]
        %v842 = vld [vmem:[%s118 + $0x15f0] sm:$0xff]
        %v843 = vld [vmem:[%s118 + $0x15f8] sm:$0xff]
        %v844 = vld [vmem:[%s118 + $0x1600] sm:$0xff]
        %v845 = vld [vmem:[%s118 + $0x1608] sm:$0xff]
        %v846 = vld [vmem:[%s118 + $0x1610] sm:$0xff]
        %v847 = vld [vmem:[%s118 + $0x1618] sm:$0xff]
        %v848 = vld [vmem:[%s118 + $0x1620] sm:$0xff]
        %v849 = vld [vmem:[%s118 + $0x1628] sm:$0xff]
        %v850 = vld [vmem:[%s118 + $0x1630] sm:$0xff]
        %v851 = vld [vmem:[%s118 + $0x1638] sm:$0xff]
        %v852 = vld [vmem:[%s118 + $0x1640] sm:$0xff]
        %v853 = vld [vmem:[%s118 + $0x1648] sm:$0xff]
        %v854 = vld [vmem:[%s118 + $0x1650] sm:$0xff]
        %v855 = vld [vmem:[%s118 + $0x1658] sm:$0xff]
        %v856 = vld [vmem:[%s118 + $0x1660] sm:$0xff]
        %v857 = vld [vmem:[%s118 + $0x1668] sm:$0xff]
        %v858 = vld [vmem:[%s118 + $0x1670] sm:$0xff]
        %v859 = vld [vmem:[%s118 + $0x1678] sm:$0xff]
        %v860 = vld [vmem:[%s118 + $0x1680] sm:$0xff]
        %v861 = vld [vmem:[%s118 + $0x1688] sm:$0xff]
        %v862 = vld [vmem:[%s118 + $0x1690] sm:$0xff]
        %v863 = vld [vmem:[%s118 + $0x1698] sm:$0xff]
        %v864 = vld [vmem:[%s118 + $0x16a0] sm:$0xff]
        %v865 = vld [vmem:[%s118 + $0x16a8] sm:$0xff]
        %v866 = vld [vmem:[%s118 + $0x16b0] sm:$0xff]
        %v867 = vld [vmem:[%s118 + $0x16b8] sm:$0xff]
        %v868 = vld [vmem:[%s118 + $0x16c0] sm:$0xff]
        %v869 = vld [vmem:[%s118 + $0x16c8] sm:$0xff]
        %v870 = vld [vmem:[%s118 + $0x16d0] sm:$0xff]
        %v871 = vld [vmem:[%s118 + $0x16d8] sm:$0xff]
        %v872 = vld [vmem:[%s118 + $0x16e0] sm:$0xff]
        %v873 = vld [vmem:[%s118 + $0x16e8] sm:$0xff]
        %v874 = vld [vmem:[%s118 + $0x16f0] sm:$0xff]
        %v875 = vld [vmem:[%s118 + $0x16f8] sm:$0xff]
        %v876 = vld [vmem:[%s118 + $0x1700] sm:$0xff]
        %v877 = vld [vmem:[%s118 + $0x1708] sm:$0xff]
        %v878 = vld [vmem:[%s118 + $0x1710] sm:$0xff]
        %v879 = vld [vmem:[%s118 + $0x1718] sm:$0xff]
        %v880 = vld [vmem:[%s118 + $0x1720] sm:$0xff]
        %v881 = vld [vmem:[%s118 + $0x1728] sm:$0xff]
        %v882 = vld [vmem:[%s118 + $0x1730] sm:$0xff]
        %v883 = vld [vmem:[%s118 + $0x1738] sm:$0xff]
        %v884 = vld [vmem:[%s118 + $0x1740] sm:$0xff]
        %v885 = vld [vmem:[%s118 + $0x1748] sm:$0xff]
        %v886 = vld [vmem:[%s118 + $0x1750] sm:$0xff]
        %v887 = vld [vmem:[%s118 + $0x1758] sm:$0xff]
        %v888 = vld [vmem:[%s118 + $0x1760] sm:$0xff]
        %v889 = vld [vmem:[%s118 + $0x1768] sm:$0xff]
        %v890 = vld [vmem:[%s118 + $0x1770] sm:$0xff]
        %v891 = vld [vmem:[%s118 + $0x1778] sm:$0xff]
        %v892 = vld [vmem:[%s118 + $0x1780] sm:$0xff]
        %v893 = vld [vmem:[%s118 + $0x1788] sm:$0xff]
        %v894 = vld [vmem:[%s118 + $0x1790] sm:$0xff]
        %v895 = vld [vmem:[%s118 + $0x1798] sm:$0xff]
        %v896 = vld [vmem:[%s118 + $0x17a0] sm:$0xff]
        %v897 = vld [vmem:[%s118 + $0x17a8] sm:$0xff]
        %v898 = vld [vmem:[%s118 + $0x17b0] sm:$0xff]
        %v899 = vld [vmem:[%s118 + $0x17b8] sm:$0xff]
        %v900 = vld [vmem:[%s118 + $0x17c0] sm:$0xff]
        %v901 = vld [vmem:[%s118 + $0x17c8] sm:$0xff]
        %v902 = vld [vmem:[%s118 + $0x17d0] sm:$0xff]
        %v903 = vld [vmem:[%s118 + $0x17d8] sm:$0xff]
        %v904 = vld [vmem:[%s118 + $0x17e0] sm:$0xff]
        %v905 = vld [vmem:[%s118 + $0x17e8] sm:$0xff]
        %v906 = vld [vmem:[%s118 + $0x17f0] sm:$0xff]
        %v907 = vld [vmem:[%s118 + $0x17f8] sm:$0xff]
        %v908 = vld [vmem:[%s118 + $0x1800] sm:$0xff]
        %v909 = vld [vmem:[%s118 + $0x1808] sm:$0xff]
        %v910 = vld [vmem:[%s118 + $0x1810] sm:$0xff]
        %v911 = vld [vmem:[%s118 + $0x1818] sm:$0xff]
        %v912 = vld [vmem:[%s118 + $0x1820] sm:$0xff]
        %v913 = vld [vmem:[%s118 + $0x1828] sm:$0xff]
        %v914 = vld [vmem:[%s118 + $0x1830] sm:$0xff]
        %v915 = vld [vmem:[%s118 + $0x1838] sm:$0xff]
        %v916 = vld [vmem:[%s118 + $0x1840] sm:$0xff]
        %v917 = vld [vmem:[%s118 + $0x1848] sm:$0xff]
        %v918 = vld [vmem:[%s118 + $0x1850] sm:$0xff]
        %v919 = vld [vmem:[%s118 + $0x1858] sm:$0xff]
        %v920 = vld [vmem:[%s118 + $0x1860] sm:$0xff]
        %v921 = vld [vmem:[%s118 + $0x1868] sm:$0xff]
        %v922 = vld [vmem:[%s118 + $0x1870] sm:$0xff]
        %v923 = vld [vmem:[%s118 + $0x1878] sm:$0xff]
        %v924 = vld [vmem:[%s118 + $0x1880] sm:$0xff]
        %v925 = vld [vmem:[%s118 + $0x1888] sm:$0xff]
        %v926 = vld [vmem:[%s118 + $0x1890] sm:$0xff]
        %v927 = vld [vmem:[%s118 + $0x1898] sm:$0xff]
        %v928 = vld [vmem:[%s118 + $0x18a0] sm:$0xff]
        %v929 = vld [vmem:[%s118 + $0x18a8] sm:$0xff]
        %v930 = vld [vmem:[%s118 + $0x18b0] sm:$0xff]
        %v931 = vld [vmem:[%s118 + $0x18b8] sm:$0xff]
        %v932 = vld [vmem:[%s118 + $0x18c0] sm:$0xff]
        %v933 = vld [vmem:[%s118 + $0x18c8] sm:$0xff]
        %v934 = vld [vmem:[%s118 + $0x18d0] sm:$0xff]
        %v935 = vld [vmem:[%s118 + $0x18d8] sm:$0xff]
        %v936 = vld [vmem:[%s118 + $0x18e0] sm:$0xff]
        %v937 = vld [vmem:[%s118 + $0x18e8] sm:$0xff]
        %v938 = vld [vmem:[%s118 + $0x18f0] sm:$0xff]
        %v939 = vld [vmem:[%s118 + $0x18f8] sm:$0xff]
        %v940 = vld [vmem:[%s118 + $0x1900] sm:$0xff]
        %v941 = vld [vmem:[%s118 + $0x1908] sm:$0xff]
        %v942 = vld [vmem:[%s118 + $0x1910] sm:$0xff]
        %v943 = vld [vmem:[%s118 + $0x1918] sm:$0xff]
        %v944 = vld [vmem:[%s118 + $0x1920] sm:$0xff]
        %v945 = vld [vmem:[%s118 + $0x1928] sm:$0xff]
        %v946 = vld [vmem:[%s118 + $0x1930] sm:$0xff]
        %v947 = vld [vmem:[%s118 + $0x1938] sm:$0xff]
        %v948 = vld [vmem:[%s118 + $0x1940] sm:$0xff]
        %v949 = vld [vmem:[%s118 + $0x1948] sm:$0xff]
        %v950 = vld [vmem:[%s118 + $0x1950] sm:$0xff]
        %v951 = vld [vmem:[%s118 + $0x1958] sm:$0xff]
        %v952 = vld [vmem:[%s118 + $0x1960] sm:$0xff]
        %v953 = vld [vmem:[%s118 + $0x1968] sm:$0xff]
        %v954 = vld [vmem:[%s118 + $0x1970] sm:$0xff]
        %v955 = vld [vmem:[%s118 + $0x1978] sm:$0xff]
        %v956 = vld [vmem:[%s118 + $0x1980] sm:$0xff]
        %v957 = vld [vmem:[%s118 + $0x1988] sm:$0xff]
        %v958 = vld [vmem:[%s118 + $0x1990] sm:$0xff]
        %v959 = vld [vmem:[%s118 + $0x1998] sm:$0xff]
        %v960 = vld [vmem:[%s118 + $0x19a0] sm:$0xff]
        %v961 = vld [vmem:[%s118 + $0x19a8] sm:$0xff]
        %v962 = vld [vmem:[%s118 + $0x19b0] sm:$0xff]
        %v963 = vld [vmem:[%s118 + $0x19b8] sm:$0xff]
        %v964 = vld [vmem:[%s118 + $0x19c0] sm:$0xff]
        %v965 = vld [vmem:[%s118 + $0x19c8] sm:$0xff]
        %v966 = vld [vmem:[%s118 + $0x19d0] sm:$0xff]
        %v967 = vld [vmem:[%s118 + $0x19d8] sm:$0xff]
        %v968 = vld [vmem:[%s118 + $0x19e0] sm:$0xff]
        %v969 = vld [vmem:[%s118 + $0x19e8] sm:$0xff]
        %v970 = vld [vmem:[%s118 + $0x19f0] sm:$0xff]
        %v971 = vld [vmem:[%s118 + $0x19f8] sm:$0xff]
        %v972 = vld [vmem:[%s118 + $0x1a00] sm:$0xff]
        %v973 = vld [vmem:[%s118 + $0x1a08] sm:$0xff]
        %v974 = vld [vmem:[%s118 + $0x1a10] sm:$0xff]
        %v975 = vld [vmem:[%s118 + $0x1a18] sm:$0xff]
        %v976 = vld [vmem:[%s118 + $0x1a20] sm:$0xff]
        %v977 = vld [vmem:[%s118 + $0x1a28] sm:$0xff]
        %v978 = vld [vmem:[%s118 + $0x1a30] sm:$0xff]
        %v979 = vld [vmem:[%s118 + $0x1a38] sm:$0xff]
        %v980 = vld [vmem:[%s118 + $0x1a40] sm:$0xff]
        %v981 = vld [vmem:[%s118 + $0x1a48] sm:$0xff]
        %v982 = vld [vmem:[%s118 + $0x1a50] sm:$0xff]
        %v983 = vld [vmem:[%s118 + $0x1a58] sm:$0xff]
        %v984 = vld [vmem:[%s118 + $0x1a60] sm:$0xff]
        %v985 = vld [vmem:[%s118 + $0x1a68] sm:$0xff]
        %v986 = vld [vmem:[%s118 + $0x1a70] sm:$0xff]
        %v987 = vld [vmem:[%s118 + $0x1a78] sm:$0xff]
        %v988 = vld [vmem:[%s118 + $0x1a80] sm:$0xff]
        %v989 = vld [vmem:[%s118 + $0x1a88] sm:$0xff]
        %v990 = vld [vmem:[%s118 + $0x1a90] sm:$0xff]
        %v991 = vld [vmem:[%s118 + $0x1a98] sm:$0xff]
        %v992 = vld [vmem:[%s118 + $0x1aa0] sm:$0xff]
        %v993 = vld [vmem:[%s118 + $0x1aa8] sm:$0xff]
        %v994 = vld [vmem:[%s118 + $0x1ab0] sm:$0xff]
        %v995 = vld [vmem:[%s118 + $0x1ab8] sm:$0xff]
        %v996 = vld [vmem:[%s118 + $0x1ac0] sm:$0xff]
        %v997 = vld [vmem:[%s118 + $0x1ac8] sm:$0xff]
        %v998 = vld [vmem:[%s118 + $0x1ad0] sm:$0xff]
        %v999 = vld [vmem:[%s118 + $0x1ad8] sm:$0xff]
        %v1000 = vld [vmem:[%s118 + $0x1ae0] sm:$0xff]
        %v1001 = vld [vmem:[%s118 + $0x1ae8] sm:$0xff]
        %v1002 = vld [vmem:[%s118 + $0x1af0] sm:$0xff]
        %v1003 = vld [vmem:[%s118 + $0x1af8] sm:$0xff]
        %v1004 = vld [vmem:[%s118 + $0x1b00] sm:$0xff]
        %v1005 = vld [vmem:[%s118 + $0x1b08] sm:$0xff]
        %v1006 = vld [vmem:[%s118 + $0x1b10] sm:$0xff]
        %v1007 = vld [vmem:[%s118 + $0x1b18] sm:$0xff]
        %v1008 = vld [vmem:[%s118 + $0x1b20] sm:$0xff]
        %v1009 = vld [vmem:[%s118 + $0x1b28] sm:$0xff]
        %v1010 = vld [vmem:[%s118 + $0x1b30] sm:$0xff]
        %v1011 = vld [vmem:[%s118 + $0x1b38] sm:$0xff]
        %v1012 = vld [vmem:[%s118 + $0x1b40] sm:$0xff]
        %v1013 = vld [vmem:[%s118 + $0x1b48] sm:$0xff]
        %v1014 = vld [vmem:[%s118 + $0x1b50] sm:$0xff]
        %v1015 = vld [vmem:[%s118 + $0x1b58] sm:$0xff]
        %v1016 = vld [vmem:[%s118 + $0x1b60] sm:$0xff]
        %v1017 = vld [vmem:[%s118 + $0x1b68] sm:$0xff]
        %v1018 = vld [vmem:[%s118 + $0x1b70] sm:$0xff]
        %v1019 = vld [vmem:[%s118 + $0x1b78] sm:$0xff]
        %v1020 = vld [vmem:[%s118 + $0x1b80] sm:$0xff]
        %v1021 = vld [vmem:[%s118 + $0x1b88] sm:$0xff]
        %v1022 = vld [vmem:[%s118 + $0x1b90] sm:$0xff]
        %v1023 = vld [vmem:[%s118 + $0x1b98] sm:$0xff]
        %v1024 = vld [vmem:[%s118 + $0x1ba0] sm:$0xff]
        %v1025 = vld [vmem:[%s118 + $0x1ba8] sm:$0xff]
        %v1026 = vld [vmem:[%s118 + $0x1bb0] sm:$0xff]
        %v1027 = vld [vmem:[%s118 + $0x1bb8] sm:$0xff]
        %v1028 = vld [vmem:[%s118 + $0x1bc0] sm:$0xff]
        %v1029 = vld [vmem:[%s118 + $0x1bc8] sm:$0xff]
        %v1030 = vld [vmem:[%s118 + $0x1bd0] sm:$0xff]
        %v1031 = vld [vmem:[%s118 + $0x1bd8] sm:$0xff]
        %v1032 = vld [vmem:[%s118 + $0x1be0] sm:$0xff]
        %v1033 = vld [vmem:[%s118 + $0x1be8] sm:$0xff]
        %v1034 = vld [vmem:[%s118 + $0x1bf0] sm:$0xff]
        %v1035 = vld [vmem:[%s118 + $0x1bf8] sm:$0xff]
        %v1036 = vld [vmem:[%s118 + $0x1c00] sm:$0xff]
        %v1037 = vld [vmem:[%s118 + $0x1c08] sm:$0xff]
        %v1038 = vld [vmem:[%s118 + $0x1c10] sm:$0xff]
        %v1039 = vld [vmem:[%s118 + $0x1c18] sm:$0xff]
        %v1040 = vld [vmem:[%s118 + $0x1c20] sm:$0xff]
        %v1041 = vld [vmem:[%s118 + $0x1c28] sm:$0xff]
        %v1042 = vld [vmem:[%s118 + $0x1c30] sm:$0xff]
        %v1043 = vld [vmem:[%s118 + $0x1c38] sm:$0xff]
        %v1044 = vld [vmem:[%s118 + $0x1c40] sm:$0xff]
        %v1045 = vld [vmem:[%s118 + $0x1c48] sm:$0xff]
        %v1046 = vld [vmem:[%s118 + $0x1c50] sm:$0xff]
        %v1047 = vld [vmem:[%s118 + $0x1c58] sm:$0xff]
        %v1048 = vld [vmem:[%s118 + $0x1c60] sm:$0xff]
        %v1049 = vld [vmem:[%s118 + $0x1c68] sm:$0xff]
        %v1050 = vld [vmem:[%s118 + $0x1c70] sm:$0xff]
        %v1051 = vld [vmem:[%s118 + $0x1c78] sm:$0xff]
        %v1052 = vld [vmem:[%s118 + $0x1c80] sm:$0xff]
        %v1053 = vld [vmem:[%s118 + $0x1c88] sm:$0xff]
        %v1054 = vld [vmem:[%s118 + $0x1c90] sm:$0xff]
        %v1055 = vld [vmem:[%s118 + $0x1c98] sm:$0xff]
        %v1056 = vld [vmem:[%s118 + $0x1ca0] sm:$0xff]
        %v1057 = vld [vmem:[%s118 + $0x1ca8] sm:$0xff]
        %v1058 = vld [vmem:[%s118 + $0x1cb0] sm:$0xff]
        %v1059 = vld [vmem:[%s118 + $0x1cb8] sm:$0xff]
        %v1060 = vld [vmem:[%s118 + $0x1cc0] sm:$0xff]
        %v1061 = vld [vmem:[%s118 + $0x1cc8] sm:$0xff]
        %v1062 = vld [vmem:[%s118 + $0x1cd0] sm:$0xff]
        %v1063 = vld [vmem:[%s118 + $0x1cd8] sm:$0xff]
        %v1064 = vld [vmem:[%s118 + $0x1ce0] sm:$0xff]
        %v1065 = vld [vmem:[%s118 + $0x1ce8] sm:$0xff]
        %v1066 = vld [vmem:[%s118 + $0x1cf0] sm:$0xff]
        %v1067 = vld [vmem:[%s118 + $0x1cf8] sm:$0xff]
        %v1068 = vld [vmem:[%s118 + $0x1d00] sm:$0xff]
        %v1069 = vld [vmem:[%s118 + $0x1d08] sm:$0xff]
        %v1070 = vld [vmem:[%s118 + $0x1d10] sm:$0xff]
        %v1071 = vld [vmem:[%s118 + $0x1d18] sm:$0xff]
        %v1072 = vld [vmem:[%s118 + $0x1d20] sm:$0xff]
        %v1073 = vld [vmem:[%s118 + $0x1d28] sm:$0xff]
        %v1074 = vld [vmem:[%s118 + $0x1d30] sm:$0xff]
        %v1075 = vld [vmem:[%s118 + $0x1d38] sm:$0xff]
        %v1076 = vld [vmem:[%s118 + $0x1d40] sm:$0xff]
        %v1077 = vld [vmem:[%s118 + $0x1d48] sm:$0xff]
        %v1078 = vld [vmem:[%s118 + $0x1d50] sm:$0xff]
        %v1079 = vld [vmem:[%s118 + $0x1d58] sm:$0xff]
        %v1080 = vld [vmem:[%s118 + $0x1d60] sm:$0xff]
        %v1081 = vld [vmem:[%s118 + $0x1d68] sm:$0xff]
        %v1082 = vld [vmem:[%s118 + $0x1d70] sm:$0xff]
        %v1083 = vld [vmem:[%s118 + $0x1d78] sm:$0xff]
        %v1084 = vld [vmem:[%s118 + $0x1d80] sm:$0xff]
        %v1085 = vld [vmem:[%s118 + $0x1d88] sm:$0xff]
        %v1086 = vld [vmem:[%s118 + $0x1d90] sm:$0xff]
        %v1087 = vld [vmem:[%s118 + $0x1d98] sm:$0xff]
        %v1088 = vld [vmem:[%s118 + $0x1da0] sm:$0xff]
        %v1089 = vld [vmem:[%s118 + $0x1da8] sm:$0xff]
        %v1090 = vld [vmem:[%s118 + $0x1db0] sm:$0xff]
        %v1091 = vld [vmem:[%s118 + $0x1db8] sm:$0xff]
        %v1092 = vld [vmem:[%s118 + $0x1dc0] sm:$0xff]
        %v1093 = vld [vmem:[%s118 + $0x1dc8] sm:$0xff]
        %v1094 = vld [vmem:[%s118 + $0x1dd0] sm:$0xff]
        %v1095 = vld [vmem:[%s118 + $0x1dd8] sm:$0xff]
        %v1096 = vld [vmem:[%s118 + $0x1de0] sm:$0xff]
        %v1097 = vld [vmem:[%s118 + $0x1de8] sm:$0xff]
        %v1098 = vld [vmem:[%s118 + $0x1df0] sm:$0xff]
        %v1099 = vld [vmem:[%s118 + $0x1df8] sm:$0xff]
        %v1100 = vld [vmem:[%s118 + $0x1e00] sm:$0xff]
        %v1101 = vld [vmem:[%s118 + $0x1e08] sm:$0xff]
        %v1102 = vld [vmem:[%s118 + $0x1e10] sm:$0xff]
        %v1103 = vld [vmem:[%s118 + $0x1e18] sm:$0xff]
        %v1104 = vld [vmem:[%s118 + $0x1e20] sm:$0xff]
        %v1105 = vld [vmem:[%s118 + $0x1e28] sm:$0xff]
        %v1106 = vld [vmem:[%s118 + $0x1e30] sm:$0xff]
        %v1107 = vld [vmem:[%s118 + $0x1e38] sm:$0xff]
        %v1108 = vld [vmem:[%s118 + $0x1e40] sm:$0xff]
        %v1109 = vld [vmem:[%s118 + $0x1e48] sm:$0xff]
        %v1110 = vld [vmem:[%s118 + $0x1e50] sm:$0xff]
        %v1111 = vld [vmem:[%s118 + $0x1e58] sm:$0xff]
        %v1112 = vld [vmem:[%s118 + $0x1e60] sm:$0xff]
        %v1113 = vld [vmem:[%s118 + $0x1e68] sm:$0xff]
        %v1114 = vld [vmem:[%s118 + $0x1e70] sm:$0xff]
        %v1115 = vld [vmem:[%s118 + $0x1e78] sm:$0xff]
        %v1116 = vld [vmem:[%s118 + $0x1e80] sm:$0xff]
        %v1117 = vld [vmem:[%s118 + $0x1e88] sm:$0xff]
        %v1118 = vld [vmem:[%s118 + $0x1e90] sm:$0xff]
        %v1119 = vld [vmem:[%s118 + $0x1e98] sm:$0xff]
        %v1120 = vld [vmem:[%s118 + $0x1ea0] sm:$0xff]
        %v1121 = vld [vmem:[%s118 + $0x1ea8] sm:$0xff]
        %v1122 = vld [vmem:[%s118 + $0x1eb0] sm:$0xff]
        %v1123 = vld [vmem:[%s118 + $0x1eb8] sm:$0xff]
        %v1124 = vld [vmem:[%s118 + $0x1ec0] sm:$0xff]
        %v1125 = vld [vmem:[%s118 + $0x1ec8] sm:$0xff]
        %v1126 = vld [vmem:[%s118 + $0x1ed0] sm:$0xff]
        %v1127 = vld [vmem:[%s118 + $0x1ed8] sm:$0xff]
        %v1128 = vld [vmem:[%s118 + $0x1ee0] sm:$0xff]
        %v1129 = vld [vmem:[%s118 + $0x1ee8] sm:$0xff]
        %v1130 = vld [vmem:[%s118 + $0x1ef0] sm:$0xff]
        %v1131 = vld [vmem:[%s118 + $0x1ef8] sm:$0xff]
        %v1132 = vld [vmem:[%s118 + $0x1f00] sm:$0xff]
        %v1133 = vld [vmem:[%s118 + $0x1f08] sm:$0xff]
        %v1134 = vld [vmem:[%s118 + $0x1f10] sm:$0xff]
        %v1135 = vld [vmem:[%s118 + $0x1f18] sm:$0xff]
        %v1136 = vld [vmem:[%s118 + $0x1f20] sm:$0xff]
        %v1137 = vld [vmem:[%s118 + $0x1f28] sm:$0xff]
        %v1138 = vld [vmem:[%s118 + $0x1f30] sm:$0xff]
        %v1139 = vld [vmem:[%s118 + $0x1f38] sm:$0xff]
        %v1140 = vld [vmem:[%s118 + $0x1f40] sm:$0xff]
        %v1141 = vld [vmem:[%s118 + $0x1f48] sm:$0xff]
        %v1142 = vld [vmem:[%s118 + $0x1f50] sm:$0xff]
        %v1143 = vld [vmem:[%s118 + $0x1f58] sm:$0xff]
        %v1144 = vld [vmem:[%s118 + $0x1f60] sm:$0xff]
        %v1145 = vld [vmem:[%s118 + $0x1f68] sm:$0xff]
        %v1146 = vld [vmem:[%s118 + $0x1f70] sm:$0xff]
        %v1147 = vld [vmem:[%s118 + $0x1f78] sm:$0xff]
        %v1148 = vld [vmem:[%s118 + $0x1f80] sm:$0xff]
        %v1149 = vld [vmem:[%s118 + $0x1f88] sm:$0xff]
        %v1150 = vld [vmem:[%s118 + $0x1f90] sm:$0xff]
        %v1151 = vld [vmem:[%s118 + $0x1f98] sm:$0xff]
        %v1152 = vld [vmem:[%s118 + $0x1fa0] sm:$0xff]
        %v1153 = vld [vmem:[%s118 + $0x1fa8] sm:$0xff]
        %v1154 = vld [vmem:[%s118 + $0x1fb0] sm:$0xff]
        %v1155 = vld [vmem:[%s118 + $0x1fb8] sm:$0xff]
        %v1156 = vld [vmem:[%s118 + $0x1fc0] sm:$0xff]
        %v1157 = vld [vmem:[%s118 + $0x1fc8] sm:$0xff]
        %v1158 = vld [vmem:[%s118 + $0x1fd0] sm:$0xff]
        %v1159 = vld [vmem:[%s118 + $0x1fd8] sm:$0xff]
        %v1160 = vld [vmem:[%s118 + $0x1fe0] sm:$0xff]
        %v1161 = vld [vmem:[%s118 + $0x1fe8] sm:$0xff]
        %v1162 = vld [vmem:[%s118 + $0x1ff0] sm:$0xff]
        %v1163 = vld [vmem:[%s118 + $0x1ff8] sm:$0xff]
        %v1164 = vmul.f32 %v140, 1.5
        %v1165 = vmul.f32 %v141, 1.5
        %v1166 = vmul.f32 %v142, 1.5
        %v1167 = vmul.f32 %v143, 1.5
        %v1168 = vmul.f32 %v144, 1.5
        %v1169 = vmul.f32 %v145, 1.5
        %v1170 = vmul.f32 %v146, 1.5
        %v1171 = vmul.f32 %v147, 1.5
        %v1172 = vmul.f32 %v148, 1.5
        %v1173 = vmul.f32 %v149, 1.5
        %v1174 = vmul.f32 %v150, 1.5
        %v1175 = vmul.f32 %v151, 1.5
        %v1176 = vmul.f32 %v152, 1.5
        %v1177 = vmul.f32 %v153, 1.5
        %v1178 = vmul.f32 %v154, 1.5
        %v1179 = vmul.f32 %v155, 1.5
        %v1180 = vmul.f32 %v156, 1.5
        %v1181 = vmul.f32 %v157, 1.5
        %v1182 = vmul.f32 %v158, 1.5
        %v1183 = vmul.f32 %v159, 1.5
        %v1184 = vmul.f32 %v160, 1.5
        %v1185 = vmul.f32 %v161, 1.5
        %v1186 = vmul.f32 %v162, 1.5
        %v1187 = vmul.f32 %v163, 1.5
        %v1188 = vmul.f32 %v164, 1.5
        %v1189 = vmul.f32 %v165, 1.5
        %v1190 = vmul.f32 %v166, 1.5
        %v1191 = vmul.f32 %v167, 1.5
        %v1192 = vmul.f32 %v168, 1.5
        %v1193 = vmul.f32 %v169, 1.5
        %v1194 = vmul.f32 %v170, 1.5
        %v1195 = vmul.f32 %v171, 1.5
        %v1196 = vmul.f32 %v172, 1.5
        %v1197 = vmul.f32 %v173, 1.5
        %v1198 = vmul.f32 %v174, 1.5
        %v1199 = vmul.f32 %v175, 1.5
        %v1200 = vmul.f32 %v176, 1.5
        %v1201 = vmul.f32 %v177, 1.5
        %v1202 = vmul.f32 %v178, 1.5
        %v1203 = vmul.f32 %v179, 1.5
        %v1204 = vmul.f32 %v180, 1.5
        %v1205 = vmul.f32 %v181, 1.5
        %v1206 = vmul.f32 %v182, 1.5
        %v1207 = vmul.f32 %v183, 1.5
        %v1208 = vmul.f32 %v184, 1.5
        %v1209 = vmul.f32 %v185, 1.5
        %v1210 = vmul.f32 %v186, 1.5
        %v1211 = vmul.f32 %v187, 1.5
        %v1212 = vmul.f32 %v188, 1.5
        %v1213 = vmul.f32 %v189, 1.5
        %v1214 = vmul.f32 %v190, 1.5
        %v1215 = vmul.f32 %v191, 1.5
        %v1216 = vmul.f32 %v192, 1.5
        %v1217 = vmul.f32 %v193, 1.5
        %v1218 = vmul.f32 %v194, 1.5
        %v1219 = vmul.f32 %v195, 1.5
        %v1220 = vmul.f32 %v196, 1.5
        %v1221 = vmul.f32 %v197, 1.5
        %v1222 = vmul.f32 %v198, 1.5
        %v1223 = vmul.f32 %v199, 1.5
        %v1224 = vmul.f32 %v200, 1.5
        %v1225 = vmul.f32 %v201, 1.5
        %v1226 = vmul.f32 %v202, 1.5
        %v1227 = vmul.f32 %v203, 1.5
        %v1228 = vmul.f32 %v204, 1.5
        %v1229 = vmul.f32 %v205, 1.5
        %v1230 = vmul.f32 %v206, 1.5
        %v1231 = vmul.f32 %v207, 1.5
        %v1232 = vmul.f32 %v208, 1.5
        %v1233 = vmul.f32 %v209, 1.5
        %v1234 = vmul.f32 %v210, 1.5
        %v1235 = vmul.f32 %v211, 1.5
        %v1236 = vmul.f32 %v212, 1.5
        %v1237 = vmul.f32 %v213, 1.5
        %v1238 = vmul.f32 %v214, 1.5
        %v1239 = vmul.f32 %v215, 1.5
        %v1240 = vmul.f32 %v216, 1.5
        %v1241 = vmul.f32 %v217, 1.5
        %v1242 = vmul.f32 %v218, 1.5
        %v1243 = vmul.f32 %v219, 1.5
        %v1244 = vmul.f32 %v220, 1.5
        %v1245 = vmul.f32 %v221, 1.5
        %v1246 = vmul.f32 %v222, 1.5
        %v1247 = vmul.f32 %v223, 1.5
        %v1248 = vmul.f32 %v224, 1.5
        %v1249 = vmul.f32 %v225, 1.5
        %v1250 = vmul.f32 %v226, 1.5
        %v1251 = vmul.f32 %v227, 1.5
        %v1252 = vmul.f32 %v228, 1.5
        %v1253 = vmul.f32 %v229, 1.5
        %v1254 = vmul.f32 %v230, 1.5
        %v1255 = vmul.f32 %v231, 1.5
        %v1256 = vmul.f32 %v232, 1.5
        %v1257 = vmul.f32 %v233, 1.5
        %v1258 = vmul.f32 %v234, 1.5
        %v1259 = vmul.f32 %v235, 1.5
        %v1260 = vmul.f32 %v236, 1.5
        %v1261 = vmul.f32 %v237, 1.5
        %v1262 = vmul.f32 %v238, 1.5
        %v1263 = vmul.f32 %v239, 1.5
        %v1264 = vmul.f32 %v240, 1.5
        %v1265 = vmul.f32 %v241, 1.5
        %v1266 = vmul.f32 %v242, 1.5
        %v1267 = vmul.f32 %v243, 1.5
        %v1268 = vmul.f32 %v244, 1.5
        %v1269 = vmul.f32 %v245, 1.5
        %v1270 = vmul.f32 %v246, 1.5
        %v1271 = vmul.f32 %v247, 1.5
        %v1272 = vmul.f32 %v248, 1.5
        %v1273 = vmul.f32 %v249, 1.5
        %v1274 = vmul.f32 %v250, 1.5
        %v1275 = vmul.f32 %v251, 1.5
        %v1276 = vmul.f32 %v252, 1.5
        %v1277 = vmul.f32 %v253, 1.5
        %v1278 = vmul.f32 %v254, 1.5
        %v1279 = vmul.f32 %v255, 1.5
        %v1280 = vmul.f32 %v256, 1.5
        %v1281 = vmul.f32 %v257, 1.5
        %v1282 = vmul.f32 %v258, 1.5
        %v1283 = vmul.f32 %v259, 1.5
        %v1284 = vmul.f32 %v260, 1.5
        %v1285 = vmul.f32 %v261, 1.5
        %v1286 = vmul.f32 %v262, 1.5
        %v1287 = vmul.f32 %v263, 1.5
        %v1288 = vmul.f32 %v264, 1.5
        %v1289 = vmul.f32 %v265, 1.5
        %v1290 = vmul.f32 %v266, 1.5
        %v1291 = vmul.f32 %v267, 1.5
        %v1292 = vmul.f32 %v268, 1.5
        %v1293 = vmul.f32 %v269, 1.5
        %v1294 = vmul.f32 %v270, 1.5
        %v1295 = vmul.f32 %v271, 1.5
        %v1296 = vmul.f32 %v272, 1.5
        %v1297 = vmul.f32 %v273, 1.5
        %v1298 = vmul.f32 %v274, 1.5
        %v1299 = vmul.f32 %v275, 1.5
        %v1300 = vmul.f32 %v276, 1.5
        %v1301 = vmul.f32 %v277, 1.5
        %v1302 = vmul.f32 %v278, 1.5
        %v1303 = vmul.f32 %v279, 1.5
        %v1304 = vmul.f32 %v280, 1.5
        %v1305 = vmul.f32 %v281, 1.5
        %v1306 = vmul.f32 %v282, 1.5
        %v1307 = vmul.f32 %v283, 1.5
        %v1308 = vmul.f32 %v284, 1.5
        %v1309 = vmul.f32 %v285, 1.5
        %v1310 = vmul.f32 %v286, 1.5
        %v1311 = vmul.f32 %v287, 1.5
        %v1312 = vmul.f32 %v288, 1.5
        %v1313 = vmul.f32 %v289, 1.5
        %v1314 = vmul.f32 %v290, 1.5
        %v1315 = vmul.f32 %v291, 1.5
        %v1316 = vmul.f32 %v292, 1.5
        %v1317 = vmul.f32 %v293, 1.5
        %v1318 = vmul.f32 %v294, 1.5
        %v1319 = vmul.f32 %v295, 1.5
        %v1320 = vmul.f32 %v296, 1.5
        %v1321 = vmul.f32 %v297, 1.5
        %v1322 = vmul.f32 %v298, 1.5
        %v1323 = vmul.f32 %v299, 1.5
        %v1324 = vmul.f32 %v300, 1.5
        %v1325 = vmul.f32 %v301, 1.5
        %v1326 = vmul.f32 %v302, 1.5
        %v1327 = vmul.f32 %v303, 1.5
        %v1328 = vmul.f32 %v304, 1.5
        %v1329 = vmul.f32 %v305, 1.5
        %v1330 = vmul.f32 %v306, 1.5
        %v1331 = vmul.f32 %v307, 1.5
        %v1332 = vmul.f32 %v308, 1.5
        %v1333 = vmul.f32 %v309, 1.5
        %v1334 = vmul.f32 %v310, 1.5
        %v1335 = vmul.f32 %v311, 1.5
        %v1336 = vmul.f32 %v312, 1.5
        %v1337 = vmul.f32 %v313, 1.5
        %v1338 = vmul.f32 %v314, 1.5
        %v1339 = vmul.f32 %v315, 1.5
        %v1340 = vmul.f32 %v316, 1.5
        %v1341 = vmul.f32 %v317, 1.5
        %v1342 = vmul.f32 %v318, 1.5
        %v1343 = vmul.f32 %v319, 1.5
        %v1344 = vmul.f32 %v320, 1.5
        %v1345 = vmul.f32 %v321, 1.5
        %v1346 = vmul.f32 %v322, 1.5
        %v1347 = vmul.f32 %v323, 1.5
        %v1348 = vmul.f32 %v324, 1.5
        %v1349 = vmul.f32 %v325, 1.5
        %v1350 = vmul.f32 %v326, 1.5
        %v1351 = vmul.f32 %v327, 1.5
        %v1352 = vmul.f32 %v328, 1.5
        %v1353 = vmul.f32 %v329, 1.5
        %v1354 = vmul.f32 %v330, 1.5
        %v1355 = vmul.f32 %v331, 1.5
        %v1356 = vmul.f32 %v332, 1.5
        %v1357 = vmul.f32 %v333, 1.5
        %v1358 = vmul.f32 %v334, 1.5
        %v1359 = vmul.f32 %v335, 1.5
        %v1360 = vmul.f32 %v336, 1.5
        %v1361 = vmul.f32 %v337, 1.5
        %v1362 = vmul.f32 %v338, 1.5
        %v1363 = vmul.f32 %v339, 1.5
        %v1364 = vmul.f32 %v340, 1.5
        %v1365 = vmul.f32 %v341, 1.5
        %v1366 = vmul.f32 %v342, 1.5
        %v1367 = vmul.f32 %v343, 1.5
        %v1368 = vmul.f32 %v344, 1.5
        %v1369 = vmul.f32 %v345, 1.5
        %v1370 = vmul.f32 %v346, 1.5
        %v1371 = vmul.f32 %v347, 1.5
        %v1372 = vmul.f32 %v348, 1.5
        %v1373 = vmul.f32 %v349, 1.5
        %v1374 = vmul.f32 %v350, 1.5
        %v1375 = vmul.f32 %v351, 1.5
        %v1376 = vmul.f32 %v352, 1.5
        %v1377 = vmul.f32 %v353, 1.5
        %v1378 = vmul.f32 %v354, 1.5
        %v1379 = vmul.f32 %v355, 1.5
        %v1380 = vmul.f32 %v356, 1.5
        %v1381 = vmul.f32 %v357, 1.5
        %v1382 = vmul.f32 %v358, 1.5
        %v1383 = vmul.f32 %v359, 1.5
        %v1384 = vmul.f32 %v360, 1.5
        %v1385 = vmul.f32 %v361, 1.5
        %v1386 = vmul.f32 %v362, 1.5
        %v1387 = vmul.f32 %v363, 1.5
        %v1388 = vmul.f32 %v364, 1.5
        %v1389 = vmul.f32 %v365, 1.5
        %v1390 = vmul.f32 %v366, 1.5
        %v1391 = vmul.f32 %v367, 1.5
        %v1392 = vmul.f32 %v368, 1.5
        %v1393 = vmul.f32 %v369, 1.5
        %v1394 = vmul.f32 %v370, 1.5
        %v1395 = vmul.f32 %v371, 1.5
        %v1396 = vmul.f32 %v372, 1.5
        %v1397 = vmul.f32 %v373, 1.5
        %v1398 = vmul.f32 %v374, 1.5
        %v1399 = vmul.f32 %v375, 1.5
        %v1400 = vmul.f32 %v376, 1.5
        %v1401 = vmul.f32 %v377, 1.5
        %v1402 = vmul.f32 %v378, 1.5
        %v1403 = vmul.f32 %v379, 1.5
        %v1404 = vmul.f32 %v380, 1.5
        %v1405 = vmul.f32 %v381, 1.5
        %v1406 = vmul.f32 %v382, 1.5
        %v1407 = vmul.f32 %v383, 1.5
        %v1408 = vmul.f32 %v384, 1.5
        %v1409 = vmul.f32 %v385, 1.5
        %v1410 = vmul.f32 %v386, 1.5
        %v1411 = vmul.f32 %v387, 1.5
        %v1412 = vmul.f32 %v388, 1.5
        %v1413 = vmul.f32 %v389, 1.5
        %v1414 = vmul.f32 %v390, 1.5
        %v1415 = vmul.f32 %v391, 1.5
        %v1416 = vmul.f32 %v392, 1.5
        %v1417 = vmul.f32 %v393, 1.5
        %v1418 = vmul.f32 %v394, 1.5
        %v1419 = vmul.f32 %v395, 1.5
        %v1420 = vmul.f32 %v396, 1.5
        %v1421 = vmul.f32 %v397, 1.5
        %v1422 = vmul.f32 %v398, 1.5
        %v1423 = vmul.f32 %v399, 1.5
        %v1424 = vmul.f32 %v400, 1.5
        %v1425 = vmul.f32 %v401, 1.5
        %v1426 = vmul.f32 %v402, 1.5
        %v1427 = vmul.f32 %v403, 1.5
        %v1428 = vmul.f32 %v404, 1.5
        %v1429 = vmul.f32 %v405, 1.5
        %v1430 = vmul.f32 %v406, 1.5
        %v1431 = vmul.f32 %v407, 1.5
        %v1432 = vmul.f32 %v408, 1.5
        %v1433 = vmul.f32 %v409, 1.5
        %v1434 = vmul.f32 %v410, 1.5
        %v1435 = vmul.f32 %v411, 1.5
        %v1436 = vmul.f32 %v412, 1.5
        %v1437 = vmul.f32 %v413, 1.5
        %v1438 = vmul.f32 %v414, 1.5
        %v1439 = vmul.f32 %v415, 1.5
        %v1440 = vmul.f32 %v416, 1.5
        %v1441 = vmul.f32 %v417, 1.5
        %v1442 = vmul.f32 %v418, 1.5
        %v1443 = vmul.f32 %v419, 1.5
        %v1444 = vmul.f32 %v420, 1.5
        %v1445 = vmul.f32 %v421, 1.5
        %v1446 = vmul.f32 %v422, 1.5
        %v1447 = vmul.f32 %v423, 1.5
        %v1448 = vmul.f32 %v424, 1.5
        %v1449 = vmul.f32 %v425, 1.5
        %v1450 = vmul.f32 %v426, 1.5
        %v1451 = vmul.f32 %v427, 1.5
        %v1452 = vmul.f32 %v428, 1.5
        %v1453 = vmul.f32 %v429, 1.5
        %v1454 = vmul.f32 %v430, 1.5
        %v1455 = vmul.f32 %v431, 1.5
        %v1456 = vmul.f32 %v432, 1.5
        %v1457 = vmul.f32 %v433, 1.5
        %v1458 = vmul.f32 %v434, 1.5
        %v1459 = vmul.f32 %v435, 1.5
        %v1460 = vmul.f32 %v436, 1.5
        %v1461 = vmul.f32 %v437, 1.5
        %v1462 = vmul.f32 %v438, 1.5
        %v1463 = vmul.f32 %v439, 1.5
        %v1464 = vmul.f32 %v440, 1.5
        %v1465 = vmul.f32 %v441, 1.5
        %v1466 = vmul.f32 %v442, 1.5
        %v1467 = vmul.f32 %v443, 1.5
        %v1468 = vmul.f32 %v444, 1.5
        %v1469 = vmul.f32 %v445, 1.5
        %v1470 = vmul.f32 %v446, 1.5
        %v1471 = vmul.f32 %v447, 1.5
        %v1472 = vmul.f32 %v448, 1.5
        %v1473 = vmul.f32 %v449, 1.5
        %v1474 = vmul.f32 %v450, 1.5
        %v1475 = vmul.f32 %v451, 1.5
        %v1476 = vmul.f32 %v452, 1.5
        %v1477 = vmul.f32 %v453, 1.5
        %v1478 = vmul.f32 %v454, 1.5
        %v1479 = vmul.f32 %v455, 1.5
        %v1480 = vmul.f32 %v456, 1.5
        %v1481 = vmul.f32 %v457, 1.5
        %v1482 = vmul.f32 %v458, 1.5
        %v1483 = vmul.f32 %v459, 1.5
        %v1484 = vmul.f32 %v460, 1.5
        %v1485 = vmul.f32 %v461, 1.5
        %v1486 = vmul.f32 %v462, 1.5
        %v1487 = vmul.f32 %v463, 1.5
        %v1488 = vmul.f32 %v464, 1.5
        %v1489 = vmul.f32 %v465, 1.5
        %v1490 = vmul.f32 %v466, 1.5
        %v1491 = vmul.f32 %v467, 1.5
        %v1492 = vmul.f32 %v468, 1.5
        %v1493 = vmul.f32 %v469, 1.5
        %v1494 = vmul.f32 %v470, 1.5
        %v1495 = vmul.f32 %v471, 1.5
        %v1496 = vmul.f32 %v472, 1.5
        %v1497 = vmul.f32 %v473, 1.5
        %v1498 = vmul.f32 %v474, 1.5
        %v1499 = vmul.f32 %v475, 1.5
        %v1500 = vmul.f32 %v476, 1.5
        %v1501 = vmul.f32 %v477, 1.5
        %v1502 = vmul.f32 %v478, 1.5
        %v1503 = vmul.f32 %v479, 1.5
        %v1504 = vmul.f32 %v480, 1.5
        %v1505 = vmul.f32 %v481, 1.5
        %v1506 = vmul.f32 %v482, 1.5
        %v1507 = vmul.f32 %v483, 1.5
        %v1508 = vmul.f32 %v484, 1.5
        %v1509 = vmul.f32 %v485, 1.5
        %v1510 = vmul.f32 %v486, 1.5
        %v1511 = vmul.f32 %v487, 1.5
        %v1512 = vmul.f32 %v488, 1.5
        %v1513 = vmul.f32 %v489, 1.5
        %v1514 = vmul.f32 %v490, 1.5
        %v1515 = vmul.f32 %v491, 1.5
        %v1516 = vmul.f32 %v492, 1.5
        %v1517 = vmul.f32 %v493, 1.5
        %v1518 = vmul.f32 %v494, 1.5
        %v1519 = vmul.f32 %v495, 1.5
        %v1520 = vmul.f32 %v496, 1.5
        %v1521 = vmul.f32 %v497, 1.5
        %v1522 = vmul.f32 %v498, 1.5
        %v1523 = vmul.f32 %v499, 1.5
        %v1524 = vmul.f32 %v500, 1.5
        %v1525 = vmul.f32 %v501, 1.5
        %v1526 = vmul.f32 %v502, 1.5
        %v1527 = vmul.f32 %v503, 1.5
        %v1528 = vmul.f32 %v504, 1.5
        %v1529 = vmul.f32 %v505, 1.5
        %v1530 = vmul.f32 %v506, 1.5
        %v1531 = vmul.f32 %v507, 1.5
        %v1532 = vmul.f32 %v508, 1.5
        %v1533 = vmul.f32 %v509, 1.5
        %v1534 = vmul.f32 %v510, 1.5
        %v1535 = vmul.f32 %v511, 1.5
        %v1536 = vmul.f32 %v512, 1.5
        %v1537 = vmul.f32 %v513, 1.5
        %v1538 = vmul.f32 %v514, 1.5
        %v1539 = vmul.f32 %v515, 1.5
        %v1540 = vmul.f32 %v516, 1.5
        %v1541 = vmul.f32 %v517, 1.5
        %v1542 = vmul.f32 %v518, 1.5
        %v1543 = vmul.f32 %v519, 1.5
        %v1544 = vmul.f32 %v520, 1.5
        %v1545 = vmul.f32 %v521, 1.5
        %v1546 = vmul.f32 %v522, 1.5
        %v1547 = vmul.f32 %v523, 1.5
        %v1548 = vmul.f32 %v524, 1.5
        %v1549 = vmul.f32 %v525, 1.5
        %v1550 = vmul.f32 %v526, 1.5
        %v1551 = vmul.f32 %v527, 1.5
        %v1552 = vmul.f32 %v528, 1.5
        %v1553 = vmul.f32 %v529, 1.5
        %v1554 = vmul.f32 %v530, 1.5
        %v1555 = vmul.f32 %v531, 1.5
        %v1556 = vmul.f32 %v532, 1.5
        %v1557 = vmul.f32 %v533, 1.5
        %v1558 = vmul.f32 %v534, 1.5
        %v1559 = vmul.f32 %v535, 1.5
        %v1560 = vmul.f32 %v536, 1.5
        %v1561 = vmul.f32 %v537, 1.5
        %v1562 = vmul.f32 %v538, 1.5
        %v1563 = vmul.f32 %v539, 1.5
        %v1564 = vmul.f32 %v540, 1.5
        %v1565 = vmul.f32 %v541, 1.5
        %v1566 = vmul.f32 %v542, 1.5
        %v1567 = vmul.f32 %v543, 1.5
        %v1568 = vmul.f32 %v544, 1.5
        %v1569 = vmul.f32 %v545, 1.5
        %v1570 = vmul.f32 %v546, 1.5
        %v1571 = vmul.f32 %v547, 1.5
        %v1572 = vmul.f32 %v548, 1.5
        %v1573 = vmul.f32 %v549, 1.5
        %v1574 = vmul.f32 %v550, 1.5
        %v1575 = vmul.f32 %v551, 1.5
        %v1576 = vmul.f32 %v552, 1.5
        %v1577 = vmul.f32 %v553, 1.5
        %v1578 = vmul.f32 %v554, 1.5
        %v1579 = vmul.f32 %v555, 1.5
        %v1580 = vmul.f32 %v556, 1.5
        %v1581 = vmul.f32 %v557, 1.5
        %v1582 = vmul.f32 %v558, 1.5
        %v1583 = vmul.f32 %v559, 1.5
        %v1584 = vmul.f32 %v560, 1.5
        %v1585 = vmul.f32 %v561, 1.5
        %v1586 = vmul.f32 %v562, 1.5
        %v1587 = vmul.f32 %v563, 1.5
        %v1588 = vmul.f32 %v564, 1.5
        %v1589 = vmul.f32 %v565, 1.5
        %v1590 = vmul.f32 %v566, 1.5
        %v1591 = vmul.f32 %v567, 1.5
        %v1592 = vmul.f32 %v568, 1.5
        %v1593 = vmul.f32 %v569, 1.5
        %v1594 = vmul.f32 %v570, 1.5
        %v1595 = vmul.f32 %v571, 1.5
        %v1596 = vmul.f32 %v572, 1.5
        %v1597 = vmul.f32 %v573, 1.5
        %v1598 = vmul.f32 %v574, 1.5
        %v1599 = vmul.f32 %v575, 1.5
        %v1600 = vmul.f32 %v576, 1.5
        %v1601 = vmul.f32 %v577, 1.5
        %v1602 = vmul.f32 %v578, 1.5
        %v1603 = vmul.f32 %v579, 1.5
        %v1604 = vmul.f32 %v580, 1.5
        %v1605 = vmul.f32 %v581, 1.5
        %v1606 = vmul.f32 %v582, 1.5
        %v1607 = vmul.f32 %v583, 1.5
        %v1608 = vmul.f32 %v584, 1.5
        %v1609 = vmul.f32 %v585, 1.5
        %v1610 = vmul.f32 %v586, 1.5
        %v1611 = vmul.f32 %v587, 1.5
        %v1612 = vmul.f32 %v588, 1.5
        %v1613 = vmul.f32 %v589, 1.5
        %v1614 = vmul.f32 %v590, 1.5
        %v1615 = vmul.f32 %v591, 1.5
        %v1616 = vmul.f32 %v592, 1.5
        %v1617 = vmul.f32 %v593, 1.5
        %v1618 = vmul.f32 %v594, 1.5
        %v1619 = vmul.f32 %v595, 1.5
        %v1620 = vmul.f32 %v596, 1.5
        %v1621 = vmul.f32 %v597, 1.5
        %v1622 = vmul.f32 %v598, 1.5
        %v1623 = vmul.f32 %v599, 1.5
        %v1624 = vmul.f32 %v600, 1.5
        %v1625 = vmul.f32 %v601, 1.5
        %v1626 = vmul.f32 %v602, 1.5
        %v1627 = vmul.f32 %v603, 1.5
        %v1628 = vmul.f32 %v604, 1.5
        %v1629 = vmul.f32 %v605, 1.5
        %v1630 = vmul.f32 %v606, 1.5
        %v1631 = vmul.f32 %v607, 1.5
        %v1632 = vmul.f32 %v608, 1.5
        %v1633 = vmul.f32 %v609, 1.5
        %v1634 = vmul.f32 %v610, 1.5
        %v1635 = vmul.f32 %v611, 1.5
        %v1636 = vmul.f32 %v612, 1.5
        %v1637 = vmul.f32 %v613, 1.5
        %v1638 = vmul.f32 %v614, 1.5
        %v1639 = vmul.f32 %v615, 1.5
        %v1640 = vmul.f32 %v616, 1.5
        %v1641 = vmul.f32 %v617, 1.5
        %v1642 = vmul.f32 %v618, 1.5
        %v1643 = vmul.f32 %v619, 1.5
        %v1644 = vmul.f32 %v620, 1.5
        %v1645 = vmul.f32 %v621, 1.5
        %v1646 = vmul.f32 %v622, 1.5
        %v1647 = vmul.f32 %v623, 1.5
        %v1648 = vmul.f32 %v624, 1.5
        %v1649 = vmul.f32 %v625, 1.5
        %v1650 = vmul.f32 %v626, 1.5
        %v1651 = vmul.f32 %v627, 1.5
        %v1652 = vmul.f32 %v628, 1.5
        %v1653 = vmul.f32 %v629, 1.5
        %v1654 = vmul.f32 %v630, 1.5
        %v1655 = vmul.f32 %v631, 1.5
        %v1656 = vmul.f32 %v632, 1.5
        %v1657 = vmul.f32 %v633, 1.5
        %v1658 = vmul.f32 %v634, 1.5
        %v1659 = vmul.f32 %v635, 1.5
        %v1660 = vmul.f32 %v636, 1.5
        %v1661 = vmul.f32 %v637, 1.5
        %v1662 = vmul.f32 %v638, 1.5
        %v1663 = vmul.f32 %v639, 1.5
        %v1664 = vmul.f32 %v640, 1.5
        %v1665 = vmul.f32 %v641, 1.5
        %v1666 = vmul.f32 %v642, 1.5
        %v1667 = vmul.f32 %v643, 1.5
        %v1668 = vmul.f32 %v644, 1.5
        %v1669 = vmul.f32 %v645, 1.5
        %v1670 = vmul.f32 %v646, 1.5
        %v1671 = vmul.f32 %v647, 1.5
        %v1672 = vmul.f32 %v648, 1.5
        %v1673 = vmul.f32 %v649, 1.5
        %v1674 = vmul.f32 %v650, 1.5
        %v1675 = vmul.f32 %v651, 1.5
        %v1676 = vmul.f32 %v652, 1.5
        %v1677 = vmul.f32 %v653, 1.5
        %v1678 = vmul.f32 %v654, 1.5
        %v1679 = vmul.f32 %v655, 1.5
        %v1680 = vmul.f32 %v656, 1.5
        %v1681 = vmul.f32 %v657, 1.5
        %v1682 = vmul.f32 %v658, 1.5
        %v1683 = vmul.f32 %v659, 1.5
        %v1684 = vmul.f32 %v660, 1.5
        %v1685 = vmul.f32 %v661, 1.5
        %v1686 = vmul.f32 %v662, 1.5
        %v1687 = vmul.f32 %v663, 1.5
        %v1688 = vmul.f32 %v664, 1.5
        %v1689 = vmul.f32 %v665, 1.5
        %v1690 = vmul.f32 %v666, 1.5
        %v1691 = vmul.f32 %v667, 1.5
        %v1692 = vmul.f32 %v668, 1.5
        %v1693 = vmul.f32 %v669, 1.5
        %v1694 = vmul.f32 %v670, 1.5
        %v1695 = vmul.f32 %v671, 1.5
        %v1696 = vmul.f32 %v672, 1.5
        %v1697 = vmul.f32 %v673, 1.5
        %v1698 = vmul.f32 %v674, 1.5
        %v1699 = vmul.f32 %v675, 1.5
        %v1700 = vmul.f32 %v676, 1.5
        %v1701 = vmul.f32 %v677, 1.5
        %v1702 = vmul.f32 %v678, 1.5
        %v1703 = vmul.f32 %v679, 1.5
        %v1704 = vmul.f32 %v680, 1.5
        %v1705 = vmul.f32 %v681, 1.5
        %v1706 = vmul.f32 %v682, 1.5
        %v1707 = vmul.f32 %v683, 1.5
        %v1708 = vmul.f32 %v684, 1.5
        %v1709 = vmul.f32 %v685, 1.5
        %v1710 = vmul.f32 %v686, 1.5
        %v1711 = vmul.f32 %v687, 1.5
        %v1712 = vmul.f32 %v688, 1.5
        %v1713 = vmul.f32 %v689, 1.5
        %v1714 = vmul.f32 %v690, 1.5
        %v1715 = vmul.f32 %v691, 1.5
        %v1716 = vmul.f32 %v692, 1.5
        %v1717 = vmul.f32 %v693, 1.5
        %v1718 = vmul.f32 %v694, 1.5
        %v1719 = vmul.f32 %v695, 1.5
        %v1720 = vmul.f32 %v696, 1.5
        %v1721 = vmul.f32 %v697, 1.5
        %v1722 = vmul.f32 %v698, 1.5
        %v1723 = vmul.f32 %v699, 1.5
        %v1724 = vmul.f32 %v700, 1.5
        %v1725 = vmul.f32 %v701, 1.5
        %v1726 = vmul.f32 %v702, 1.5
        %v1727 = vmul.f32 %v703, 1.5
        %v1728 = vmul.f32 %v704, 1.5
        %v1729 = vmul.f32 %v705, 1.5
        %v1730 = vmul.f32 %v706, 1.5
        %v1731 = vmul.f32 %v707, 1.5
        %v1732 = vmul.f32 %v708, 1.5
        %v1733 = vmul.f32 %v709, 1.5
        %v1734 = vmul.f32 %v710, 1.5
        %v1735 = vmul.f32 %v711, 1.5
        %v1736 = vmul.f32 %v712, 1.5
        %v1737 = vmul.f32 %v713, 1.5
        %v1738 = vmul.f32 %v714, 1.5
        %v1739 = vmul.f32 %v715, 1.5
        %v1740 = vmul.f32 %v716, 1.5
        %v1741 = vmul.f32 %v717, 1.5
        %v1742 = vmul.f32 %v718, 1.5
        %v1743 = vmul.f32 %v719, 1.5
        %v1744 = vmul.f32 %v720, 1.5
        %v1745 = vmul.f32 %v721, 1.5
        %v1746 = vmul.f32 %v722, 1.5
        %v1747 = vmul.f32 %v723, 1.5
        %v1748 = vmul.f32 %v724, 1.5
        %v1749 = vmul.f32 %v725, 1.5
        %v1750 = vmul.f32 %v726, 1.5
        %v1751 = vmul.f32 %v727, 1.5
        %v1752 = vmul.f32 %v728, 1.5
        %v1753 = vmul.f32 %v729, 1.5
        %v1754 = vmul.f32 %v730, 1.5
        %v1755 = vmul.f32 %v731, 1.5
        %v1756 = vmul.f32 %v732, 1.5
        %v1757 = vmul.f32 %v733, 1.5
        %v1758 = vmul.f32 %v734, 1.5
        %v1759 = vmul.f32 %v735, 1.5
        %v1760 = vmul.f32 %v736, 1.5
        %v1761 = vmul.f32 %v737, 1.5
        %v1762 = vmul.f32 %v738, 1.5
        %v1763 = vmul.f32 %v739, 1.5
        %v1764 = vmul.f32 %v740, 1.5
        %v1765 = vmul.f32 %v741, 1.5
        %v1766 = vmul.f32 %v742, 1.5
        %v1767 = vmul.f32 %v743, 1.5
        %v1768 = vmul.f32 %v744, 1.5
        %v1769 = vmul.f32 %v745, 1.5
        %v1770 = vmul.f32 %v746, 1.5
        %v1771 = vmul.f32 %v747, 1.5
        %v1772 = vmul.f32 %v748, 1.5
        %v1773 = vmul.f32 %v749, 1.5
        %v1774 = vmul.f32 %v750, 1.5
        %v1775 = vmul.f32 %v751, 1.5
        %v1776 = vmul.f32 %v752, 1.5
        %v1777 = vmul.f32 %v753, 1.5
        %v1778 = vmul.f32 %v754, 1.5
        %v1779 = vmul.f32 %v755, 1.5
        %v1780 = vmul.f32 %v756, 1.5
        %v1781 = vmul.f32 %v757, 1.5
        %v1782 = vmul.f32 %v758, 1.5
        %v1783 = vmul.f32 %v759, 1.5
        %v1784 = vmul.f32 %v760, 1.5
        %v1785 = vmul.f32 %v761, 1.5
        %v1786 = vmul.f32 %v762, 1.5
        %v1787 = vmul.f32 %v763, 1.5
        %v1788 = vmul.f32 %v764, 1.5
        %v1789 = vmul.f32 %v765, 1.5
        %v1790 = vmul.f32 %v766, 1.5
        %v1791 = vmul.f32 %v767, 1.5
        %v1792 = vmul.f32 %v768, 1.5
        %v1793 = vmul.f32 %v769, 1.5
        %v1794 = vmul.f32 %v770, 1.5
        %v1795 = vmul.f32 %v771, 1.5
        %v1796 = vmul.f32 %v772, 1.5
        %v1797 = vmul.f32 %v773, 1.5
        %v1798 = vmul.f32 %v774, 1.5
        %v1799 = vmul.f32 %v775, 1.5
        %v1800 = vmul.f32 %v776, 1.5
        %v1801 = vmul.f32 %v777, 1.5
        %v1802 = vmul.f32 %v778, 1.5
        %v1803 = vmul.f32 %v779, 1.5
        %v1804 = vmul.f32 %v780, 1.5
        %v1805 = vmul.f32 %v781, 1.5
        %v1806 = vmul.f32 %v782, 1.5
        %v1807 = vmul.f32 %v783, 1.5
        %v1808 = vmul.f32 %v784, 1.5
        %v1809 = vmul.f32 %v785, 1.5
        %v1810 = vmul.f32 %v786, 1.5
        %v1811 = vmul.f32 %v787, 1.5
        %v1812 = vmul.f32 %v788, 1.5
        %v1813 = vmul.f32 %v789, 1.5
        %v1814 = vmul.f32 %v790, 1.5
        %v1815 = vmul.f32 %v791, 1.5
        %v1816 = vmul.f32 %v792, 1.5
        %v1817 = vmul.f32 %v793, 1.5
        %v1818 = vmul.f32 %v794, 1.5
        %v1819 = vmul.f32 %v795, 1.5
        %v1820 = vmul.f32 %v796, 1.5
        %v1821 = vmul.f32 %v797, 1.5
        %v1822 = vmul.f32 %v798, 1.5
        %v1823 = vmul.f32 %v799, 1.5
        %v1824 = vmul.f32 %v800, 1.5
        %v1825 = vmul.f32 %v801, 1.5
        %v1826 = vmul.f32 %v802, 1.5
        %v1827 = vmul.f32 %v803, 1.5
        %v1828 = vmul.f32 %v804, 1.5
        %v1829 = vmul.f32 %v805, 1.5
        %v1830 = vmul.f32 %v806, 1.5
        %v1831 = vmul.f32 %v807, 1.5
        %v1832 = vmul.f32 %v808, 1.5
        %v1833 = vmul.f32 %v809, 1.5
        %v1834 = vmul.f32 %v810, 1.5
        %v1835 = vmul.f32 %v811, 1.5
        %v1836 = vmul.f32 %v812, 1.5
        %v1837 = vmul.f32 %v813, 1.5
        %v1838 = vmul.f32 %v814, 1.5
        %v1839 = vmul.f32 %v815, 1.5
        %v1840 = vmul.f32 %v816, 1.5
        %v1841 = vmul.f32 %v817, 1.5
        %v1842 = vmul.f32 %v818, 1.5
        %v1843 = vmul.f32 %v819, 1.5
        %v1844 = vmul.f32 %v820, 1.5
        %v1845 = vmul.f32 %v821, 1.5
        %v1846 = vmul.f32 %v822, 1.5
        %v1847 = vmul.f32 %v823, 1.5
        %v1848 = vmul.f32 %v824, 1.5
        %v1849 = vmul.f32 %v825, 1.5
        %v1850 = vmul.f32 %v826, 1.5
        %v1851 = vmul.f32 %v827, 1.5
        %v1852 = vmul.f32 %v828, 1.5
        %v1853 = vmul.f32 %v829, 1.5
        %v1854 = vmul.f32 %v830, 1.5
        %v1855 = vmul.f32 %v831, 1.5
        %v1856 = vmul.f32 %v832, 1.5
        %v1857 = vmul.f32 %v833, 1.5
        %v1858 = vmul.f32 %v834, 1.5
        %v1859 = vmul.f32 %v835, 1.5
        %v1860 = vmul.f32 %v836, 1.5
        %v1861 = vmul.f32 %v837, 1.5
        %v1862 = vmul.f32 %v838, 1.5
        %v1863 = vmul.f32 %v839, 1.5
        %v1864 = vmul.f32 %v840, 1.5
        %v1865 = vmul.f32 %v841, 1.5
        %v1866 = vmul.f32 %v842, 1.5
        %v1867 = vmul.f32 %v843, 1.5
        %v1868 = vmul.f32 %v844, 1.5
        %v1869 = vmul.f32 %v845, 1.5
        %v1870 = vmul.f32 %v846, 1.5
        %v1871 = vmul.f32 %v847, 1.5
        %v1872 = vmul.f32 %v848, 1.5
        %v1873 = vmul.f32 %v849, 1.5
        %v1874 = vmul.f32 %v850, 1.5
        %v1875 = vmul.f32 %v851, 1.5
        %v1876 = vmul.f32 %v852, 1.5
        %v1877 = vmul.f32 %v853, 1.5
        %v1878 = vmul.f32 %v854, 1.5
        %v1879 = vmul.f32 %v855, 1.5
        %v1880 = vmul.f32 %v856, 1.5
        %v1881 = vmul.f32 %v857, 1.5
        %v1882 = vmul.f32 %v858, 1.5
        %v1883 = vmul.f32 %v859, 1.5
        %v1884 = vmul.f32 %v860, 1.5
        %v1885 = vmul.f32 %v861, 1.5
        %v1886 = vmul.f32 %v862, 1.5
        %v1887 = vmul.f32 %v863, 1.5
        %v1888 = vmul.f32 %v864, 1.5
        %v1889 = vmul.f32 %v865, 1.5
        %v1890 = vmul.f32 %v866, 1.5
        %v1891 = vmul.f32 %v867, 1.5
        %v1892 = vmul.f32 %v868, 1.5
        %v1893 = vmul.f32 %v869, 1.5
        %v1894 = vmul.f32 %v870, 1.5
        %v1895 = vmul.f32 %v871, 1.5
        %v1896 = vmul.f32 %v872, 1.5
        %v1897 = vmul.f32 %v873, 1.5
        %v1898 = vmul.f32 %v874, 1.5
        %v1899 = vmul.f32 %v875, 1.5
        %v1900 = vmul.f32 %v876, 1.5
        %v1901 = vmul.f32 %v877, 1.5
        %v1902 = vmul.f32 %v878, 1.5
        %v1903 = vmul.f32 %v879, 1.5
        %v1904 = vmul.f32 %v880, 1.5
        %v1905 = vmul.f32 %v881, 1.5
        %v1906 = vmul.f32 %v882, 1.5
        %v1907 = vmul.f32 %v883, 1.5
        %v1908 = vmul.f32 %v884, 1.5
        %v1909 = vmul.f32 %v885, 1.5
        %v1910 = vmul.f32 %v886, 1.5
        %v1911 = vmul.f32 %v887, 1.5
        %v1912 = vmul.f32 %v888, 1.5
        %v1913 = vmul.f32 %v889, 1.5
        %v1914 = vmul.f32 %v890, 1.5
        %v1915 = vmul.f32 %v891, 1.5
        %v1916 = vmul.f32 %v892, 1.5
        %v1917 = vmul.f32 %v893, 1.5
        %v1918 = vmul.f32 %v894, 1.5
        %v1919 = vmul.f32 %v895, 1.5
        %v1920 = vmul.f32 %v896, 1.5
        %v1921 = vmul.f32 %v897, 1.5
        %v1922 = vmul.f32 %v898, 1.5
        %v1923 = vmul.f32 %v899, 1.5
        %v1924 = vmul.f32 %v900, 1.5
        %v1925 = vmul.f32 %v901, 1.5
        %v1926 = vmul.f32 %v902, 1.5
        %v1927 = vmul.f32 %v903, 1.5
        %v1928 = vmul.f32 %v904, 1.5
        %v1929 = vmul.f32 %v905, 1.5
        %v1930 = vmul.f32 %v906, 1.5
        %v1931 = vmul.f32 %v907, 1.5
        %v1932 = vmul.f32 %v908, 1.5
        %v1933 = vmul.f32 %v909, 1.5
        %v1934 = vmul.f32 %v910, 1.5
        %v1935 = vmul.f32 %v911, 1.5
        %v1936 = vmul.f32 %v912, 1.5
        %v1937 = vmul.f32 %v913, 1.5
        %v1938 = vmul.f32 %v914, 1.5
        %v1939 = vmul.f32 %v915, 1.5
        %v1940 = vmul.f32 %v916, 1.5
        %v1941 = vmul.f32 %v917, 1.5
        %v1942 = vmul.f32 %v918, 1.5
        %v1943 = vmul.f32 %v919, 1.5
        %v1944 = vmul.f32 %v920, 1.5
        %v1945 = vmul.f32 %v921, 1.5
        %v1946 = vmul.f32 %v922, 1.5
        %v1947 = vmul.f32 %v923, 1.5
        %v1948 = vmul.f32 %v924, 1.5
        %v1949 = vmul.f32 %v925, 1.5
        %v1950 = vmul.f32 %v926, 1.5
        %v1951 = vmul.f32 %v927, 1.5
        %v1952 = vmul.f32 %v928, 1.5
        %v1953 = vmul.f32 %v929, 1.5
        %v1954 = vmul.f32 %v930, 1.5
        %v1955 = vmul.f32 %v931, 1.5
        %v1956 = vmul.f32 %v932, 1.5
        %v1957 = vmul.f32 %v933, 1.5
        %v1958 = vmul.f32 %v934, 1.5
        %v1959 = vmul.f32 %v935, 1.5
        %v1960 = vmul.f32 %v936, 1.5
        %v1961 = vmul.f32 %v937, 1.5
        %v1962 = vmul.f32 %v938, 1.5
        %v1963 = vmul.f32 %v939, 1.5
        %v1964 = vmul.f32 %v940, 1.5
        %v1965 = vmul.f32 %v941, 1.5
        %v1966 = vmul.f32 %v942, 1.5
        %v1967 = vmul.f32 %v943, 1.5
        %v1968 = vmul.f32 %v944, 1.5
        %v1969 = vmul.f32 %v945, 1.5
        %v1970 = vmul.f32 %v946, 1.5
        %v1971 = vmul.f32 %v947, 1.5
        %v1972 = vmul.f32 %v948, 1.5
        %v1973 = vmul.f32 %v949, 1.5
        %v1974 = vmul.f32 %v950, 1.5
        %v1975 = vmul.f32 %v951, 1.5
        %v1976 = vmul.f32 %v952, 1.5
        %v1977 = vmul.f32 %v953, 1.5
        %v1978 = vmul.f32 %v954, 1.5
        %v1979 = vmul.f32 %v955, 1.5
        %v1980 = vmul.f32 %v956, 1.5
        %v1981 = vmul.f32 %v957, 1.5
        %v1982 = vmul.f32 %v958, 1.5
        %v1983 = vmul.f32 %v959, 1.5
        %v1984 = vmul.f32 %v960, 1.5
        %v1985 = vmul.f32 %v961, 1.5
        %v1986 = vmul.f32 %v962, 1.5
        %v1987 = vmul.f32 %v963, 1.5
        %v1988 = vmul.f32 %v964, 1.5
        %v1989 = vmul.f32 %v965, 1.5
        %v1990 = vmul.f32 %v966, 1.5
        %v1991 = vmul.f32 %v967, 1.5
        %v1992 = vmul.f32 %v968, 1.5
        %v1993 = vmul.f32 %v969, 1.5
        %v1994 = vmul.f32 %v970, 1.5
        %v1995 = vmul.f32 %v971, 1.5
        %v1996 = vmul.f32 %v972, 1.5
        %v1997 = vmul.f32 %v973, 1.5
        %v1998 = vmul.f32 %v974, 1.5
        %v1999 = vmul.f32 %v975, 1.5
        %v2000 = vmul.f32 %v976, 1.5
        %v2001 = vmul.f32 %v977, 1.5
        %v2002 = vmul.f32 %v978, 1.5
        %v2003 = vmul.f32 %v979, 1.5
        %v2004 = vmul.f32 %v980, 1.5
        %v2005 = vmul.f32 %v981, 1.5
        %v2006 = vmul.f32 %v982, 1.5
        %v2007 = vmul.f32 %v983, 1.5
        %v2008 = vmul.f32 %v984, 1.5
        %v2009 = vmul.f32 %v985, 1.5
        %v2010 = vmul.f32 %v986, 1.5
        %v2011 = vmul.f32 %v987, 1.5
        %v2012 = vmul.f32 %v988, 1.5
        %v2013 = vmul.f32 %v989, 1.5
        %v2014 = vmul.f32 %v990, 1.5
        %v2015 = vmul.f32 %v991, 1.5
        %v2016 = vmul.f32 %v992, 1.5
        %v2017 = vmul.f32 %v993, 1.5
        %v2018 = vmul.f32 %v994, 1.5
        %v2019 = vmul.f32 %v995, 1.5
        %v2020 = vmul.f32 %v996, 1.5
        %v2021 = vmul.f32 %v997, 1.5
        %v2022 = vmul.f32 %v998, 1.5
        %v2023 = vmul.f32 %v999, 1.5
        %v2024 = vmul.f32 %v1000, 1.5
        %v2025 = vmul.f32 %v1001, 1.5
        %v2026 = vmul.f32 %v1002, 1.5
        %v2027 = vmul.f32 %v1003, 1.5
        %v2028 = vmul.f32 %v1004, 1.5
        %v2029 = vmul.f32 %v1005, 1.5
        %v2030 = vmul.f32 %v1006, 1.5
        %v2031 = vmul.f32 %v1007, 1.5
        %v2032 = vmul.f32 %v1008, 1.5
        %v2033 = vmul.f32 %v1009, 1.5
        %v2034 = vmul.f32 %v1010, 1.5
        %v2035 = vmul.f32 %v1011, 1.5
        %v2036 = vmul.f32 %v1012, 1.5
        %v2037 = vmul.f32 %v1013, 1.5
        %v2038 = vmul.f32 %v1014, 1.5
        %v2039 = vmul.f32 %v1015, 1.5
        %v2040 = vmul.f32 %v1016, 1.5
        %v2041 = vmul.f32 %v1017, 1.5
        %v2042 = vmul.f32 %v1018, 1.5
        %v2043 = vmul.f32 %v1019, 1.5
        %v2044 = vmul.f32 %v1020, 1.5
        %v2045 = vmul.f32 %v1021, 1.5
        %v2046 = vmul.f32 %v1022, 1.5
        %v2047 = vmul.f32 %v1023, 1.5
        %v2048 = vmul.f32 %v1024, 1.5
        %v2049 = vmul.f32 %v1025, 1.5
        %v2050 = vmul.f32 %v1026, 1.5
        %v2051 = vmul.f32 %v1027, 1.5
        %v2052 = vmul.f32 %v1028, 1.5
        %v2053 = vmul.f32 %v1029, 1.5
        %v2054 = vmul.f32 %v1030, 1.5
        %v2055 = vmul.f32 %v1031, 1.5
        %v2056 = vmul.f32 %v1032, 1.5
        %v2057 = vmul.f32 %v1033, 1.5
        %v2058 = vmul.f32 %v1034, 1.5
        %v2059 = vmul.f32 %v1035, 1.5
        %v2060 = vmul.f32 %v1036, 1.5
        %v2061 = vmul.f32 %v1037, 1.5
        %v2062 = vmul.f32 %v1038, 1.5
        %v2063 = vmul.f32 %v1039, 1.5
        %v2064 = vmul.f32 %v1040, 1.5
        %v2065 = vmul.f32 %v1041, 1.5
        %v2066 = vmul.f32 %v1042, 1.5
        %v2067 = vmul.f32 %v1043, 1.5
        %v2068 = vmul.f32 %v1044, 1.5
        %v2069 = vmul.f32 %v1045, 1.5
        %v2070 = vmul.f32 %v1046, 1.5
        %v2071 = vmul.f32 %v1047, 1.5
        %v2072 = vmul.f32 %v1048, 1.5
        %v2073 = vmul.f32 %v1049, 1.5
        %v2074 = vmul.f32 %v1050, 1.5
        %v2075 = vmul.f32 %v1051, 1.5
        %v2076 = vmul.f32 %v1052, 1.5
        %v2077 = vmul.f32 %v1053, 1.5
        %v2078 = vmul.f32 %v1054, 1.5
        %v2079 = vmul.f32 %v1055, 1.5
        %v2080 = vmul.f32 %v1056, 1.5
        %v2081 = vmul.f32 %v1057, 1.5
        %v2082 = vmul.f32 %v1058, 1.5
        %v2083 = vmul.f32 %v1059, 1.5
        %v2084 = vmul.f32 %v1060, 1.5
        %v2085 = vmul.f32 %v1061, 1.5
        %v2086 = vmul.f32 %v1062, 1.5
        %v2087 = vmul.f32 %v1063, 1.5
        %v2088 = vmul.f32 %v1064, 1.5
        %v2089 = vmul.f32 %v1065, 1.5
        %v2090 = vmul.f32 %v1066, 1.5
        %v2091 = vmul.f32 %v1067, 1.5
        %v2092 = vmul.f32 %v1068, 1.5
        %v2093 = vmul.f32 %v1069, 1.5
        %v2094 = vmul.f32 %v1070, 1.5
        %v2095 = vmul.f32 %v1071, 1.5
        %v2096 = vmul.f32 %v1072, 1.5
        %v2097 = vmul.f32 %v1073, 1.5
        %v2098 = vmul.f32 %v1074, 1.5
        %v2099 = vmul.f32 %v1075, 1.5
        %v2100 = vmul.f32 %v1076, 1.5
        %v2101 = vmul.f32 %v1077, 1.5
        %v2102 = vmul.f32 %v1078, 1.5
        %v2103 = vmul.f32 %v1079, 1.5
        %v2104 = vmul.f32 %v1080, 1.5
        %v2105 = vmul.f32 %v1081, 1.5
        %v2106 = vmul.f32 %v1082, 1.5
        %v2107 = vmul.f32 %v1083, 1.5
        %v2108 = vmul.f32 %v1084, 1.5
        %v2109 = vmul.f32 %v1085, 1.5
        %v2110 = vmul.f32 %v1086, 1.5
        %v2111 = vmul.f32 %v1087, 1.5
        %v2112 = vmul.f32 %v1088, 1.5
        %v2113 = vmul.f32 %v1089, 1.5
        %v2114 = vmul.f32 %v1090, 1.5
        %v2115 = vmul.f32 %v1091, 1.5
        %v2116 = vmul.f32 %v1092, 1.5
        %v2117 = vmul.f32 %v1093, 1.5
        %v2118 = vmul.f32 %v1094, 1.5
        %v2119 = vmul.f32 %v1095, 1.5
        %v2120 = vmul.f32 %v1096, 1.5
        %v2121 = vmul.f32 %v1097, 1.5
        %v2122 = vmul.f32 %v1098, 1.5
        %v2123 = vmul.f32 %v1099, 1.5
        %v2124 = vmul.f32 %v1100, 1.5
        %v2125 = vmul.f32 %v1101, 1.5
        %v2126 = vmul.f32 %v1102, 1.5
        %v2127 = vmul.f32 %v1103, 1.5
        %v2128 = vmul.f32 %v1104, 1.5
        %v2129 = vmul.f32 %v1105, 1.5
        %v2130 = vmul.f32 %v1106, 1.5
        %v2131 = vmul.f32 %v1107, 1.5
        %v2132 = vmul.f32 %v1108, 1.5
        %v2133 = vmul.f32 %v1109, 1.5
        %v2134 = vmul.f32 %v1110, 1.5
        %v2135 = vmul.f32 %v1111, 1.5
        %v2136 = vmul.f32 %v1112, 1.5
        %v2137 = vmul.f32 %v1113, 1.5
        %v2138 = vmul.f32 %v1114, 1.5
        %v2139 = vmul.f32 %v1115, 1.5
        %v2140 = vmul.f32 %v1116, 1.5
        %v2141 = vmul.f32 %v1117, 1.5
        %v2142 = vmul.f32 %v1118, 1.5
        %v2143 = vmul.f32 %v1119, 1.5
        %v2144 = vmul.f32 %v1120, 1.5
        %v2145 = vmul.f32 %v1121, 1.5
        %v2146 = vmul.f32 %v1122, 1.5
        %v2147 = vmul.f32 %v1123, 1.5
        %v2148 = vmul.f32 %v1124, 1.5
        %v2149 = vmul.f32 %v1125, 1.5
        %v2150 = vmul.f32 %v1126, 1.5
        %v2151 = vmul.f32 %v1127, 1.5
        %v2152 = vmul.f32 %v1128, 1.5
        %v2153 = vmul.f32 %v1129, 1.5
        %v2154 = vmul.f32 %v1130, 1.5
        %v2155 = vmul.f32 %v1131, 1.5
        %v2156 = vmul.f32 %v1132, 1.5
        %v2157 = vmul.f32 %v1133, 1.5
        %v2158 = vmul.f32 %v1134, 1.5
        %v2159 = vmul.f32 %v1135, 1.5
        %v2160 = vmul.f32 %v1136, 1.5
        %v2161 = vmul.f32 %v1137, 1.5
        %v2162 = vmul.f32 %v1138, 1.5
        %v2163 = vmul.f32 %v1139, 1.5
        %v2164 = vmul.f32 %v1140, 1.5
        %v2165 = vmul.f32 %v1141, 1.5
        %v2166 = vmul.f32 %v1142, 1.5
        %v2167 = vmul.f32 %v1143, 1.5
        %v2168 = vmul.f32 %v1144, 1.5
        %v2169 = vmul.f32 %v1145, 1.5
        %v2170 = vmul.f32 %v1146, 1.5
        %v2171 = vmul.f32 %v1147, 1.5
        %v2172 = vmul.f32 %v1148, 1.5
        %v2173 = vmul.f32 %v1149, 1.5
        %v2174 = vmul.f32 %v1150, 1.5
        %v2175 = vmul.f32 %v1151, 1.5
        %v2176 = vmul.f32 %v1152, 1.5
        %v2177 = vmul.f32 %v1153, 1.5
        %v2178 = vmul.f32 %v1154, 1.5
        %v2179 = vmul.f32 %v1155, 1.5
        %v2180 = vmul.f32 %v1156, 1.5
        %v2181 = vmul.f32 %v1157, 1.5
        %v2182 = vmul.f32 %v1158, 1.5
        %v2183 = vmul.f32 %v1159, 1.5
        %v2184 = vmul.f32 %v1160, 1.5
        %v2185 = vmul.f32 %v1161, 1.5
        %v2186 = vmul.f32 %v1162, 1.5
        %v2187 = vmul.f32 %v1163, 1.5
        %v2188 = vmax.f32 %v1164, 0.0
        %v2189 = vmax.f32 %v1165, 0.0
        %v2190 = vmax.f32 %v1166, 0.0
        %v2191 = vmax.f32 %v1167, 0.0
        %v2192 = vmax.f32 %v1168, 0.0
        %v2193 = vmax.f32 %v1169, 0.0
        %v2194 = vmax.f32 %v1170, 0.0
        %v2195 = vmax.f32 %v1171, 0.0
        %v2196 = vmax.f32 %v1172, 0.0
        %v2197 = vmax.f32 %v1173, 0.0
        %v2198 = vmax.f32 %v1174, 0.0
        %v2199 = vmax.f32 %v1175, 0.0
        %v2200 = vmax.f32 %v1176, 0.0
        %v2201 = vmax.f32 %v1177, 0.0
        %v2202 = vmax.f32 %v1178, 0.0
        %v2203 = vmax.f32 %v1179, 0.0
        %v2204 = vmax.f32 %v1180, 0.0
        %v2205 = vmax.f32 %v1181, 0.0
        %v2206 = vmax.f32 %v1182, 0.0
        %v2207 = vmax.f32 %v1183, 0.0
        %v2208 = vmax.f32 %v1184, 0.0
        %v2209 = vmax.f32 %v1185, 0.0
        %v2210 = vmax.f32 %v1186, 0.0
        %v2211 = vmax.f32 %v1187, 0.0
        %v2212 = vmax.f32 %v1188, 0.0
        %v2213 = vmax.f32 %v1189, 0.0
        %v2214 = vmax.f32 %v1190, 0.0
        %v2215 = vmax.f32 %v1191, 0.0
        %v2216 = vmax.f32 %v1192, 0.0
        %v2217 = vmax.f32 %v1193, 0.0
        %v2218 = vmax.f32 %v1194, 0.0
        %v2219 = vmax.f32 %v1195, 0.0
        %v2220 = vmax.f32 %v1196, 0.0
        %v2221 = vmax.f32 %v1197, 0.0
        %v2222 = vmax.f32 %v1198, 0.0
        %v2223 = vmax.f32 %v1199, 0.0
        %v2224 = vmax.f32 %v1200, 0.0
        %v2225 = vmax.f32 %v1201, 0.0
        %v2226 = vmax.f32 %v1202, 0.0
        %v2227 = vmax.f32 %v1203, 0.0
        %v2228 = vmax.f32 %v1204, 0.0
        %v2229 = vmax.f32 %v1205, 0.0
        %v2230 = vmax.f32 %v1206, 0.0
        %v2231 = vmax.f32 %v1207, 0.0
        %v2232 = vmax.f32 %v1208, 0.0
        %v2233 = vmax.f32 %v1209, 0.0
        %v2234 = vmax.f32 %v1210, 0.0
        %v2235 = vmax.f32 %v1211, 0.0
        %v2236 = vmax.f32 %v1212, 0.0
        %v2237 = vmax.f32 %v1213, 0.0
        %v2238 = vmax.f32 %v1214, 0.0
        %v2239 = vmax.f32 %v1215, 0.0
        %v2240 = vmax.f32 %v1216, 0.0
        %v2241 = vmax.f32 %v1217, 0.0
        %v2242 = vmax.f32 %v1218, 0.0
        %v2243 = vmax.f32 %v1219, 0.0
        %v2244 = vmax.f32 %v1220, 0.0
        %v2245 = vmax.f32 %v1221, 0.0
        %v2246 = vmax.f32 %v1222, 0.0
        %v2247 = vmax.f32 %v1223, 0.0
        %v2248 = vmax.f32 %v1224, 0.0
        %v2249 = vmax.f32 %v1225, 0.0
        %v2250 = vmax.f32 %v1226, 0.0
        %v2251 = vmax.f32 %v1227, 0.0
        %v2252 = vmax.f32 %v1228, 0.0
        %v2253 = vmax.f32 %v1229, 0.0
        %v2254 = vmax.f32 %v1230, 0.0
        %v2255 = vmax.f32 %v1231, 0.0
        %v2256 = vmax.f32 %v1232, 0.0
        %v2257 = vmax.f32 %v1233, 0.0
        %v2258 = vmax.f32 %v1234, 0.0
        %v2259 = vmax.f32 %v1235, 0.0
        %v2260 = vmax.f32 %v1236, 0.0
        %v2261 = vmax.f32 %v1237, 0.0
        %v2262 = vmax.f32 %v1238, 0.0
        %v2263 = vmax.f32 %v1239, 0.0
        %v2264 = vmax.f32 %v1240, 0.0
        %v2265 = vmax.f32 %v1241, 0.0
        %v2266 = vmax.f32 %v1242, 0.0
        %v2267 = vmax.f32 %v1243, 0.0
        %v2268 = vmax.f32 %v1244, 0.0
        %v2269 = vmax.f32 %v1245, 0.0
        %v2270 = vmax.f32 %v1246, 0.0
        %v2271 = vmax.f32 %v1247, 0.0
        %v2272 = vmax.f32 %v1248, 0.0
        %v2273 = vmax.f32 %v1249, 0.0
        %v2274 = vmax.f32 %v1250, 0.0
        %v2275 = vmax.f32 %v1251, 0.0
        %v2276 = vmax.f32 %v1252, 0.0
        %v2277 = vmax.f32 %v1253, 0.0
        %v2278 = vmax.f32 %v1254, 0.0
        %v2279 = vmax.f32 %v1255, 0.0
        %v2280 = vmax.f32 %v1256, 0.0
        %v2281 = vmax.f32 %v1257, 0.0
        %v2282 = vmax.f32 %v1258, 0.0
        %v2283 = vmax.f32 %v1259, 0.0
        %v2284 = vmax.f32 %v1260, 0.0
        %v2285 = vmax.f32 %v1261, 0.0
        %v2286 = vmax.f32 %v1262, 0.0
        %v2287 = vmax.f32 %v1263, 0.0
        %v2288 = vmax.f32 %v1264, 0.0
        %v2289 = vmax.f32 %v1265, 0.0
        %v2290 = vmax.f32 %v1266, 0.0
        %v2291 = vmax.f32 %v1267, 0.0
        %v2292 = vmax.f32 %v1268, 0.0
        %v2293 = vmax.f32 %v1269, 0.0
        %v2294 = vmax.f32 %v1270, 0.0
        %v2295 = vmax.f32 %v1271, 0.0
        %v2296 = vmax.f32 %v1272, 0.0
        %v2297 = vmax.f32 %v1273, 0.0
        %v2298 = vmax.f32 %v1274, 0.0
        %v2299 = vmax.f32 %v1275, 0.0
        %v2300 = vmax.f32 %v1276, 0.0
        %v2301 = vmax.f32 %v1277, 0.0
        %v2302 = vmax.f32 %v1278, 0.0
        %v2303 = vmax.f32 %v1279, 0.0
        %v2304 = vmax.f32 %v1280, 0.0
        %v2305 = vmax.f32 %v1281, 0.0
        %v2306 = vmax.f32 %v1282, 0.0
        %v2307 = vmax.f32 %v1283, 0.0
        %v2308 = vmax.f32 %v1284, 0.0
        %v2309 = vmax.f32 %v1285, 0.0
        %v2310 = vmax.f32 %v1286, 0.0
        %v2311 = vmax.f32 %v1287, 0.0
        %v2312 = vmax.f32 %v1288, 0.0
        %v2313 = vmax.f32 %v1289, 0.0
        %v2314 = vmax.f32 %v1290, 0.0
        %v2315 = vmax.f32 %v1291, 0.0
        %v2316 = vmax.f32 %v1292, 0.0
        %v2317 = vmax.f32 %v1293, 0.0
        %v2318 = vmax.f32 %v1294, 0.0
        %v2319 = vmax.f32 %v1295, 0.0
        %v2320 = vmax.f32 %v1296, 0.0
        %v2321 = vmax.f32 %v1297, 0.0
        %v2322 = vmax.f32 %v1298, 0.0
        %v2323 = vmax.f32 %v1299, 0.0
        %v2324 = vmax.f32 %v1300, 0.0
        %v2325 = vmax.f32 %v1301, 0.0
        %v2326 = vmax.f32 %v1302, 0.0
        %v2327 = vmax.f32 %v1303, 0.0
        %v2328 = vmax.f32 %v1304, 0.0
        %v2329 = vmax.f32 %v1305, 0.0
        %v2330 = vmax.f32 %v1306, 0.0
        %v2331 = vmax.f32 %v1307, 0.0
        %v2332 = vmax.f32 %v1308, 0.0
        %v2333 = vmax.f32 %v1309, 0.0
        %v2334 = vmax.f32 %v1310, 0.0
        %v2335 = vmax.f32 %v1311, 0.0
        %v2336 = vmax.f32 %v1312, 0.0
        %v2337 = vmax.f32 %v1313, 0.0
        %v2338 = vmax.f32 %v1314, 0.0
        %v2339 = vmax.f32 %v1315, 0.0
        %v2340 = vmax.f32 %v1316, 0.0
        %v2341 = vmax.f32 %v1317, 0.0
        %v2342 = vmax.f32 %v1318, 0.0
        %v2343 = vmax.f32 %v1319, 0.0
        %v2344 = vmax.f32 %v1320, 0.0
        %v2345 = vmax.f32 %v1321, 0.0
        %v2346 = vmax.f32 %v1322, 0.0
        %v2347 = vmax.f32 %v1323, 0.0
        %v2348 = vmax.f32 %v1324, 0.0
        %v2349 = vmax.f32 %v1325, 0.0
        %v2350 = vmax.f32 %v1326, 0.0
        %v2351 = vmax.f32 %v1327, 0.0
        %v2352 = vmax.f32 %v1328, 0.0
        %v2353 = vmax.f32 %v1329, 0.0
        %v2354 = vmax.f32 %v1330, 0.0
        %v2355 = vmax.f32 %v1331, 0.0
        %v2356 = vmax.f32 %v1332, 0.0
        %v2357 = vmax.f32 %v1333, 0.0
        %v2358 = vmax.f32 %v1334, 0.0
        %v2359 = vmax.f32 %v1335, 0.0
        %v2360 = vmax.f32 %v1336, 0.0
        %v2361 = vmax.f32 %v1337, 0.0
        %v2362 = vmax.f32 %v1338, 0.0
        %v2363 = vmax.f32 %v1339, 0.0
        %v2364 = vmax.f32 %v1340, 0.0
        %v2365 = vmax.f32 %v1341, 0.0
        %v2366 = vmax.f32 %v1342, 0.0
        %v2367 = vmax.f32 %v1343, 0.0
        %v2368 = vmax.f32 %v1344, 0.0
        %v2369 = vmax.f32 %v1345, 0.0
        %v2370 = vmax.f32 %v1346, 0.0
        %v2371 = vmax.f32 %v1347, 0.0
        %v2372 = vmax.f32 %v1348, 0.0
        %v2373 = vmax.f32 %v1349, 0.0
        %v2374 = vmax.f32 %v1350, 0.0
        %v2375 = vmax.f32 %v1351, 0.0
        %v2376 = vmax.f32 %v1352, 0.0
        %v2377 = vmax.f32 %v1353, 0.0
        %v2378 = vmax.f32 %v1354, 0.0
        %v2379 = vmax.f32 %v1355, 0.0
        %v2380 = vmax.f32 %v1356, 0.0
        %v2381 = vmax.f32 %v1357, 0.0
        %v2382 = vmax.f32 %v1358, 0.0
        %v2383 = vmax.f32 %v1359, 0.0
        %v2384 = vmax.f32 %v1360, 0.0
        %v2385 = vmax.f32 %v1361, 0.0
        %v2386 = vmax.f32 %v1362, 0.0
        %v2387 = vmax.f32 %v1363, 0.0
        %v2388 = vmax.f32 %v1364, 0.0
        %v2389 = vmax.f32 %v1365, 0.0
        %v2390 = vmax.f32 %v1366, 0.0
        %v2391 = vmax.f32 %v1367, 0.0
        %v2392 = vmax.f32 %v1368, 0.0
        %v2393 = vmax.f32 %v1369, 0.0
        %v2394 = vmax.f32 %v1370, 0.0
        %v2395 = vmax.f32 %v1371, 0.0
        %v2396 = vmax.f32 %v1372, 0.0
        %v2397 = vmax.f32 %v1373, 0.0
        %v2398 = vmax.f32 %v1374, 0.0
        %v2399 = vmax.f32 %v1375, 0.0
        %v2400 = vmax.f32 %v1376, 0.0
        %v2401 = vmax.f32 %v1377, 0.0
        %v2402 = vmax.f32 %v1378, 0.0
        %v2403 = vmax.f32 %v1379, 0.0
        %v2404 = vmax.f32 %v1380, 0.0
        %v2405 = vmax.f32 %v1381, 0.0
        %v2406 = vmax.f32 %v1382, 0.0
        %v2407 = vmax.f32 %v1383, 0.0
        %v2408 = vmax.f32 %v1384, 0.0
        %v2409 = vmax.f32 %v1385, 0.0
        %v2410 = vmax.f32 %v1386, 0.0
        %v2411 = vmax.f32 %v1387, 0.0
        %v2412 = vmax.f32 %v1388, 0.0
        %v2413 = vmax.f32 %v1389, 0.0
        %v2414 = vmax.f32 %v1390, 0.0
        %v2415 = vmax.f32 %v1391, 0.0
        %v2416 = vmax.f32 %v1392, 0.0
        %v2417 = vmax.f32 %v1393, 0.0
        %v2418 = vmax.f32 %v1394, 0.0
        %v2419 = vmax.f32 %v1395, 0.0
        %v2420 = vmax.f32 %v1396, 0.0
        %v2421 = vmax.f32 %v1397, 0.0
        %v2422 = vmax.f32 %v1398, 0.0
        %v2423 = vmax.f32 %v1399, 0.0
        %v2424 = vmax.f32 %v1400, 0.0
        %v2425 = vmax.f32 %v1401, 0.0
        %v2426 = vmax.f32 %v1402, 0.0
        %v2427 = vmax.f32 %v1403, 0.0
        %v2428 = vmax.f32 %v1404, 0.0
        %v2429 = vmax.f32 %v1405, 0.0
        %v2430 = vmax.f32 %v1406, 0.0
        %v2431 = vmax.f32 %v1407, 0.0
        %v2432 = vmax.f32 %v1408, 0.0
        %v2433 = vmax.f32 %v1409, 0.0
        %v2434 = vmax.f32 %v1410, 0.0
        %v2435 = vmax.f32 %v1411, 0.0
        %v2436 = vmax.f32 %v1412, 0.0
        %v2437 = vmax.f32 %v1413, 0.0
        %v2438 = vmax.f32 %v1414, 0.0
        %v2439 = vmax.f32 %v1415, 0.0
        %v2440 = vmax.f32 %v1416, 0.0
        %v2441 = vmax.f32 %v1417, 0.0
        %v2442 = vmax.f32 %v1418, 0.0
        %v2443 = vmax.f32 %v1419, 0.0
        %v2444 = vmax.f32 %v1420, 0.0
        %v2445 = vmax.f32 %v1421, 0.0
        %v2446 = vmax.f32 %v1422, 0.0
        %v2447 = vmax.f32 %v1423, 0.0
        %v2448 = vmax.f32 %v1424, 0.0
        %v2449 = vmax.f32 %v1425, 0.0
        %v2450 = vmax.f32 %v1426, 0.0
        %v2451 = vmax.f32 %v1427, 0.0
        %v2452 = vmax.f32 %v1428, 0.0
        %v2453 = vmax.f32 %v1429, 0.0
        %v2454 = vmax.f32 %v1430, 0.0
        %v2455 = vmax.f32 %v1431, 0.0
        %v2456 = vmax.f32 %v1432, 0.0
        %v2457 = vmax.f32 %v1433, 0.0
        %v2458 = vmax.f32 %v1434, 0.0
        %v2459 = vmax.f32 %v1435, 0.0
        %v2460 = vmax.f32 %v1436, 0.0
        %v2461 = vmax.f32 %v1437, 0.0
        %v2462 = vmax.f32 %v1438, 0.0
        %v2463 = vmax.f32 %v1439, 0.0
        %v2464 = vmax.f32 %v1440, 0.0
        %v2465 = vmax.f32 %v1441, 0.0
        %v2466 = vmax.f32 %v1442, 0.0
        %v2467 = vmax.f32 %v1443, 0.0
        %v2468 = vmax.f32 %v1444, 0.0
        %v2469 = vmax.f32 %v1445, 0.0
        %v2470 = vmax.f32 %v1446, 0.0
        %v2471 = vmax.f32 %v1447, 0.0
        %v2472 = vmax.f32 %v1448, 0.0
        %v2473 = vmax.f32 %v1449, 0.0
        %v2474 = vmax.f32 %v1450, 0.0
        %v2475 = vmax.f32 %v1451, 0.0
        %v2476 = vmax.f32 %v1452, 0.0
        %v2477 = vmax.f32 %v1453, 0.0
        %v2478 = vmax.f32 %v1454, 0.0
        %v2479 = vmax.f32 %v1455, 0.0
        %v2480 = vmax.f32 %v1456, 0.0
        %v2481 = vmax.f32 %v1457, 0.0
        %v2482 = vmax.f32 %v1458, 0.0
        %v2483 = vmax.f32 %v1459, 0.0
        %v2484 = vmax.f32 %v1460, 0.0
        %v2485 = vmax.f32 %v1461, 0.0
        %v2486 = vmax.f32 %v1462, 0.0
        %v2487 = vmax.f32 %v1463, 0.0
        %v2488 = vmax.f32 %v1464, 0.0
        %v2489 = vmax.f32 %v1465, 0.0
        %v2490 = vmax.f32 %v1466, 0.0
        %v2491 = vmax.f32 %v1467, 0.0
        %v2492 = vmax.f32 %v1468, 0.0
        %v2493 = vmax.f32 %v1469, 0.0
        %v2494 = vmax.f32 %v1470, 0.0
        %v2495 = vmax.f32 %v1471, 0.0
        %v2496 = vmax.f32 %v1472, 0.0
        %v2497 = vmax.f32 %v1473, 0.0
        %v2498 = vmax.f32 %v1474, 0.0
        %v2499 = vmax.f32 %v1475, 0.0
        %v2500 = vmax.f32 %v1476, 0.0
        %v2501 = vmax.f32 %v1477, 0.0
        %v2502 = vmax.f32 %v1478, 0.0
        %v2503 = vmax.f32 %v1479, 0.0
        %v2504 = vmax.f32 %v1480, 0.0
        %v2505 = vmax.f32 %v1481, 0.0
        %v2506 = vmax.f32 %v1482, 0.0
        %v2507 = vmax.f32 %v1483, 0.0
        %v2508 = vmax.f32 %v1484, 0.0
        %v2509 = vmax.f32 %v1485, 0.0
        %v2510 = vmax.f32 %v1486, 0.0
        %v2511 = vmax.f32 %v1487, 0.0
        %v2512 = vmax.f32 %v1488, 0.0
        %v2513 = vmax.f32 %v1489, 0.0
        %v2514 = vmax.f32 %v1490, 0.0
        %v2515 = vmax.f32 %v1491, 0.0
        %v2516 = vmax.f32 %v1492, 0.0
        %v2517 = vmax.f32 %v1493, 0.0
        %v2518 = vmax.f32 %v1494, 0.0
        %v2519 = vmax.f32 %v1495, 0.0
        %v2520 = vmax.f32 %v1496, 0.0
        %v2521 = vmax.f32 %v1497, 0.0
        %v2522 = vmax.f32 %v1498, 0.0
        %v2523 = vmax.f32 %v1499, 0.0
        %v2524 = vmax.f32 %v1500, 0.0
        %v2525 = vmax.f32 %v1501, 0.0
        %v2526 = vmax.f32 %v1502, 0.0
        %v2527 = vmax.f32 %v1503, 0.0
        %v2528 = vmax.f32 %v1504, 0.0
        %v2529 = vmax.f32 %v1505, 0.0
        %v2530 = vmax.f32 %v1506, 0.0
        %v2531 = vmax.f32 %v1507, 0.0
        %v2532 = vmax.f32 %v1508, 0.0
        %v2533 = vmax.f32 %v1509, 0.0
        %v2534 = vmax.f32 %v1510, 0.0
        %v2535 = vmax.f32 %v1511, 0.0
        %v2536 = vmax.f32 %v1512, 0.0
        %v2537 = vmax.f32 %v1513, 0.0
        %v2538 = vmax.f32 %v1514, 0.0
        %v2539 = vmax.f32 %v1515, 0.0
        %v2540 = vmax.f32 %v1516, 0.0
        %v2541 = vmax.f32 %v1517, 0.0
        %v2542 = vmax.f32 %v1518, 0.0
        %v2543 = vmax.f32 %v1519, 0.0
        %v2544 = vmax.f32 %v1520, 0.0
        %v2545 = vmax.f32 %v1521, 0.0
        %v2546 = vmax.f32 %v1522, 0.0
        %v2547 = vmax.f32 %v1523, 0.0
        %v2548 = vmax.f32 %v1524, 0.0
        %v2549 = vmax.f32 %v1525, 0.0
        %v2550 = vmax.f32 %v1526, 0.0
        %v2551 = vmax.f32 %v1527, 0.0
        %v2552 = vmax.f32 %v1528, 0.0
        %v2553 = vmax.f32 %v1529, 0.0
        %v2554 = vmax.f32 %v1530, 0.0
        %v2555 = vmax.f32 %v1531, 0.0
        %v2556 = vmax.f32 %v1532, 0.0
        %v2557 = vmax.f32 %v1533, 0.0
        %v2558 = vmax.f32 %v1534, 0.0
        %v2559 = vmax.f32 %v1535, 0.0
        %v2560 = vmax.f32 %v1536, 0.0
        %v2561 = vmax.f32 %v1537, 0.0
        %v2562 = vmax.f32 %v1538, 0.0
        %v2563 = vmax.f32 %v1539, 0.0
        %v2564 = vmax.f32 %v1540, 0.0
        %v2565 = vmax.f32 %v1541, 0.0
        %v2566 = vmax.f32 %v1542, 0.0
        %v2567 = vmax.f32 %v1543, 0.0
        %v2568 = vmax.f32 %v1544, 0.0
        %v2569 = vmax.f32 %v1545, 0.0
        %v2570 = vmax.f32 %v1546, 0.0
        %v2571 = vmax.f32 %v1547, 0.0
        %v2572 = vmax.f32 %v1548, 0.0
        %v2573 = vmax.f32 %v1549, 0.0
        %v2574 = vmax.f32 %v1550, 0.0
        %v2575 = vmax.f32 %v1551, 0.0
        %v2576 = vmax.f32 %v1552, 0.0
        %v2577 = vmax.f32 %v1553, 0.0
        %v2578 = vmax.f32 %v1554, 0.0
        %v2579 = vmax.f32 %v1555, 0.0
        %v2580 = vmax.f32 %v1556, 0.0
        %v2581 = vmax.f32 %v1557, 0.0
        %v2582 = vmax.f32 %v1558, 0.0
        %v2583 = vmax.f32 %v1559, 0.0
        %v2584 = vmax.f32 %v1560, 0.0
        %v2585 = vmax.f32 %v1561, 0.0
        %v2586 = vmax.f32 %v1562, 0.0
        %v2587 = vmax.f32 %v1563, 0.0
        %v2588 = vmax.f32 %v1564, 0.0
        %v2589 = vmax.f32 %v1565, 0.0
        %v2590 = vmax.f32 %v1566, 0.0
        %v2591 = vmax.f32 %v1567, 0.0
        %v2592 = vmax.f32 %v1568, 0.0
        %v2593 = vmax.f32 %v1569, 0.0
        %v2594 = vmax.f32 %v1570, 0.0
        %v2595 = vmax.f32 %v1571, 0.0
        %v2596 = vmax.f32 %v1572, 0.0
        %v2597 = vmax.f32 %v1573, 0.0
        %v2598 = vmax.f32 %v1574, 0.0
        %v2599 = vmax.f32 %v1575, 0.0
        %v2600 = vmax.f32 %v1576, 0.0
        %v2601 = vmax.f32 %v1577, 0.0
        %v2602 = vmax.f32 %v1578, 0.0
        %v2603 = vmax.f32 %v1579, 0.0
        %v2604 = vmax.f32 %v1580, 0.0
        %v2605 = vmax.f32 %v1581, 0.0
        %v2606 = vmax.f32 %v1582, 0.0
        %v2607 = vmax.f32 %v1583, 0.0
        %v2608 = vmax.f32 %v1584, 0.0
        %v2609 = vmax.f32 %v1585, 0.0
        %v2610 = vmax.f32 %v1586, 0.0
        %v2611 = vmax.f32 %v1587, 0.0
        %v2612 = vmax.f32 %v1588, 0.0
        %v2613 = vmax.f32 %v1589, 0.0
        %v2614 = vmax.f32 %v1590, 0.0
        %v2615 = vmax.f32 %v1591, 0.0
        %v2616 = vmax.f32 %v1592, 0.0
        %v2617 = vmax.f32 %v1593, 0.0
        %v2618 = vmax.f32 %v1594, 0.0
        %v2619 = vmax.f32 %v1595, 0.0
        %v2620 = vmax.f32 %v1596, 0.0
        %v2621 = vmax.f32 %v1597, 0.0
        %v2622 = vmax.f32 %v1598, 0.0
        %v2623 = vmax.f32 %v1599, 0.0
        %v2624 = vmax.f32 %v1600, 0.0
        %v2625 = vmax.f32 %v1601, 0.0
        %v2626 = vmax.f32 %v1602, 0.0
        %v2627 = vmax.f32 %v1603, 0.0
        %v2628 = vmax.f32 %v1604, 0.0
        %v2629 = vmax.f32 %v1605, 0.0
        %v2630 = vmax.f32 %v1606, 0.0
        %v2631 = vmax.f32 %v1607, 0.0
        %v2632 = vmax.f32 %v1608, 0.0
        %v2633 = vmax.f32 %v1609, 0.0
        %v2634 = vmax.f32 %v1610, 0.0
        %v2635 = vmax.f32 %v1611, 0.0
        %v2636 = vmax.f32 %v1612, 0.0
        %v2637 = vmax.f32 %v1613, 0.0
        %v2638 = vmax.f32 %v1614, 0.0
        %v2639 = vmax.f32 %v1615, 0.0
        %v2640 = vmax.f32 %v1616, 0.0
        %v2641 = vmax.f32 %v1617, 0.0
        %v2642 = vmax.f32 %v1618, 0.0
        %v2643 = vmax.f32 %v1619, 0.0
        %v2644 = vmax.f32 %v1620, 0.0
        %v2645 = vmax.f32 %v1621, 0.0
        %v2646 = vmax.f32 %v1622, 0.0
        %v2647 = vmax.f32 %v1623, 0.0
        %v2648 = vmax.f32 %v1624, 0.0
        %v2649 = vmax.f32 %v1625, 0.0
        %v2650 = vmax.f32 %v1626, 0.0
        %v2651 = vmax.f32 %v1627, 0.0
        %v2652 = vmax.f32 %v1628, 0.0
        %v2653 = vmax.f32 %v1629, 0.0
        %v2654 = vmax.f32 %v1630, 0.0
        %v2655 = vmax.f32 %v1631, 0.0
        %v2656 = vmax.f32 %v1632, 0.0
        %v2657 = vmax.f32 %v1633, 0.0
        %v2658 = vmax.f32 %v1634, 0.0
        %v2659 = vmax.f32 %v1635, 0.0
        %v2660 = vmax.f32 %v1636, 0.0
        %v2661 = vmax.f32 %v1637, 0.0
        %v2662 = vmax.f32 %v1638, 0.0
        %v2663 = vmax.f32 %v1639, 0.0
        %v2664 = vmax.f32 %v1640, 0.0
        %v2665 = vmax.f32 %v1641, 0.0
        %v2666 = vmax.f32 %v1642, 0.0
        %v2667 = vmax.f32 %v1643, 0.0
        %v2668 = vmax.f32 %v1644, 0.0
        %v2669 = vmax.f32 %v1645, 0.0
        %v2670 = vmax.f32 %v1646, 0.0
        %v2671 = vmax.f32 %v1647, 0.0
        %v2672 = vmax.f32 %v1648, 0.0
        %v2673 = vmax.f32 %v1649, 0.0
        %v2674 = vmax.f32 %v1650, 0.0
        %v2675 = vmax.f32 %v1651, 0.0
        %v2676 = vmax.f32 %v1652, 0.0
        %v2677 = vmax.f32 %v1653, 0.0
        %v2678 = vmax.f32 %v1654, 0.0
        %v2679 = vmax.f32 %v1655, 0.0
        %v2680 = vmax.f32 %v1656, 0.0
        %v2681 = vmax.f32 %v1657, 0.0
        %v2682 = vmax.f32 %v1658, 0.0
        %v2683 = vmax.f32 %v1659, 0.0
        %v2684 = vmax.f32 %v1660, 0.0
        %v2685 = vmax.f32 %v1661, 0.0
        %v2686 = vmax.f32 %v1662, 0.0
        %v2687 = vmax.f32 %v1663, 0.0
        %v2688 = vmax.f32 %v1664, 0.0
        %v2689 = vmax.f32 %v1665, 0.0
        %v2690 = vmax.f32 %v1666, 0.0
        %v2691 = vmax.f32 %v1667, 0.0
        %v2692 = vmax.f32 %v1668, 0.0
        %v2693 = vmax.f32 %v1669, 0.0
        %v2694 = vmax.f32 %v1670, 0.0
        %v2695 = vmax.f32 %v1671, 0.0
        %v2696 = vmax.f32 %v1672, 0.0
        %v2697 = vmax.f32 %v1673, 0.0
        %v2698 = vmax.f32 %v1674, 0.0
        %v2699 = vmax.f32 %v1675, 0.0
        %v2700 = vmax.f32 %v1676, 0.0
        %v2701 = vmax.f32 %v1677, 0.0
        %v2702 = vmax.f32 %v1678, 0.0
        %v2703 = vmax.f32 %v1679, 0.0
        %v2704 = vmax.f32 %v1680, 0.0
        %v2705 = vmax.f32 %v1681, 0.0
        %v2706 = vmax.f32 %v1682, 0.0
        %v2707 = vmax.f32 %v1683, 0.0
        %v2708 = vmax.f32 %v1684, 0.0
        %v2709 = vmax.f32 %v1685, 0.0
        %v2710 = vmax.f32 %v1686, 0.0
        %v2711 = vmax.f32 %v1687, 0.0
        %v2712 = vmax.f32 %v1688, 0.0
        %v2713 = vmax.f32 %v1689, 0.0
        %v2714 = vmax.f32 %v1690, 0.0
        %v2715 = vmax.f32 %v1691, 0.0
        %v2716 = vmax.f32 %v1692, 0.0
        %v2717 = vmax.f32 %v1693, 0.0
        %v2718 = vmax.f32 %v1694, 0.0
        %v2719 = vmax.f32 %v1695, 0.0
        %v2720 = vmax.f32 %v1696, 0.0
        %v2721 = vmax.f32 %v1697, 0.0
        %v2722 = vmax.f32 %v1698, 0.0
        %v2723 = vmax.f32 %v1699, 0.0
        %v2724 = vmax.f32 %v1700, 0.0
        %v2725 = vmax.f32 %v1701, 0.0
        %v2726 = vmax.f32 %v1702, 0.0
        %v2727 = vmax.f32 %v1703, 0.0
        %v2728 = vmax.f32 %v1704, 0.0
        %v2729 = vmax.f32 %v1705, 0.0
        %v2730 = vmax.f32 %v1706, 0.0
        %v2731 = vmax.f32 %v1707, 0.0
        %v2732 = vmax.f32 %v1708, 0.0
        %v2733 = vmax.f32 %v1709, 0.0
        %v2734 = vmax.f32 %v1710, 0.0
        %v2735 = vmax.f32 %v1711, 0.0
        %v2736 = vmax.f32 %v1712, 0.0
        %v2737 = vmax.f32 %v1713, 0.0
        %v2738 = vmax.f32 %v1714, 0.0
        %v2739 = vmax.f32 %v1715, 0.0
        %v2740 = vmax.f32 %v1716, 0.0
        %v2741 = vmax.f32 %v1717, 0.0
        %v2742 = vmax.f32 %v1718, 0.0
        %v2743 = vmax.f32 %v1719, 0.0
        %v2744 = vmax.f32 %v1720, 0.0
        %v2745 = vmax.f32 %v1721, 0.0
        %v2746 = vmax.f32 %v1722, 0.0
        %v2747 = vmax.f32 %v1723, 0.0
        %v2748 = vmax.f32 %v1724, 0.0
        %v2749 = vmax.f32 %v1725, 0.0
        %v2750 = vmax.f32 %v1726, 0.0
        %v2751 = vmax.f32 %v1727, 0.0
        %v2752 = vmax.f32 %v1728, 0.0
        %v2753 = vmax.f32 %v1729, 0.0
        %v2754 = vmax.f32 %v1730, 0.0
        %v2755 = vmax.f32 %v1731, 0.0
        %v2756 = vmax.f32 %v1732, 0.0
        %v2757 = vmax.f32 %v1733, 0.0
        %v2758 = vmax.f32 %v1734, 0.0
        %v2759 = vmax.f32 %v1735, 0.0
        %v2760 = vmax.f32 %v1736, 0.0
        %v2761 = vmax.f32 %v1737, 0.0
        %v2762 = vmax.f32 %v1738, 0.0
        %v2763 = vmax.f32 %v1739, 0.0
        %v2764 = vmax.f32 %v1740, 0.0
        %v2765 = vmax.f32 %v1741, 0.0
        %v2766 = vmax.f32 %v1742, 0.0
        %v2767 = vmax.f32 %v1743, 0.0
        %v2768 = vmax.f32 %v1744, 0.0
        %v2769 = vmax.f32 %v1745, 0.0
        %v2770 = vmax.f32 %v1746, 0.0
        %v2771 = vmax.f32 %v1747, 0.0
        %v2772 = vmax.f32 %v1748, 0.0
        %v2773 = vmax.f32 %v1749, 0.0
        %v2774 = vmax.f32 %v1750, 0.0
        %v2775 = vmax.f32 %v1751, 0.0
        %v2776 = vmax.f32 %v1752, 0.0
        %v2777 = vmax.f32 %v1753, 0.0
        %v2778 = vmax.f32 %v1754, 0.0
        %v2779 = vmax.f32 %v1755, 0.0
        %v2780 = vmax.f32 %v1756, 0.0
        %v2781 = vmax.f32 %v1757, 0.0
        %v2782 = vmax.f32 %v1758, 0.0
        %v2783 = vmax.f32 %v1759, 0.0
        %v2784 = vmax.f32 %v1760, 0.0
        %v2785 = vmax.f32 %v1761, 0.0
        %v2786 = vmax.f32 %v1762, 0.0
        %v2787 = vmax.f32 %v1763, 0.0
        %v2788 = vmax.f32 %v1764, 0.0
        %v2789 = vmax.f32 %v1765, 0.0
        %v2790 = vmax.f32 %v1766, 0.0
        %v2791 = vmax.f32 %v1767, 0.0
        %v2792 = vmax.f32 %v1768, 0.0
        %v2793 = vmax.f32 %v1769, 0.0
        %v2794 = vmax.f32 %v1770, 0.0
        %v2795 = vmax.f32 %v1771, 0.0
        %v2796 = vmax.f32 %v1772, 0.0
        %v2797 = vmax.f32 %v1773, 0.0
        %v2798 = vmax.f32 %v1774, 0.0
        %v2799 = vmax.f32 %v1775, 0.0
        %v2800 = vmax.f32 %v1776, 0.0
        %v2801 = vmax.f32 %v1777, 0.0
        %v2802 = vmax.f32 %v1778, 0.0
        %v2803 = vmax.f32 %v1779, 0.0
        %v2804 = vmax.f32 %v1780, 0.0
        %v2805 = vmax.f32 %v1781, 0.0
        %v2806 = vmax.f32 %v1782, 0.0
        %v2807 = vmax.f32 %v1783, 0.0
        %v2808 = vmax.f32 %v1784, 0.0
        %v2809 = vmax.f32 %v1785, 0.0
        %v2810 = vmax.f32 %v1786, 0.0
        %v2811 = vmax.f32 %v1787, 0.0
        %v2812 = vmax.f32 %v1788, 0.0
        %v2813 = vmax.f32 %v1789, 0.0
        %v2814 = vmax.f32 %v1790, 0.0
        %v2815 = vmax.f32 %v1791, 0.0
        %v2816 = vmax.f32 %v1792, 0.0
        %v2817 = vmax.f32 %v1793, 0.0
        %v2818 = vmax.f32 %v1794, 0.0
        %v2819 = vmax.f32 %v1795, 0.0
        %v2820 = vmax.f32 %v1796, 0.0
        %v2821 = vmax.f32 %v1797, 0.0
        %v2822 = vmax.f32 %v1798, 0.0
        %v2823 = vmax.f32 %v1799, 0.0
        %v2824 = vmax.f32 %v1800, 0.0
        %v2825 = vmax.f32 %v1801, 0.0
        %v2826 = vmax.f32 %v1802, 0.0
        %v2827 = vmax.f32 %v1803, 0.0
        %v2828 = vmax.f32 %v1804, 0.0
        %v2829 = vmax.f32 %v1805, 0.0
        %v2830 = vmax.f32 %v1806, 0.0
        %v2831 = vmax.f32 %v1807, 0.0
        %v2832 = vmax.f32 %v1808, 0.0
        %v2833 = vmax.f32 %v1809, 0.0
        %v2834 = vmax.f32 %v1810, 0.0
        %v2835 = vmax.f32 %v1811, 0.0
        %v2836 = vmax.f32 %v1812, 0.0
        %v2837 = vmax.f32 %v1813, 0.0
        %v2838 = vmax.f32 %v1814, 0.0
        %v2839 = vmax.f32 %v1815, 0.0
        %v2840 = vmax.f32 %v1816, 0.0
        %v2841 = vmax.f32 %v1817, 0.0
        %v2842 = vmax.f32 %v1818, 0.0
        %v2843 = vmax.f32 %v1819, 0.0
        %v2844 = vmax.f32 %v1820, 0.0
        %v2845 = vmax.f32 %v1821, 0.0
        %v2846 = vmax.f32 %v1822, 0.0
        %v2847 = vmax.f32 %v1823, 0.0
        %v2848 = vmax.f32 %v1824, 0.0
        %v2849 = vmax.f32 %v1825, 0.0
        %v2850 = vmax.f32 %v1826, 0.0
        %v2851 = vmax.f32 %v1827, 0.0
        %v2852 = vmax.f32 %v1828, 0.0
        %v2853 = vmax.f32 %v1829, 0.0
        %v2854 = vmax.f32 %v1830, 0.0
        %v2855 = vmax.f32 %v1831, 0.0
        %v2856 = vmax.f32 %v1832, 0.0
        %v2857 = vmax.f32 %v1833, 0.0
        %v2858 = vmax.f32 %v1834, 0.0
        %v2859 = vmax.f32 %v1835, 0.0
        %v2860 = vmax.f32 %v1836, 0.0
        %v2861 = vmax.f32 %v1837, 0.0
        %v2862 = vmax.f32 %v1838, 0.0
        %v2863 = vmax.f32 %v1839, 0.0
        %v2864 = vmax.f32 %v1840, 0.0
        %v2865 = vmax.f32 %v1841, 0.0
        %v2866 = vmax.f32 %v1842, 0.0
        %v2867 = vmax.f32 %v1843, 0.0
        %v2868 = vmax.f32 %v1844, 0.0
        %v2869 = vmax.f32 %v1845, 0.0
        %v2870 = vmax.f32 %v1846, 0.0
        %v2871 = vmax.f32 %v1847, 0.0
        %v2872 = vmax.f32 %v1848, 0.0
        %v2873 = vmax.f32 %v1849, 0.0
        %v2874 = vmax.f32 %v1850, 0.0
        %v2875 = vmax.f32 %v1851, 0.0
        %v2876 = vmax.f32 %v1852, 0.0
        %v2877 = vmax.f32 %v1853, 0.0
        %v2878 = vmax.f32 %v1854, 0.0
        %v2879 = vmax.f32 %v1855, 0.0
        %v2880 = vmax.f32 %v1856, 0.0
        %v2881 = vmax.f32 %v1857, 0.0
        %v2882 = vmax.f32 %v1858, 0.0
        %v2883 = vmax.f32 %v1859, 0.0
        %v2884 = vmax.f32 %v1860, 0.0
        %v2885 = vmax.f32 %v1861, 0.0
        %v2886 = vmax.f32 %v1862, 0.0
        %v2887 = vmax.f32 %v1863, 0.0
        %v2888 = vmax.f32 %v1864, 0.0
        %v2889 = vmax.f32 %v1865, 0.0
        %v2890 = vmax.f32 %v1866, 0.0
        %v2891 = vmax.f32 %v1867, 0.0
        %v2892 = vmax.f32 %v1868, 0.0
        %v2893 = vmax.f32 %v1869, 0.0
        %v2894 = vmax.f32 %v1870, 0.0
        %v2895 = vmax.f32 %v1871, 0.0
        %v2896 = vmax.f32 %v1872, 0.0
        %v2897 = vmax.f32 %v1873, 0.0
        %v2898 = vmax.f32 %v1874, 0.0
        %v2899 = vmax.f32 %v1875, 0.0
        %v2900 = vmax.f32 %v1876, 0.0
        %v2901 = vmax.f32 %v1877, 0.0
        %v2902 = vmax.f32 %v1878, 0.0
        %v2903 = vmax.f32 %v1879, 0.0
        %v2904 = vmax.f32 %v1880, 0.0
        %v2905 = vmax.f32 %v1881, 0.0
        %v2906 = vmax.f32 %v1882, 0.0
        %v2907 = vmax.f32 %v1883, 0.0
        %v2908 = vmax.f32 %v1884, 0.0
        %v2909 = vmax.f32 %v1885, 0.0
        %v2910 = vmax.f32 %v1886, 0.0
        %v2911 = vmax.f32 %v1887, 0.0
        %v2912 = vmax.f32 %v1888, 0.0
        %v2913 = vmax.f32 %v1889, 0.0
        %v2914 = vmax.f32 %v1890, 0.0
        %v2915 = vmax.f32 %v1891, 0.0
        %v2916 = vmax.f32 %v1892, 0.0
        %v2917 = vmax.f32 %v1893, 0.0
        %v2918 = vmax.f32 %v1894, 0.0
        %v2919 = vmax.f32 %v1895, 0.0
        %v2920 = vmax.f32 %v1896, 0.0
        %v2921 = vmax.f32 %v1897, 0.0
        %v2922 = vmax.f32 %v1898, 0.0
        %v2923 = vmax.f32 %v1899, 0.0
        %v2924 = vmax.f32 %v1900, 0.0
        %v2925 = vmax.f32 %v1901, 0.0
        %v2926 = vmax.f32 %v1902, 0.0
        %v2927 = vmax.f32 %v1903, 0.0
        %v2928 = vmax.f32 %v1904, 0.0
        %v2929 = vmax.f32 %v1905, 0.0
        %v2930 = vmax.f32 %v1906, 0.0
        %v2931 = vmax.f32 %v1907, 0.0
        %v2932 = vmax.f32 %v1908, 0.0
        %v2933 = vmax.f32 %v1909, 0.0
        %v2934 = vmax.f32 %v1910, 0.0
        %v2935 = vmax.f32 %v1911, 0.0
        %v2936 = vmax.f32 %v1912, 0.0
        %v2937 = vmax.f32 %v1913, 0.0
        %v2938 = vmax.f32 %v1914, 0.0
        %v2939 = vmax.f32 %v1915, 0.0
        %v2940 = vmax.f32 %v1916, 0.0
        %v2941 = vmax.f32 %v1917, 0.0
        %v2942 = vmax.f32 %v1918, 0.0
        %v2943 = vmax.f32 %v1919, 0.0
        %v2944 = vmax.f32 %v1920, 0.0
        %v2945 = vmax.f32 %v1921, 0.0
        %v2946 = vmax.f32 %v1922, 0.0
        %v2947 = vmax.f32 %v1923, 0.0
        %v2948 = vmax.f32 %v1924, 0.0
        %v2949 = vmax.f32 %v1925, 0.0
        %v2950 = vmax.f32 %v1926, 0.0
        %v2951 = vmax.f32 %v1927, 0.0
        %v2952 = vmax.f32 %v1928, 0.0
        %v2953 = vmax.f32 %v1929, 0.0
        %v2954 = vmax.f32 %v1930, 0.0
        %v2955 = vmax.f32 %v1931, 0.0
        %v2956 = vmax.f32 %v1932, 0.0
        %v2957 = vmax.f32 %v1933, 0.0
        %v2958 = vmax.f32 %v1934, 0.0
        %v2959 = vmax.f32 %v1935, 0.0
        %v2960 = vmax.f32 %v1936, 0.0
        %v2961 = vmax.f32 %v1937, 0.0
        %v2962 = vmax.f32 %v1938, 0.0
        %v2963 = vmax.f32 %v1939, 0.0
        %v2964 = vmax.f32 %v1940, 0.0
        %v2965 = vmax.f32 %v1941, 0.0
        %v2966 = vmax.f32 %v1942, 0.0
        %v2967 = vmax.f32 %v1943, 0.0
        %v2968 = vmax.f32 %v1944, 0.0
        %v2969 = vmax.f32 %v1945, 0.0
        %v2970 = vmax.f32 %v1946, 0.0
        %v2971 = vmax.f32 %v1947, 0.0
        %v2972 = vmax.f32 %v1948, 0.0
        %v2973 = vmax.f32 %v1949, 0.0
        %v2974 = vmax.f32 %v1950, 0.0
        %v2975 = vmax.f32 %v1951, 0.0
        %v2976 = vmax.f32 %v1952, 0.0
        %v2977 = vmax.f32 %v1953, 0.0
        %v2978 = vmax.f32 %v1954, 0.0
        %v2979 = vmax.f32 %v1955, 0.0
        %v2980 = vmax.f32 %v1956, 0.0
        %v2981 = vmax.f32 %v1957, 0.0
        %v2982 = vmax.f32 %v1958, 0.0
        %v2983 = vmax.f32 %v1959, 0.0
        %v2984 = vmax.f32 %v1960, 0.0
        %v2985 = vmax.f32 %v1961, 0.0
        %v2986 = vmax.f32 %v1962, 0.0
        %v2987 = vmax.f32 %v1963, 0.0
        %v2988 = vmax.f32 %v1964, 0.0
        %v2989 = vmax.f32 %v1965, 0.0
        %v2990 = vmax.f32 %v1966, 0.0
        %v2991 = vmax.f32 %v1967, 0.0
        %v2992 = vmax.f32 %v1968, 0.0
        %v2993 = vmax.f32 %v1969, 0.0
        %v2994 = vmax.f32 %v1970, 0.0
        %v2995 = vmax.f32 %v1971, 0.0
        %v2996 = vmax.f32 %v1972, 0.0
        %v2997 = vmax.f32 %v1973, 0.0
        %v2998 = vmax.f32 %v1974, 0.0
        %v2999 = vmax.f32 %v1975, 0.0
        %v3000 = vmax.f32 %v1976, 0.0
        %v3001 = vmax.f32 %v1977, 0.0
        %v3002 = vmax.f32 %v1978, 0.0
        %v3003 = vmax.f32 %v1979, 0.0
        %v3004 = vmax.f32 %v1980, 0.0
        %v3005 = vmax.f32 %v1981, 0.0
        %v3006 = vmax.f32 %v1982, 0.0
        %v3007 = vmax.f32 %v1983, 0.0
        %v3008 = vmax.f32 %v1984, 0.0
        %v3009 = vmax.f32 %v1985, 0.0
        %v3010 = vmax.f32 %v1986, 0.0
        %v3011 = vmax.f32 %v1987, 0.0
        %v3012 = vmax.f32 %v1988, 0.0
        %v3013 = vmax.f32 %v1989, 0.0
        %v3014 = vmax.f32 %v1990, 0.0
        %v3015 = vmax.f32 %v1991, 0.0
        %v3016 = vmax.f32 %v1992, 0.0
        %v3017 = vmax.f32 %v1993, 0.0
        %v3018 = vmax.f32 %v1994, 0.0
        %v3019 = vmax.f32 %v1995, 0.0
        %v3020 = vmax.f32 %v1996, 0.0
        %v3021 = vmax.f32 %v1997, 0.0
        %v3022 = vmax.f32 %v1998, 0.0
        %v3023 = vmax.f32 %v1999, 0.0
        %v3024 = vmax.f32 %v2000, 0.0
        %v3025 = vmax.f32 %v2001, 0.0
        %v3026 = vmax.f32 %v2002, 0.0
        %v3027 = vmax.f32 %v2003, 0.0
        %v3028 = vmax.f32 %v2004, 0.0
        %v3029 = vmax.f32 %v2005, 0.0
        %v3030 = vmax.f32 %v2006, 0.0
        %v3031 = vmax.f32 %v2007, 0.0
        %v3032 = vmax.f32 %v2008, 0.0
        %v3033 = vmax.f32 %v2009, 0.0
        %v3034 = vmax.f32 %v2010, 0.0
        %v3035 = vmax.f32 %v2011, 0.0
        %v3036 = vmax.f32 %v2012, 0.0
        %v3037 = vmax.f32 %v2013, 0.0
        %v3038 = vmax.f32 %v2014, 0.0
        %v3039 = vmax.f32 %v2015, 0.0
        %v3040 = vmax.f32 %v2016, 0.0
        %v3041 = vmax.f32 %v2017, 0.0
        %v3042 = vmax.f32 %v2018, 0.0
        %v3043 = vmax.f32 %v2019, 0.0
        %v3044 = vmax.f32 %v2020, 0.0
        %v3045 = vmax.f32 %v2021, 0.0
        %v3046 = vmax.f32 %v2022, 0.0
        %v3047 = vmax.f32 %v2023, 0.0
        %v3048 = vmax.f32 %v2024, 0.0
        %v3049 = vmax.f32 %v2025, 0.0
        %v3050 = vmax.f32 %v2026, 0.0
        %v3051 = vmax.f32 %v2027, 0.0
        %v3052 = vmax.f32 %v2028, 0.0
        %v3053 = vmax.f32 %v2029, 0.0
        %v3054 = vmax.f32 %v2030, 0.0
        %v3055 = vmax.f32 %v2031, 0.0
        %v3056 = vmax.f32 %v2032, 0.0
        %v3057 = vmax.f32 %v2033, 0.0
        %v3058 = vmax.f32 %v2034, 0.0
        %v3059 = vmax.f32 %v2035, 0.0
        %v3060 = vmax.f32 %v2036, 0.0
        %v3061 = vmax.f32 %v2037, 0.0
        %v3062 = vmax.f32 %v2038, 0.0
        %v3063 = vmax.f32 %v2039, 0.0
        %v3064 = vmax.f32 %v2040, 0.0
        %v3065 = vmax.f32 %v2041, 0.0
        %v3066 = vmax.f32 %v2042, 0.0
        %v3067 = vmax.f32 %v2043, 0.0
        %v3068 = vmax.f32 %v2044, 0.0
        %v3069 = vmax.f32 %v2045, 0.0
        %v3070 = vmax.f32 %v2046, 0.0
        %v3071 = vmax.f32 %v2047, 0.0
        %v3072 = vmax.f32 %v2048, 0.0
        %v3073 = vmax.f32 %v2049, 0.0
        %v3074 = vmax.f32 %v2050, 0.0
        %v3075 = vmax.f32 %v2051, 0.0
        %v3076 = vmax.f32 %v2052, 0.0
        %v3077 = vmax.f32 %v2053, 0.0
        %v3078 = vmax.f32 %v2054, 0.0
        %v3079 = vmax.f32 %v2055, 0.0
        %v3080 = vmax.f32 %v2056, 0.0
        %v3081 = vmax.f32 %v2057, 0.0
        %v3082 = vmax.f32 %v2058, 0.0
        %v3083 = vmax.f32 %v2059, 0.0
        %v3084 = vmax.f32 %v2060, 0.0
        %v3085 = vmax.f32 %v2061, 0.0
        %v3086 = vmax.f32 %v2062, 0.0
        %v3087 = vmax.f32 %v2063, 0.0
        %v3088 = vmax.f32 %v2064, 0.0
        %v3089 = vmax.f32 %v2065, 0.0
        %v3090 = vmax.f32 %v2066, 0.0
        %v3091 = vmax.f32 %v2067, 0.0
        %v3092 = vmax.f32 %v2068, 0.0
        %v3093 = vmax.f32 %v2069, 0.0
        %v3094 = vmax.f32 %v2070, 0.0
        %v3095 = vmax.f32 %v2071, 0.0
        %v3096 = vmax.f32 %v2072, 0.0
        %v3097 = vmax.f32 %v2073, 0.0
        %v3098 = vmax.f32 %v2074, 0.0
        %v3099 = vmax.f32 %v2075, 0.0
        %v3100 = vmax.f32 %v2076, 0.0
        %v3101 = vmax.f32 %v2077, 0.0
        %v3102 = vmax.f32 %v2078, 0.0
        %v3103 = vmax.f32 %v2079, 0.0
        %v3104 = vmax.f32 %v2080, 0.0
        %v3105 = vmax.f32 %v2081, 0.0
        %v3106 = vmax.f32 %v2082, 0.0
        %v3107 = vmax.f32 %v2083, 0.0
        %v3108 = vmax.f32 %v2084, 0.0
        %v3109 = vmax.f32 %v2085, 0.0
        %v3110 = vmax.f32 %v2086, 0.0
        %v3111 = vmax.f32 %v2087, 0.0
        %v3112 = vmax.f32 %v2088, 0.0
        %v3113 = vmax.f32 %v2089, 0.0
        %v3114 = vmax.f32 %v2090, 0.0
        %v3115 = vmax.f32 %v2091, 0.0
        %v3116 = vmax.f32 %v2092, 0.0
        %v3117 = vmax.f32 %v2093, 0.0
        %v3118 = vmax.f32 %v2094, 0.0
        %v3119 = vmax.f32 %v2095, 0.0
        %v3120 = vmax.f32 %v2096, 0.0
        %v3121 = vmax.f32 %v2097, 0.0
        %v3122 = vmax.f32 %v2098, 0.0
        %v3123 = vmax.f32 %v2099, 0.0
        %v3124 = vmax.f32 %v2100, 0.0
        %v3125 = vmax.f32 %v2101, 0.0
        %v3126 = vmax.f32 %v2102, 0.0
        %v3127 = vmax.f32 %v2103, 0.0
        %v3128 = vmax.f32 %v2104, 0.0
        %v3129 = vmax.f32 %v2105, 0.0
        %v3130 = vmax.f32 %v2106, 0.0
        %v3131 = vmax.f32 %v2107, 0.0
        %v3132 = vmax.f32 %v2108, 0.0
        %v3133 = vmax.f32 %v2109, 0.0
        %v3134 = vmax.f32 %v2110, 0.0
        %v3135 = vmax.f32 %v2111, 0.0
        %v3136 = vmax.f32 %v2112, 0.0
        %v3137 = vmax.f32 %v2113, 0.0
        %v3138 = vmax.f32 %v2114, 0.0
        %v3139 = vmax.f32 %v2115, 0.0
        %v3140 = vmax.f32 %v2116, 0.0
        %v3141 = vmax.f32 %v2117, 0.0
        %v3142 = vmax.f32 %v2118, 0.0
        %v3143 = vmax.f32 %v2119, 0.0
        %v3144 = vmax.f32 %v2120, 0.0
        %v3145 = vmax.f32 %v2121, 0.0
        %v3146 = vmax.f32 %v2122, 0.0
        %v3147 = vmax.f32 %v2123, 0.0
        %v3148 = vmax.f32 %v2124, 0.0
        %v3149 = vmax.f32 %v2125, 0.0
        %v3150 = vmax.f32 %v2126, 0.0
        %v3151 = vmax.f32 %v2127, 0.0
        %v3152 = vmax.f32 %v2128, 0.0
        %v3153 = vmax.f32 %v2129, 0.0
        %v3154 = vmax.f32 %v2130, 0.0
        %v3155 = vmax.f32 %v2131, 0.0
        %v3156 = vmax.f32 %v2132, 0.0
        %v3157 = vmax.f32 %v2133, 0.0
        %v3158 = vmax.f32 %v2134, 0.0
        %v3159 = vmax.f32 %v2135, 0.0
        %v3160 = vmax.f32 %v2136, 0.0
        %v3161 = vmax.f32 %v2137, 0.0
        %v3162 = vmax.f32 %v2138, 0.0
        %v3163 = vmax.f32 %v2139, 0.0
        %v3164 = vmax.f32 %v2140, 0.0
        %v3165 = vmax.f32 %v2141, 0.0
        %v3166 = vmax.f32 %v2142, 0.0
        %v3167 = vmax.f32 %v2143, 0.0
        %v3168 = vmax.f32 %v2144, 0.0
        %v3169 = vmax.f32 %v2145, 0.0
        %v3170 = vmax.f32 %v2146, 0.0
        %v3171 = vmax.f32 %v2147, 0.0
        %v3172 = vmax.f32 %v2148, 0.0
        %v3173 = vmax.f32 %v2149, 0.0
        %v3174 = vmax.f32 %v2150, 0.0
        %v3175 = vmax.f32 %v2151, 0.0
        %v3176 = vmax.f32 %v2152, 0.0
        %v3177 = vmax.f32 %v2153, 0.0
        %v3178 = vmax.f32 %v2154, 0.0
        %v3179 = vmax.f32 %v2155, 0.0
        %v3180 = vmax.f32 %v2156, 0.0
        %v3181 = vmax.f32 %v2157, 0.0
        %v3182 = vmax.f32 %v2158, 0.0
        %v3183 = vmax.f32 %v2159, 0.0
        %v3184 = vmax.f32 %v2160, 0.0
        %v3185 = vmax.f32 %v2161, 0.0
        %v3186 = vmax.f32 %v2162, 0.0
        %v3187 = vmax.f32 %v2163, 0.0
        %v3188 = vmax.f32 %v2164, 0.0
        %v3189 = vmax.f32 %v2165, 0.0
        %v3190 = vmax.f32 %v2166, 0.0
        %v3191 = vmax.f32 %v2167, 0.0
        %v3192 = vmax.f32 %v2168, 0.0
        %v3193 = vmax.f32 %v2169, 0.0
        %v3194 = vmax.f32 %v2170, 0.0
        %v3195 = vmax.f32 %v2171, 0.0
        %v3196 = vmax.f32 %v2172, 0.0
        %v3197 = vmax.f32 %v2173, 0.0
        %v3198 = vmax.f32 %v2174, 0.0
        %v3199 = vmax.f32 %v2175, 0.0
        %v3200 = vmax.f32 %v2176, 0.0
        %v3201 = vmax.f32 %v2177, 0.0
        %v3202 = vmax.f32 %v2178, 0.0
        %v3203 = vmax.f32 %v2179, 0.0
        %v3204 = vmax.f32 %v2180, 0.0
        %v3205 = vmax.f32 %v2181, 0.0
        %v3206 = vmax.f32 %v2182, 0.0
        %v3207 = vmax.f32 %v2183, 0.0
        %v3208 = vmax.f32 %v2184, 0.0
        %v3209 = vmax.f32 %v2185, 0.0
        %v3210 = vmax.f32 %v2186, 0.0
        %v3211 = vmax.f32 %v2187, 0.0
        %v3212 = vmin.f32 %v2188, 1.0
        %v3213 = vmin.f32 %v2189, 1.0
        %v3214 = vmin.f32 %v2190, 1.0
        %v3215 = vmin.f32 %v2191, 1.0
        %v3216 = vmin.f32 %v2192, 1.0
        %v3217 = vmin.f32 %v2193, 1.0
        %v3218 = vmin.f32 %v2194, 1.0
        %v3219 = vmin.f32 %v2195, 1.0
        %v3220 = vmin.f32 %v2196, 1.0
        %v3221 = vmin.f32 %v2197, 1.0
        %v3222 = vmin.f32 %v2198, 1.0
        %v3223 = vmin.f32 %v2199, 1.0
        %v3224 = vmin.f32 %v2200, 1.0
        %v3225 = vmin.f32 %v2201, 1.0
        %v3226 = vmin.f32 %v2202, 1.0
        %v3227 = vmin.f32 %v2203, 1.0
        %v3228 = vmin.f32 %v2204, 1.0
        %v3229 = vmin.f32 %v2205, 1.0
        %v3230 = vmin.f32 %v2206, 1.0
        %v3231 = vmin.f32 %v2207, 1.0
        %v3232 = vmin.f32 %v2208, 1.0
        %v3233 = vmin.f32 %v2209, 1.0
        %v3234 = vmin.f32 %v2210, 1.0
        %v3235 = vmin.f32 %v2211, 1.0
        %v3236 = vmin.f32 %v2212, 1.0
        %v3237 = vmin.f32 %v2213, 1.0
        %v3238 = vmin.f32 %v2214, 1.0
        %v3239 = vmin.f32 %v2215, 1.0
        %v3240 = vmin.f32 %v2216, 1.0
        %v3241 = vmin.f32 %v2217, 1.0
        %v3242 = vmin.f32 %v2218, 1.0
        %v3243 = vmin.f32 %v2219, 1.0
        %v3244 = vmin.f32 %v2220, 1.0
        %v3245 = vmin.f32 %v2221, 1.0
        %v3246 = vmin.f32 %v2222, 1.0
        %v3247 = vmin.f32 %v2223, 1.0
        %v3248 = vmin.f32 %v2224, 1.0
        %v3249 = vmin.f32 %v2225, 1.0
        %v3250 = vmin.f32 %v2226, 1.0
        %v3251 = vmin.f32 %v2227, 1.0
        %v3252 = vmin.f32 %v2228, 1.0
        %v3253 = vmin.f32 %v2229, 1.0
        %v3254 = vmin.f32 %v2230, 1.0
        %v3255 = vmin.f32 %v2231, 1.0
        %v3256 = vmin.f32 %v2232, 1.0
        %v3257 = vmin.f32 %v2233, 1.0
        %v3258 = vmin.f32 %v2234, 1.0
        %v3259 = vmin.f32 %v2235, 1.0
        %v3260 = vmin.f32 %v2236, 1.0
        %v3261 = vmin.f32 %v2237, 1.0
        %v3262 = vmin.f32 %v2238, 1.0
        %v3263 = vmin.f32 %v2239, 1.0
        %v3264 = vmin.f32 %v2240, 1.0
        %v3265 = vmin.f32 %v2241, 1.0
        %v3266 = vmin.f32 %v2242, 1.0
        %v3267 = vmin.f32 %v2243, 1.0
        %v3268 = vmin.f32 %v2244, 1.0
        %v3269 = vmin.f32 %v2245, 1.0
        %v3270 = vmin.f32 %v2246, 1.0
        %v3271 = vmin.f32 %v2247, 1.0
        %v3272 = vmin.f32 %v2248, 1.0
        %v3273 = vmin.f32 %v2249, 1.0
        %v3274 = vmin.f32 %v2250, 1.0
        %v3275 = vmin.f32 %v2251, 1.0
        %v3276 = vmin.f32 %v2252, 1.0
        %v3277 = vmin.f32 %v2253, 1.0
        %v3278 = vmin.f32 %v2254, 1.0
        %v3279 = vmin.f32 %v2255, 1.0
        %v3280 = vmin.f32 %v2256, 1.0
        %v3281 = vmin.f32 %v2257, 1.0
        %v3282 = vmin.f32 %v2258, 1.0
        %v3283 = vmin.f32 %v2259, 1.0
        %v3284 = vmin.f32 %v2260, 1.0
        %v3285 = vmin.f32 %v2261, 1.0
        %v3286 = vmin.f32 %v2262, 1.0
        %v3287 = vmin.f32 %v2263, 1.0
        %v3288 = vmin.f32 %v2264, 1.0
        %v3289 = vmin.f32 %v2265, 1.0
        %v3290 = vmin.f32 %v2266, 1.0
        %v3291 = vmin.f32 %v2267, 1.0
        %v3292 = vmin.f32 %v2268, 1.0
        %v3293 = vmin.f32 %v2269, 1.0
        %v3294 = vmin.f32 %v2270, 1.0
        %v3295 = vmin.f32 %v2271, 1.0
        %v3296 = vmin.f32 %v2272, 1.0
        %v3297 = vmin.f32 %v2273, 1.0
        %v3298 = vmin.f32 %v2274, 1.0
        %v3299 = vmin.f32 %v2275, 1.0
        %v3300 = vmin.f32 %v2276, 1.0
        %v3301 = vmin.f32 %v2277, 1.0
        %v3302 = vmin.f32 %v2278, 1.0
        %v3303 = vmin.f32 %v2279, 1.0
        %v3304 = vmin.f32 %v2280, 1.0
        %v3305 = vmin.f32 %v2281, 1.0
        %v3306 = vmin.f32 %v2282, 1.0
        %v3307 = vmin.f32 %v2283, 1.0
        %v3308 = vmin.f32 %v2284, 1.0
        %v3309 = vmin.f32 %v2285, 1.0
        %v3310 = vmin.f32 %v2286, 1.0
        %v3311 = vmin.f32 %v2287, 1.0
        %v3312 = vmin.f32 %v2288, 1.0
        %v3313 = vmin.f32 %v2289, 1.0
        %v3314 = vmin.f32 %v2290, 1.0
        %v3315 = vmin.f32 %v2291, 1.0
        %v3316 = vmin.f32 %v2292, 1.0
        %v3317 = vmin.f32 %v2293, 1.0
        %v3318 = vmin.f32 %v2294, 1.0
        %v3319 = vmin.f32 %v2295, 1.0
        %v3320 = vmin.f32 %v2296, 1.0
        %v3321 = vmin.f32 %v2297, 1.0
        %v3322 = vmin.f32 %v2298, 1.0
        %v3323 = vmin.f32 %v2299, 1.0
        %v3324 = vmin.f32 %v2300, 1.0
        %v3325 = vmin.f32 %v2301, 1.0
        %v3326 = vmin.f32 %v2302, 1.0
        %v3327 = vmin.f32 %v2303, 1.0
        %v3328 = vmin.f32 %v2304, 1.0
        %v3329 = vmin.f32 %v2305, 1.0
        %v3330 = vmin.f32 %v2306, 1.0
        %v3331 = vmin.f32 %v2307, 1.0
        %v3332 = vmin.f32 %v2308, 1.0
        %v3333 = vmin.f32 %v2309, 1.0
        %v3334 = vmin.f32 %v2310, 1.0
        %v3335 = vmin.f32 %v2311, 1.0
        %v3336 = vmin.f32 %v2312, 1.0
        %v3337 = vmin.f32 %v2313, 1.0
        %v3338 = vmin.f32 %v2314, 1.0
        %v3339 = vmin.f32 %v2315, 1.0
        %v3340 = vmin.f32 %v2316, 1.0
        %v3341 = vmin.f32 %v2317, 1.0
        %v3342 = vmin.f32 %v2318, 1.0
        %v3343 = vmin.f32 %v2319, 1.0
        %v3344 = vmin.f32 %v2320, 1.0
        %v3345 = vmin.f32 %v2321, 1.0
        %v3346 = vmin.f32 %v2322, 1.0
        %v3347 = vmin.f32 %v2323, 1.0
        %v3348 = vmin.f32 %v2324, 1.0
        %v3349 = vmin.f32 %v2325, 1.0
        %v3350 = vmin.f32 %v2326, 1.0
        %v3351 = vmin.f32 %v2327, 1.0
        %v3352 = vmin.f32 %v2328, 1.0
        %v3353 = vmin.f32 %v2329, 1.0
        %v3354 = vmin.f32 %v2330, 1.0
        %v3355 = vmin.f32 %v2331, 1.0
        %v3356 = vmin.f32 %v2332, 1.0
        %v3357 = vmin.f32 %v2333, 1.0
        %v3358 = vmin.f32 %v2334, 1.0
        %v3359 = vmin.f32 %v2335, 1.0
        %v3360 = vmin.f32 %v2336, 1.0
        %v3361 = vmin.f32 %v2337, 1.0
        %v3362 = vmin.f32 %v2338, 1.0
        %v3363 = vmin.f32 %v2339, 1.0
        %v3364 = vmin.f32 %v2340, 1.0
        %v3365 = vmin.f32 %v2341, 1.0
        %v3366 = vmin.f32 %v2342, 1.0
        %v3367 = vmin.f32 %v2343, 1.0
        %v3368 = vmin.f32 %v2344, 1.0
        %v3369 = vmin.f32 %v2345, 1.0
        %v3370 = vmin.f32 %v2346, 1.0
        %v3371 = vmin.f32 %v2347, 1.0
        %v3372 = vmin.f32 %v2348, 1.0
        %v3373 = vmin.f32 %v2349, 1.0
        %v3374 = vmin.f32 %v2350, 1.0
        %v3375 = vmin.f32 %v2351, 1.0
        %v3376 = vmin.f32 %v2352, 1.0
        %v3377 = vmin.f32 %v2353, 1.0
        %v3378 = vmin.f32 %v2354, 1.0
        %v3379 = vmin.f32 %v2355, 1.0
        %v3380 = vmin.f32 %v2356, 1.0
        %v3381 = vmin.f32 %v2357, 1.0
        %v3382 = vmin.f32 %v2358, 1.0
        %v3383 = vmin.f32 %v2359, 1.0
        %v3384 = vmin.f32 %v2360, 1.0
        %v3385 = vmin.f32 %v2361, 1.0
        %v3386 = vmin.f32 %v2362, 1.0
        %v3387 = vmin.f32 %v2363, 1.0
        %v3388 = vmin.f32 %v2364, 1.0
        %v3389 = vmin.f32 %v2365, 1.0
        %v3390 = vmin.f32 %v2366, 1.0
        %v3391 = vmin.f32 %v2367, 1.0
        %v3392 = vmin.f32 %v2368, 1.0
        %v3393 = vmin.f32 %v2369, 1.0
        %v3394 = vmin.f32 %v2370, 1.0
        %v3395 = vmin.f32 %v2371, 1.0
        %v3396 = vmin.f32 %v2372, 1.0
        %v3397 = vmin.f32 %v2373, 1.0
        %v3398 = vmin.f32 %v2374, 1.0
        %v3399 = vmin.f32 %v2375, 1.0
        %v3400 = vmin.f32 %v2376, 1.0
        %v3401 = vmin.f32 %v2377, 1.0
        %v3402 = vmin.f32 %v2378, 1.0
        %v3403 = vmin.f32 %v2379, 1.0
        %v3404 = vmin.f32 %v2380, 1.0
        %v3405 = vmin.f32 %v2381, 1.0
        %v3406 = vmin.f32 %v2382, 1.0
        %v3407 = vmin.f32 %v2383, 1.0
        %v3408 = vmin.f32 %v2384, 1.0
        %v3409 = vmin.f32 %v2385, 1.0
        %v3410 = vmin.f32 %v2386, 1.0
        %v3411 = vmin.f32 %v2387, 1.0
        %v3412 = vmin.f32 %v2388, 1.0
        %v3413 = vmin.f32 %v2389, 1.0
        %v3414 = vmin.f32 %v2390, 1.0
        %v3415 = vmin.f32 %v2391, 1.0
        %v3416 = vmin.f32 %v2392, 1.0
        %v3417 = vmin.f32 %v2393, 1.0
        %v3418 = vmin.f32 %v2394, 1.0
        %v3419 = vmin.f32 %v2395, 1.0
        %v3420 = vmin.f32 %v2396, 1.0
        %v3421 = vmin.f32 %v2397, 1.0
        %v3422 = vmin.f32 %v2398, 1.0
        %v3423 = vmin.f32 %v2399, 1.0
        %v3424 = vmin.f32 %v2400, 1.0
        %v3425 = vmin.f32 %v2401, 1.0
        %v3426 = vmin.f32 %v2402, 1.0
        %v3427 = vmin.f32 %v2403, 1.0
        %v3428 = vmin.f32 %v2404, 1.0
        %v3429 = vmin.f32 %v2405, 1.0
        %v3430 = vmin.f32 %v2406, 1.0
        %v3431 = vmin.f32 %v2407, 1.0
        %v3432 = vmin.f32 %v2408, 1.0
        %v3433 = vmin.f32 %v2409, 1.0
        %v3434 = vmin.f32 %v2410, 1.0
        %v3435 = vmin.f32 %v2411, 1.0
        %v3436 = vmin.f32 %v2412, 1.0
        %v3437 = vmin.f32 %v2413, 1.0
        %v3438 = vmin.f32 %v2414, 1.0
        %v3439 = vmin.f32 %v2415, 1.0
        %v3440 = vmin.f32 %v2416, 1.0
        %v3441 = vmin.f32 %v2417, 1.0
        %v3442 = vmin.f32 %v2418, 1.0
        %v3443 = vmin.f32 %v2419, 1.0
        %v3444 = vmin.f32 %v2420, 1.0
        %v3445 = vmin.f32 %v2421, 1.0
        %v3446 = vmin.f32 %v2422, 1.0
        %v3447 = vmin.f32 %v2423, 1.0
        %v3448 = vmin.f32 %v2424, 1.0
        %v3449 = vmin.f32 %v2425, 1.0
        %v3450 = vmin.f32 %v2426, 1.0
        %v3451 = vmin.f32 %v2427, 1.0
        %v3452 = vmin.f32 %v2428, 1.0
        %v3453 = vmin.f32 %v2429, 1.0
        %v3454 = vmin.f32 %v2430, 1.0
        %v3455 = vmin.f32 %v2431, 1.0
        %v3456 = vmin.f32 %v2432, 1.0
        %v3457 = vmin.f32 %v2433, 1.0
        %v3458 = vmin.f32 %v2434, 1.0
        %v3459 = vmin.f32 %v2435, 1.0
        %v3460 = vmin.f32 %v2436, 1.0
        %v3461 = vmin.f32 %v2437, 1.0
        %v3462 = vmin.f32 %v2438, 1.0
        %v3463 = vmin.f32 %v2439, 1.0
        %v3464 = vmin.f32 %v2440, 1.0
        %v3465 = vmin.f32 %v2441, 1.0
        %v3466 = vmin.f32 %v2442, 1.0
        %v3467 = vmin.f32 %v2443, 1.0
        %v3468 = vmin.f32 %v2444, 1.0
        %v3469 = vmin.f32 %v2445, 1.0
        %v3470 = vmin.f32 %v2446, 1.0
        %v3471 = vmin.f32 %v2447, 1.0
        %v3472 = vmin.f32 %v2448, 1.0
        %v3473 = vmin.f32 %v2449, 1.0
        %v3474 = vmin.f32 %v2450, 1.0
        %v3475 = vmin.f32 %v2451, 1.0
        %v3476 = vmin.f32 %v2452, 1.0
        %v3477 = vmin.f32 %v2453, 1.0
        %v3478 = vmin.f32 %v2454, 1.0
        %v3479 = vmin.f32 %v2455, 1.0
        %v3480 = vmin.f32 %v2456, 1.0
        %v3481 = vmin.f32 %v2457, 1.0
        %v3482 = vmin.f32 %v2458, 1.0
        %v3483 = vmin.f32 %v2459, 1.0
        %v3484 = vmin.f32 %v2460, 1.0
        %v3485 = vmin.f32 %v2461, 1.0
        %v3486 = vmin.f32 %v2462, 1.0
        %v3487 = vmin.f32 %v2463, 1.0
        %v3488 = vmin.f32 %v2464, 1.0
        %v3489 = vmin.f32 %v2465, 1.0
        %v3490 = vmin.f32 %v2466, 1.0
        %v3491 = vmin.f32 %v2467, 1.0
        %v3492 = vmin.f32 %v2468, 1.0
        %v3493 = vmin.f32 %v2469, 1.0
        %v3494 = vmin.f32 %v2470, 1.0
        %v3495 = vmin.f32 %v2471, 1.0
        %v3496 = vmin.f32 %v2472, 1.0
        %v3497 = vmin.f32 %v2473, 1.0
        %v3498 = vmin.f32 %v2474, 1.0
        %v3499 = vmin.f32 %v2475, 1.0
        %v3500 = vmin.f32 %v2476, 1.0
        %v3501 = vmin.f32 %v2477, 1.0
        %v3502 = vmin.f32 %v2478, 1.0
        %v3503 = vmin.f32 %v2479, 1.0
        %v3504 = vmin.f32 %v2480, 1.0
        %v3505 = vmin.f32 %v2481, 1.0
        %v3506 = vmin.f32 %v2482, 1.0
        %v3507 = vmin.f32 %v2483, 1.0
        %v3508 = vmin.f32 %v2484, 1.0
        %v3509 = vmin.f32 %v2485, 1.0
        %v3510 = vmin.f32 %v2486, 1.0
        %v3511 = vmin.f32 %v2487, 1.0
        %v3512 = vmin.f32 %v2488, 1.0
        %v3513 = vmin.f32 %v2489, 1.0
        %v3514 = vmin.f32 %v2490, 1.0
        %v3515 = vmin.f32 %v2491, 1.0
        %v3516 = vmin.f32 %v2492, 1.0
        %v3517 = vmin.f32 %v2493, 1.0
        %v3518 = vmin.f32 %v2494, 1.0
        %v3519 = vmin.f32 %v2495, 1.0
        %v3520 = vmin.f32 %v2496, 1.0
        %v3521 = vmin.f32 %v2497, 1.0
        %v3522 = vmin.f32 %v2498, 1.0
        %v3523 = vmin.f32 %v2499, 1.0
        %v3524 = vmin.f32 %v2500, 1.0
        %v3525 = vmin.f32 %v2501, 1.0
        %v3526 = vmin.f32 %v2502, 1.0
        %v3527 = vmin.f32 %v2503, 1.0
        %v3528 = vmin.f32 %v2504, 1.0
        %v3529 = vmin.f32 %v2505, 1.0
        %v3530 = vmin.f32 %v2506, 1.0
        %v3531 = vmin.f32 %v2507, 1.0
        %v3532 = vmin.f32 %v2508, 1.0
        %v3533 = vmin.f32 %v2509, 1.0
        %v3534 = vmin.f32 %v2510, 1.0
        %v3535 = vmin.f32 %v2511, 1.0
        %v3536 = vmin.f32 %v2512, 1.0
        %v3537 = vmin.f32 %v2513, 1.0
        %v3538 = vmin.f32 %v2514, 1.0
        %v3539 = vmin.f32 %v2515, 1.0
        %v3540 = vmin.f32 %v2516, 1.0
        %v3541 = vmin.f32 %v2517, 1.0
        %v3542 = vmin.f32 %v2518, 1.0
        %v3543 = vmin.f32 %v2519, 1.0
        %v3544 = vmin.f32 %v2520, 1.0
        %v3545 = vmin.f32 %v2521, 1.0
        %v3546 = vmin.f32 %v2522, 1.0
        %v3547 = vmin.f32 %v2523, 1.0
        %v3548 = vmin.f32 %v2524, 1.0
        %v3549 = vmin.f32 %v2525, 1.0
        %v3550 = vmin.f32 %v2526, 1.0
        %v3551 = vmin.f32 %v2527, 1.0
        %v3552 = vmin.f32 %v2528, 1.0
        %v3553 = vmin.f32 %v2529, 1.0
        %v3554 = vmin.f32 %v2530, 1.0
        %v3555 = vmin.f32 %v2531, 1.0
        %v3556 = vmin.f32 %v2532, 1.0
        %v3557 = vmin.f32 %v2533, 1.0
        %v3558 = vmin.f32 %v2534, 1.0
        %v3559 = vmin.f32 %v2535, 1.0
        %v3560 = vmin.f32 %v2536, 1.0
        %v3561 = vmin.f32 %v2537, 1.0
        %v3562 = vmin.f32 %v2538, 1.0
        %v3563 = vmin.f32 %v2539, 1.0
        %v3564 = vmin.f32 %v2540, 1.0
        %v3565 = vmin.f32 %v2541, 1.0
        %v3566 = vmin.f32 %v2542, 1.0
        %v3567 = vmin.f32 %v2543, 1.0
        %v3568 = vmin.f32 %v2544, 1.0
        %v3569 = vmin.f32 %v2545, 1.0
        %v3570 = vmin.f32 %v2546, 1.0
        %v3571 = vmin.f32 %v2547, 1.0
        %v3572 = vmin.f32 %v2548, 1.0
        %v3573 = vmin.f32 %v2549, 1.0
        %v3574 = vmin.f32 %v2550, 1.0
        %v3575 = vmin.f32 %v2551, 1.0
        %v3576 = vmin.f32 %v2552, 1.0
        %v3577 = vmin.f32 %v2553, 1.0
        %v3578 = vmin.f32 %v2554, 1.0
        %v3579 = vmin.f32 %v2555, 1.0
        %v3580 = vmin.f32 %v2556, 1.0
        %v3581 = vmin.f32 %v2557, 1.0
        %v3582 = vmin.f32 %v2558, 1.0
        %v3583 = vmin.f32 %v2559, 1.0
        %v3584 = vmin.f32 %v2560, 1.0
        %v3585 = vmin.f32 %v2561, 1.0
        %v3586 = vmin.f32 %v2562, 1.0
        %v3587 = vmin.f32 %v2563, 1.0
        %v3588 = vmin.f32 %v2564, 1.0
        %v3589 = vmin.f32 %v2565, 1.0
        %v3590 = vmin.f32 %v2566, 1.0
        %v3591 = vmin.f32 %v2567, 1.0
        %v3592 = vmin.f32 %v2568, 1.0
        %v3593 = vmin.f32 %v2569, 1.0
        %v3594 = vmin.f32 %v2570, 1.0
        %v3595 = vmin.f32 %v2571, 1.0
        %v3596 = vmin.f32 %v2572, 1.0
        %v3597 = vmin.f32 %v2573, 1.0
        %v3598 = vmin.f32 %v2574, 1.0
        %v3599 = vmin.f32 %v2575, 1.0
        %v3600 = vmin.f32 %v2576, 1.0
        %v3601 = vmin.f32 %v2577, 1.0
        %v3602 = vmin.f32 %v2578, 1.0
        %v3603 = vmin.f32 %v2579, 1.0
        %v3604 = vmin.f32 %v2580, 1.0
        %v3605 = vmin.f32 %v2581, 1.0
        %v3606 = vmin.f32 %v2582, 1.0
        %v3607 = vmin.f32 %v2583, 1.0
        %v3608 = vmin.f32 %v2584, 1.0
        %v3609 = vmin.f32 %v2585, 1.0
        %v3610 = vmin.f32 %v2586, 1.0
        %v3611 = vmin.f32 %v2587, 1.0
        %v3612 = vmin.f32 %v2588, 1.0
        %v3613 = vmin.f32 %v2589, 1.0
        %v3614 = vmin.f32 %v2590, 1.0
        %v3615 = vmin.f32 %v2591, 1.0
        %v3616 = vmin.f32 %v2592, 1.0
        %v3617 = vmin.f32 %v2593, 1.0
        %v3618 = vmin.f32 %v2594, 1.0
        %v3619 = vmin.f32 %v2595, 1.0
        %v3620 = vmin.f32 %v2596, 1.0
        %v3621 = vmin.f32 %v2597, 1.0
        %v3622 = vmin.f32 %v2598, 1.0
        %v3623 = vmin.f32 %v2599, 1.0
        %v3624 = vmin.f32 %v2600, 1.0
        %v3625 = vmin.f32 %v2601, 1.0
        %v3626 = vmin.f32 %v2602, 1.0
        %v3627 = vmin.f32 %v2603, 1.0
        %v3628 = vmin.f32 %v2604, 1.0
        %v3629 = vmin.f32 %v2605, 1.0
        %v3630 = vmin.f32 %v2606, 1.0
        %v3631 = vmin.f32 %v2607, 1.0
        %v3632 = vmin.f32 %v2608, 1.0
        %v3633 = vmin.f32 %v2609, 1.0
        %v3634 = vmin.f32 %v2610, 1.0
        %v3635 = vmin.f32 %v2611, 1.0
        %v3636 = vmin.f32 %v2612, 1.0
        %v3637 = vmin.f32 %v2613, 1.0
        %v3638 = vmin.f32 %v2614, 1.0
        %v3639 = vmin.f32 %v2615, 1.0
        %v3640 = vmin.f32 %v2616, 1.0
        %v3641 = vmin.f32 %v2617, 1.0
        %v3642 = vmin.f32 %v2618, 1.0
        %v3643 = vmin.f32 %v2619, 1.0
        %v3644 = vmin.f32 %v2620, 1.0
        %v3645 = vmin.f32 %v2621, 1.0
        %v3646 = vmin.f32 %v2622, 1.0
        %v3647 = vmin.f32 %v2623, 1.0
        %v3648 = vmin.f32 %v2624, 1.0
        %v3649 = vmin.f32 %v2625, 1.0
        %v3650 = vmin.f32 %v2626, 1.0
        %v3651 = vmin.f32 %v2627, 1.0
        %v3652 = vmin.f32 %v2628, 1.0
        %v3653 = vmin.f32 %v2629, 1.0
        %v3654 = vmin.f32 %v2630, 1.0
        %v3655 = vmin.f32 %v2631, 1.0
        %v3656 = vmin.f32 %v2632, 1.0
        %v3657 = vmin.f32 %v2633, 1.0
        %v3658 = vmin.f32 %v2634, 1.0
        %v3659 = vmin.f32 %v2635, 1.0
        %v3660 = vmin.f32 %v2636, 1.0
        %v3661 = vmin.f32 %v2637, 1.0
        %v3662 = vmin.f32 %v2638, 1.0
        %v3663 = vmin.f32 %v2639, 1.0
        %v3664 = vmin.f32 %v2640, 1.0
        %v3665 = vmin.f32 %v2641, 1.0
        %v3666 = vmin.f32 %v2642, 1.0
        %v3667 = vmin.f32 %v2643, 1.0
        %v3668 = vmin.f32 %v2644, 1.0
        %v3669 = vmin.f32 %v2645, 1.0
        %v3670 = vmin.f32 %v2646, 1.0
        %v3671 = vmin.f32 %v2647, 1.0
        %v3672 = vmin.f32 %v2648, 1.0
        %v3673 = vmin.f32 %v2649, 1.0
        %v3674 = vmin.f32 %v2650, 1.0
        %v3675 = vmin.f32 %v2651, 1.0
        %v3676 = vmin.f32 %v2652, 1.0
        %v3677 = vmin.f32 %v2653, 1.0
        %v3678 = vmin.f32 %v2654, 1.0
        %v3679 = vmin.f32 %v2655, 1.0
        %v3680 = vmin.f32 %v2656, 1.0
        %v3681 = vmin.f32 %v2657, 1.0
        %v3682 = vmin.f32 %v2658, 1.0
        %v3683 = vmin.f32 %v2659, 1.0
        %v3684 = vmin.f32 %v2660, 1.0
        %v3685 = vmin.f32 %v2661, 1.0
        %v3686 = vmin.f32 %v2662, 1.0
        %v3687 = vmin.f32 %v2663, 1.0
        %v3688 = vmin.f32 %v2664, 1.0
        %v3689 = vmin.f32 %v2665, 1.0
        %v3690 = vmin.f32 %v2666, 1.0
        %v3691 = vmin.f32 %v2667, 1.0
        %v3692 = vmin.f32 %v2668, 1.0
        %v3693 = vmin.f32 %v2669, 1.0
        %v3694 = vmin.f32 %v2670, 1.0
        %v3695 = vmin.f32 %v2671, 1.0
        %v3696 = vmin.f32 %v2672, 1.0
        %v3697 = vmin.f32 %v2673, 1.0
        %v3698 = vmin.f32 %v2674, 1.0
        %v3699 = vmin.f32 %v2675, 1.0
        %v3700 = vmin.f32 %v2676, 1.0
        %v3701 = vmin.f32 %v2677, 1.0
        %v3702 = vmin.f32 %v2678, 1.0
        %v3703 = vmin.f32 %v2679, 1.0
        %v3704 = vmin.f32 %v2680, 1.0
        %v3705 = vmin.f32 %v2681, 1.0
        %v3706 = vmin.f32 %v2682, 1.0
        %v3707 = vmin.f32 %v2683, 1.0
        %v3708 = vmin.f32 %v2684, 1.0
        %v3709 = vmin.f32 %v2685, 1.0
        %v3710 = vmin.f32 %v2686, 1.0
        %v3711 = vmin.f32 %v2687, 1.0
        %v3712 = vmin.f32 %v2688, 1.0
        %v3713 = vmin.f32 %v2689, 1.0
        %v3714 = vmin.f32 %v2690, 1.0
        %v3715 = vmin.f32 %v2691, 1.0
        %v3716 = vmin.f32 %v2692, 1.0
        %v3717 = vmin.f32 %v2693, 1.0
        %v3718 = vmin.f32 %v2694, 1.0
        %v3719 = vmin.f32 %v2695, 1.0
        %v3720 = vmin.f32 %v2696, 1.0
        %v3721 = vmin.f32 %v2697, 1.0
        %v3722 = vmin.f32 %v2698, 1.0
        %v3723 = vmin.f32 %v2699, 1.0
        %v3724 = vmin.f32 %v2700, 1.0
        %v3725 = vmin.f32 %v2701, 1.0
        %v3726 = vmin.f32 %v2702, 1.0
        %v3727 = vmin.f32 %v2703, 1.0
        %v3728 = vmin.f32 %v2704, 1.0
        %v3729 = vmin.f32 %v2705, 1.0
        %v3730 = vmin.f32 %v2706, 1.0
        %v3731 = vmin.f32 %v2707, 1.0
        %v3732 = vmin.f32 %v2708, 1.0
        %v3733 = vmin.f32 %v2709, 1.0
        %v3734 = vmin.f32 %v2710, 1.0
        %v3735 = vmin.f32 %v2711, 1.0
        %v3736 = vmin.f32 %v2712, 1.0
        %v3737 = vmin.f32 %v2713, 1.0
        %v3738 = vmin.f32 %v2714, 1.0
        %v3739 = vmin.f32 %v2715, 1.0
        %v3740 = vmin.f32 %v2716, 1.0
        %v3741 = vmin.f32 %v2717, 1.0
        %v3742 = vmin.f32 %v2718, 1.0
        %v3743 = vmin.f32 %v2719, 1.0
        %v3744 = vmin.f32 %v2720, 1.0
        %v3745 = vmin.f32 %v2721, 1.0
        %v3746 = vmin.f32 %v2722, 1.0
        %v3747 = vmin.f32 %v2723, 1.0
        %v3748 = vmin.f32 %v2724, 1.0
        %v3749 = vmin.f32 %v2725, 1.0
        %v3750 = vmin.f32 %v2726, 1.0
        %v3751 = vmin.f32 %v2727, 1.0
        %v3752 = vmin.f32 %v2728, 1.0
        %v3753 = vmin.f32 %v2729, 1.0
        %v3754 = vmin.f32 %v2730, 1.0
        %v3755 = vmin.f32 %v2731, 1.0
        %v3756 = vmin.f32 %v2732, 1.0
        %v3757 = vmin.f32 %v2733, 1.0
        %v3758 = vmin.f32 %v2734, 1.0
        %v3759 = vmin.f32 %v2735, 1.0
        %v3760 = vmin.f32 %v2736, 1.0
        %v3761 = vmin.f32 %v2737, 1.0
        %v3762 = vmin.f32 %v2738, 1.0
        %v3763 = vmin.f32 %v2739, 1.0
        %v3764 = vmin.f32 %v2740, 1.0
        %v3765 = vmin.f32 %v2741, 1.0
        %v3766 = vmin.f32 %v2742, 1.0
        %v3767 = vmin.f32 %v2743, 1.0
        %v3768 = vmin.f32 %v2744, 1.0
        %v3769 = vmin.f32 %v2745, 1.0
        %v3770 = vmin.f32 %v2746, 1.0
        %v3771 = vmin.f32 %v2747, 1.0
        %v3772 = vmin.f32 %v2748, 1.0
        %v3773 = vmin.f32 %v2749, 1.0
        %v3774 = vmin.f32 %v2750, 1.0
        %v3775 = vmin.f32 %v2751, 1.0
        %v3776 = vmin.f32 %v2752, 1.0
        %v3777 = vmin.f32 %v2753, 1.0
        %v3778 = vmin.f32 %v2754, 1.0
        %v3779 = vmin.f32 %v2755, 1.0
        %v3780 = vmin.f32 %v2756, 1.0
        %v3781 = vmin.f32 %v2757, 1.0
        %v3782 = vmin.f32 %v2758, 1.0
        %v3783 = vmin.f32 %v2759, 1.0
        %v3784 = vmin.f32 %v2760, 1.0
        %v3785 = vmin.f32 %v2761, 1.0
        %v3786 = vmin.f32 %v2762, 1.0
        %v3787 = vmin.f32 %v2763, 1.0
        %v3788 = vmin.f32 %v2764, 1.0
        %v3789 = vmin.f32 %v2765, 1.0
        %v3790 = vmin.f32 %v2766, 1.0
        %v3791 = vmin.f32 %v2767, 1.0
        %v3792 = vmin.f32 %v2768, 1.0
        %v3793 = vmin.f32 %v2769, 1.0
        %v3794 = vmin.f32 %v2770, 1.0
        %v3795 = vmin.f32 %v2771, 1.0
        %v3796 = vmin.f32 %v2772, 1.0
        %v3797 = vmin.f32 %v2773, 1.0
        %v3798 = vmin.f32 %v2774, 1.0
        %v3799 = vmin.f32 %v2775, 1.0
        %v3800 = vmin.f32 %v2776, 1.0
        %v3801 = vmin.f32 %v2777, 1.0
        %v3802 = vmin.f32 %v2778, 1.0
        %v3803 = vmin.f32 %v2779, 1.0
        %v3804 = vmin.f32 %v2780, 1.0
        %v3805 = vmin.f32 %v2781, 1.0
        %v3806 = vmin.f32 %v2782, 1.0
        %v3807 = vmin.f32 %v2783, 1.0
        %v3808 = vmin.f32 %v2784, 1.0
        %v3809 = vmin.f32 %v2785, 1.0
        %v3810 = vmin.f32 %v2786, 1.0
        %v3811 = vmin.f32 %v2787, 1.0
        %v3812 = vmin.f32 %v2788, 1.0
        %v3813 = vmin.f32 %v2789, 1.0
        %v3814 = vmin.f32 %v2790, 1.0
        %v3815 = vmin.f32 %v2791, 1.0
        %v3816 = vmin.f32 %v2792, 1.0
        %v3817 = vmin.f32 %v2793, 1.0
        %v3818 = vmin.f32 %v2794, 1.0
        %v3819 = vmin.f32 %v2795, 1.0
        %v3820 = vmin.f32 %v2796, 1.0
        %v3821 = vmin.f32 %v2797, 1.0
        %v3822 = vmin.f32 %v2798, 1.0
        %v3823 = vmin.f32 %v2799, 1.0
        %v3824 = vmin.f32 %v2800, 1.0
        %v3825 = vmin.f32 %v2801, 1.0
        %v3826 = vmin.f32 %v2802, 1.0
        %v3827 = vmin.f32 %v2803, 1.0
        %v3828 = vmin.f32 %v2804, 1.0
        %v3829 = vmin.f32 %v2805, 1.0
        %v3830 = vmin.f32 %v2806, 1.0
        %v3831 = vmin.f32 %v2807, 1.0
        %v3832 = vmin.f32 %v2808, 1.0
        %v3833 = vmin.f32 %v2809, 1.0
        %v3834 = vmin.f32 %v2810, 1.0
        %v3835 = vmin.f32 %v2811, 1.0
        %v3836 = vmin.f32 %v2812, 1.0
        %v3837 = vmin.f32 %v2813, 1.0
        %v3838 = vmin.f32 %v2814, 1.0
        %v3839 = vmin.f32 %v2815, 1.0
        %v3840 = vmin.f32 %v2816, 1.0
        %v3841 = vmin.f32 %v2817, 1.0
        %v3842 = vmin.f32 %v2818, 1.0
        %v3843 = vmin.f32 %v2819, 1.0
        %v3844 = vmin.f32 %v2820, 1.0
        %v3845 = vmin.f32 %v2821, 1.0
        %v3846 = vmin.f32 %v2822, 1.0
        %v3847 = vmin.f32 %v2823, 1.0
        %v3848 = vmin.f32 %v2824, 1.0
        %v3849 = vmin.f32 %v2825, 1.0
        %v3850 = vmin.f32 %v2826, 1.0
        %v3851 = vmin.f32 %v2827, 1.0
        %v3852 = vmin.f32 %v2828, 1.0
        %v3853 = vmin.f32 %v2829, 1.0
        %v3854 = vmin.f32 %v2830, 1.0
        %v3855 = vmin.f32 %v2831, 1.0
        %v3856 = vmin.f32 %v2832, 1.0
        %v3857 = vmin.f32 %v2833, 1.0
        %v3858 = vmin.f32 %v2834, 1.0
        %v3859 = vmin.f32 %v2835, 1.0
        %v3860 = vmin.f32 %v2836, 1.0
        %v3861 = vmin.f32 %v2837, 1.0
        %v3862 = vmin.f32 %v2838, 1.0
        %v3863 = vmin.f32 %v2839, 1.0
        %v3864 = vmin.f32 %v2840, 1.0
        %v3865 = vmin.f32 %v2841, 1.0
        %v3866 = vmin.f32 %v2842, 1.0
        %v3867 = vmin.f32 %v2843, 1.0
        %v3868 = vmin.f32 %v2844, 1.0
        %v3869 = vmin.f32 %v2845, 1.0
        %v3870 = vmin.f32 %v2846, 1.0
        %v3871 = vmin.f32 %v2847, 1.0
        %v3872 = vmin.f32 %v2848, 1.0
        %v3873 = vmin.f32 %v2849, 1.0
        %v3874 = vmin.f32 %v2850, 1.0
        %v3875 = vmin.f32 %v2851, 1.0
        %v3876 = vmin.f32 %v2852, 1.0
        %v3877 = vmin.f32 %v2853, 1.0
        %v3878 = vmin.f32 %v2854, 1.0
        %v3879 = vmin.f32 %v2855, 1.0
        %v3880 = vmin.f32 %v2856, 1.0
        %v3881 = vmin.f32 %v2857, 1.0
        %v3882 = vmin.f32 %v2858, 1.0
        %v3883 = vmin.f32 %v2859, 1.0
        %v3884 = vmin.f32 %v2860, 1.0
        %v3885 = vmin.f32 %v2861, 1.0
        %v3886 = vmin.f32 %v2862, 1.0
        %v3887 = vmin.f32 %v2863, 1.0
        %v3888 = vmin.f32 %v2864, 1.0
        %v3889 = vmin.f32 %v2865, 1.0
        %v3890 = vmin.f32 %v2866, 1.0
        %v3891 = vmin.f32 %v2867, 1.0
        %v3892 = vmin.f32 %v2868, 1.0
        %v3893 = vmin.f32 %v2869, 1.0
        %v3894 = vmin.f32 %v2870, 1.0
        %v3895 = vmin.f32 %v2871, 1.0
        %v3896 = vmin.f32 %v2872, 1.0
        %v3897 = vmin.f32 %v2873, 1.0
        %v3898 = vmin.f32 %v2874, 1.0
        %v3899 = vmin.f32 %v2875, 1.0
        %v3900 = vmin.f32 %v2876, 1.0
        %v3901 = vmin.f32 %v2877, 1.0
        %v3902 = vmin.f32 %v2878, 1.0
        %v3903 = vmin.f32 %v2879, 1.0
        %v3904 = vmin.f32 %v2880, 1.0
        %v3905 = vmin.f32 %v2881, 1.0
        %v3906 = vmin.f32 %v2882, 1.0
        %v3907 = vmin.f32 %v2883, 1.0
        %v3908 = vmin.f32 %v2884, 1.0
        %v3909 = vmin.f32 %v2885, 1.0
        %v3910 = vmin.f32 %v2886, 1.0
        %v3911 = vmin.f32 %v2887, 1.0
        %v3912 = vmin.f32 %v2888, 1.0
        %v3913 = vmin.f32 %v2889, 1.0
        %v3914 = vmin.f32 %v2890, 1.0
        %v3915 = vmin.f32 %v2891, 1.0
        %v3916 = vmin.f32 %v2892, 1.0
        %v3917 = vmin.f32 %v2893, 1.0
        %v3918 = vmin.f32 %v2894, 1.0
        %v3919 = vmin.f32 %v2895, 1.0
        %v3920 = vmin.f32 %v2896, 1.0
        %v3921 = vmin.f32 %v2897, 1.0
        %v3922 = vmin.f32 %v2898, 1.0
        %v3923 = vmin.f32 %v2899, 1.0
        %v3924 = vmin.f32 %v2900, 1.0
        %v3925 = vmin.f32 %v2901, 1.0
        %v3926 = vmin.f32 %v2902, 1.0
        %v3927 = vmin.f32 %v2903, 1.0
        %v3928 = vmin.f32 %v2904, 1.0
        %v3929 = vmin.f32 %v2905, 1.0
        %v3930 = vmin.f32 %v2906, 1.0
        %v3931 = vmin.f32 %v2907, 1.0
        %v3932 = vmin.f32 %v2908, 1.0
        %v3933 = vmin.f32 %v2909, 1.0
        %v3934 = vmin.f32 %v2910, 1.0
        %v3935 = vmin.f32 %v2911, 1.0
        %v3936 = vmin.f32 %v2912, 1.0
        %v3937 = vmin.f32 %v2913, 1.0
        %v3938 = vmin.f32 %v2914, 1.0
        %v3939 = vmin.f32 %v2915, 1.0
        %v3940 = vmin.f32 %v2916, 1.0
        %v3941 = vmin.f32 %v2917, 1.0
        %v3942 = vmin.f32 %v2918, 1.0
        %v3943 = vmin.f32 %v2919, 1.0
        %v3944 = vmin.f32 %v2920, 1.0
        %v3945 = vmin.f32 %v2921, 1.0
        %v3946 = vmin.f32 %v2922, 1.0
        %v3947 = vmin.f32 %v2923, 1.0
        %v3948 = vmin.f32 %v2924, 1.0
        %v3949 = vmin.f32 %v2925, 1.0
        %v3950 = vmin.f32 %v2926, 1.0
        %v3951 = vmin.f32 %v2927, 1.0
        %v3952 = vmin.f32 %v2928, 1.0
        %v3953 = vmin.f32 %v2929, 1.0
        %v3954 = vmin.f32 %v2930, 1.0
        %v3955 = vmin.f32 %v2931, 1.0
        %v3956 = vmin.f32 %v2932, 1.0
        %v3957 = vmin.f32 %v2933, 1.0
        %v3958 = vmin.f32 %v2934, 1.0
        %v3959 = vmin.f32 %v2935, 1.0
        %v3960 = vmin.f32 %v2936, 1.0
        %v3961 = vmin.f32 %v2937, 1.0
        %v3962 = vmin.f32 %v2938, 1.0
        %v3963 = vmin.f32 %v2939, 1.0
        %v3964 = vmin.f32 %v2940, 1.0
        %v3965 = vmin.f32 %v2941, 1.0
        %v3966 = vmin.f32 %v2942, 1.0
        %v3967 = vmin.f32 %v2943, 1.0
        %v3968 = vmin.f32 %v2944, 1.0
        %v3969 = vmin.f32 %v2945, 1.0
        %v3970 = vmin.f32 %v2946, 1.0
        %v3971 = vmin.f32 %v2947, 1.0
        %v3972 = vmin.f32 %v2948, 1.0
        %v3973 = vmin.f32 %v2949, 1.0
        %v3974 = vmin.f32 %v2950, 1.0
        %v3975 = vmin.f32 %v2951, 1.0
        %v3976 = vmin.f32 %v2952, 1.0
        %v3977 = vmin.f32 %v2953, 1.0
        %v3978 = vmin.f32 %v2954, 1.0
        %v3979 = vmin.f32 %v2955, 1.0
        %v3980 = vmin.f32 %v2956, 1.0
        %v3981 = vmin.f32 %v2957, 1.0
        %v3982 = vmin.f32 %v2958, 1.0
        %v3983 = vmin.f32 %v2959, 1.0
        %v3984 = vmin.f32 %v2960, 1.0
        %v3985 = vmin.f32 %v2961, 1.0
        %v3986 = vmin.f32 %v2962, 1.0
        %v3987 = vmin.f32 %v2963, 1.0
        %v3988 = vmin.f32 %v2964, 1.0
        %v3989 = vmin.f32 %v2965, 1.0
        %v3990 = vmin.f32 %v2966, 1.0
        %v3991 = vmin.f32 %v2967, 1.0
        %v3992 = vmin.f32 %v2968, 1.0
        %v3993 = vmin.f32 %v2969, 1.0
        %v3994 = vmin.f32 %v2970, 1.0
        %v3995 = vmin.f32 %v2971, 1.0
        %v3996 = vmin.f32 %v2972, 1.0
        %v3997 = vmin.f32 %v2973, 1.0
        %v3998 = vmin.f32 %v2974, 1.0
        %v3999 = vmin.f32 %v2975, 1.0
        %v4000 = vmin.f32 %v2976, 1.0
        %v4001 = vmin.f32 %v2977, 1.0
        %v4002 = vmin.f32 %v2978, 1.0
        %v4003 = vmin.f32 %v2979, 1.0
        %v4004 = vmin.f32 %v2980, 1.0
        %v4005 = vmin.f32 %v2981, 1.0
        %v4006 = vmin.f32 %v2982, 1.0
        %v4007 = vmin.f32 %v2983, 1.0
        %v4008 = vmin.f32 %v2984, 1.0
        %v4009 = vmin.f32 %v2985, 1.0
        %v4010 = vmin.f32 %v2986, 1.0
        %v4011 = vmin.f32 %v2987, 1.0
        %v4012 = vmin.f32 %v2988, 1.0
        %v4013 = vmin.f32 %v2989, 1.0
        %v4014 = vmin.f32 %v2990, 1.0
        %v4015 = vmin.f32 %v2991, 1.0
        %v4016 = vmin.f32 %v2992, 1.0
        %v4017 = vmin.f32 %v2993, 1.0
        %v4018 = vmin.f32 %v2994, 1.0
        %v4019 = vmin.f32 %v2995, 1.0
        %v4020 = vmin.f32 %v2996, 1.0
        %v4021 = vmin.f32 %v2997, 1.0
        %v4022 = vmin.f32 %v2998, 1.0
        %v4023 = vmin.f32 %v2999, 1.0
        %v4024 = vmin.f32 %v3000, 1.0
        %v4025 = vmin.f32 %v3001, 1.0
        %v4026 = vmin.f32 %v3002, 1.0
        %v4027 = vmin.f32 %v3003, 1.0
        %v4028 = vmin.f32 %v3004, 1.0
        %v4029 = vmin.f32 %v3005, 1.0
        %v4030 = vmin.f32 %v3006, 1.0
        %v4031 = vmin.f32 %v3007, 1.0
        %v4032 = vmin.f32 %v3008, 1.0
        %v4033 = vmin.f32 %v3009, 1.0
        %v4034 = vmin.f32 %v3010, 1.0
        %v4035 = vmin.f32 %v3011, 1.0
        %v4036 = vmin.f32 %v3012, 1.0
        %v4037 = vmin.f32 %v3013, 1.0
        %v4038 = vmin.f32 %v3014, 1.0
        %v4039 = vmin.f32 %v3015, 1.0
        %v4040 = vmin.f32 %v3016, 1.0
        %v4041 = vmin.f32 %v3017, 1.0
        %v4042 = vmin.f32 %v3018, 1.0
        %v4043 = vmin.f32 %v3019, 1.0
        %v4044 = vmin.f32 %v3020, 1.0
        %v4045 = vmin.f32 %v3021, 1.0
        %v4046 = vmin.f32 %v3022, 1.0
        %v4047 = vmin.f32 %v3023, 1.0
        %v4048 = vmin.f32 %v3024, 1.0
        %v4049 = vmin.f32 %v3025, 1.0
        %v4050 = vmin.f32 %v3026, 1.0
        %v4051 = vmin.f32 %v3027, 1.0
        %v4052 = vmin.f32 %v3028, 1.0
        %v4053 = vmin.f32 %v3029, 1.0
        %v4054 = vmin.f32 %v3030, 1.0
        %v4055 = vmin.f32 %v3031, 1.0
        %v4056 = vmin.f32 %v3032, 1.0
        %v4057 = vmin.f32 %v3033, 1.0
        %v4058 = vmin.f32 %v3034, 1.0
        %v4059 = vmin.f32 %v3035, 1.0
        %v4060 = vmin.f32 %v3036, 1.0
        %v4061 = vmin.f32 %v3037, 1.0
        %v4062 = vmin.f32 %v3038, 1.0
        %v4063 = vmin.f32 %v3039, 1.0
        %v4064 = vmin.f32 %v3040, 1.0
        %v4065 = vmin.f32 %v3041, 1.0
        %v4066 = vmin.f32 %v3042, 1.0
        %v4067 = vmin.f32 %v3043, 1.0
        %v4068 = vmin.f32 %v3044, 1.0
        %v4069 = vmin.f32 %v3045, 1.0
        %v4070 = vmin.f32 %v3046, 1.0
        %v4071 = vmin.f32 %v3047, 1.0
        %v4072 = vmin.f32 %v3048, 1.0
        %v4073 = vmin.f32 %v3049, 1.0
        %v4074 = vmin.f32 %v3050, 1.0
        %v4075 = vmin.f32 %v3051, 1.0
        %v4076 = vmin.f32 %v3052, 1.0
        %v4077 = vmin.f32 %v3053, 1.0
        %v4078 = vmin.f32 %v3054, 1.0
        %v4079 = vmin.f32 %v3055, 1.0
        %v4080 = vmin.f32 %v3056, 1.0
        %v4081 = vmin.f32 %v3057, 1.0
        %v4082 = vmin.f32 %v3058, 1.0
        %v4083 = vmin.f32 %v3059, 1.0
        %v4084 = vmin.f32 %v3060, 1.0
        %v4085 = vmin.f32 %v3061, 1.0
        %v4086 = vmin.f32 %v3062, 1.0
        %v4087 = vmin.f32 %v3063, 1.0
        %v4088 = vmin.f32 %v3064, 1.0
        %v4089 = vmin.f32 %v3065, 1.0
        %v4090 = vmin.f32 %v3066, 1.0
        %v4091 = vmin.f32 %v3067, 1.0
        %v4092 = vmin.f32 %v3068, 1.0
        %v4093 = vmin.f32 %v3069, 1.0
        %v4094 = vmin.f32 %v3070, 1.0
        %v4095 = vmin.f32 %v3071, 1.0
        %v4096 = vmin.f32 %v3072, 1.0
        %v4097 = vmin.f32 %v3073, 1.0
        %v4098 = vmin.f32 %v3074, 1.0
        %v4099 = vmin.f32 %v3075, 1.0
        %v4100 = vmin.f32 %v3076, 1.0
        %v4101 = vmin.f32 %v3077, 1.0
        %v4102 = vmin.f32 %v3078, 1.0
        %v4103 = vmin.f32 %v3079, 1.0
        %v4104 = vmin.f32 %v3080, 1.0
        %v4105 = vmin.f32 %v3081, 1.0
        %v4106 = vmin.f32 %v3082, 1.0
        %v4107 = vmin.f32 %v3083, 1.0
        %v4108 = vmin.f32 %v3084, 1.0
        %v4109 = vmin.f32 %v3085, 1.0
        %v4110 = vmin.f32 %v3086, 1.0
        %v4111 = vmin.f32 %v3087, 1.0
        %v4112 = vmin.f32 %v3088, 1.0
        %v4113 = vmin.f32 %v3089, 1.0
        %v4114 = vmin.f32 %v3090, 1.0
        %v4115 = vmin.f32 %v3091, 1.0
        %v4116 = vmin.f32 %v3092, 1.0
        %v4117 = vmin.f32 %v3093, 1.0
        %v4118 = vmin.f32 %v3094, 1.0
        %v4119 = vmin.f32 %v3095, 1.0
        %v4120 = vmin.f32 %v3096, 1.0
        %v4121 = vmin.f32 %v3097, 1.0
        %v4122 = vmin.f32 %v3098, 1.0
        %v4123 = vmin.f32 %v3099, 1.0
        %v4124 = vmin.f32 %v3100, 1.0
        %v4125 = vmin.f32 %v3101, 1.0
        %v4126 = vmin.f32 %v3102, 1.0
        %v4127 = vmin.f32 %v3103, 1.0
        %v4128 = vmin.f32 %v3104, 1.0
        %v4129 = vmin.f32 %v3105, 1.0
        %v4130 = vmin.f32 %v3106, 1.0
        %v4131 = vmin.f32 %v3107, 1.0
        %v4132 = vmin.f32 %v3108, 1.0
        %v4133 = vmin.f32 %v3109, 1.0
        %v4134 = vmin.f32 %v3110, 1.0
        %v4135 = vmin.f32 %v3111, 1.0
        %v4136 = vmin.f32 %v3112, 1.0
        %v4137 = vmin.f32 %v3113, 1.0
        %v4138 = vmin.f32 %v3114, 1.0
        %v4139 = vmin.f32 %v3115, 1.0
        %v4140 = vmin.f32 %v3116, 1.0
        %v4141 = vmin.f32 %v3117, 1.0
        %v4142 = vmin.f32 %v3118, 1.0
        %v4143 = vmin.f32 %v3119, 1.0
        %v4144 = vmin.f32 %v3120, 1.0
        %v4145 = vmin.f32 %v3121, 1.0
        %v4146 = vmin.f32 %v3122, 1.0
        %v4147 = vmin.f32 %v3123, 1.0
        %v4148 = vmin.f32 %v3124, 1.0
        %v4149 = vmin.f32 %v3125, 1.0
        %v4150 = vmin.f32 %v3126, 1.0
        %v4151 = vmin.f32 %v3127, 1.0
        %v4152 = vmin.f32 %v3128, 1.0
        %v4153 = vmin.f32 %v3129, 1.0
        %v4154 = vmin.f32 %v3130, 1.0
        %v4155 = vmin.f32 %v3131, 1.0
        %v4156 = vmin.f32 %v3132, 1.0
        %v4157 = vmin.f32 %v3133, 1.0
        %v4158 = vmin.f32 %v3134, 1.0
        %v4159 = vmin.f32 %v3135, 1.0
        %v4160 = vmin.f32 %v3136, 1.0
        %v4161 = vmin.f32 %v3137, 1.0
        %v4162 = vmin.f32 %v3138, 1.0
        %v4163 = vmin.f32 %v3139, 1.0
        %v4164 = vmin.f32 %v3140, 1.0
        %v4165 = vmin.f32 %v3141, 1.0
        %v4166 = vmin.f32 %v3142, 1.0
        %v4167 = vmin.f32 %v3143, 1.0
        %v4168 = vmin.f32 %v3144, 1.0
        %v4169 = vmin.f32 %v3145, 1.0
        %v4170 = vmin.f32 %v3146, 1.0
        %v4171 = vmin.f32 %v3147, 1.0
        %v4172 = vmin.f32 %v3148, 1.0
        %v4173 = vmin.f32 %v3149, 1.0
        %v4174 = vmin.f32 %v3150, 1.0
        %v4175 = vmin.f32 %v3151, 1.0
        %v4176 = vmin.f32 %v3152, 1.0
        %v4177 = vmin.f32 %v3153, 1.0
        %v4178 = vmin.f32 %v3154, 1.0
        %v4179 = vmin.f32 %v3155, 1.0
        %v4180 = vmin.f32 %v3156, 1.0
        %v4181 = vmin.f32 %v3157, 1.0
        %v4182 = vmin.f32 %v3158, 1.0
        %v4183 = vmin.f32 %v3159, 1.0
        %v4184 = vmin.f32 %v3160, 1.0
        %v4185 = vmin.f32 %v3161, 1.0
        %v4186 = vmin.f32 %v3162, 1.0
        %v4187 = vmin.f32 %v3163, 1.0
        %v4188 = vmin.f32 %v3164, 1.0
        %v4189 = vmin.f32 %v3165, 1.0
        %v4190 = vmin.f32 %v3166, 1.0
        %v4191 = vmin.f32 %v3167, 1.0
        %v4192 = vmin.f32 %v3168, 1.0
        %v4193 = vmin.f32 %v3169, 1.0
        %v4194 = vmin.f32 %v3170, 1.0
        %v4195 = vmin.f32 %v3171, 1.0
        %v4196 = vmin.f32 %v3172, 1.0
        %v4197 = vmin.f32 %v3173, 1.0
        %v4198 = vmin.f32 %v3174, 1.0
        %v4199 = vmin.f32 %v3175, 1.0
        %v4200 = vmin.f32 %v3176, 1.0
        %v4201 = vmin.f32 %v3177, 1.0
        %v4202 = vmin.f32 %v3178, 1.0
        %v4203 = vmin.f32 %v3179, 1.0
        %v4204 = vmin.f32 %v3180, 1.0
        %v4205 = vmin.f32 %v3181, 1.0
        %v4206 = vmin.f32 %v3182, 1.0
        %v4207 = vmin.f32 %v3183, 1.0
        %v4208 = vmin.f32 %v3184, 1.0
        %v4209 = vmin.f32 %v3185, 1.0
        %v4210 = vmin.f32 %v3186, 1.0
        %v4211 = vmin.f32 %v3187, 1.0
        %v4212 = vmin.f32 %v3188, 1.0
        %v4213 = vmin.f32 %v3189, 1.0
        %v4214 = vmin.f32 %v3190, 1.0
        %v4215 = vmin.f32 %v3191, 1.0
        %v4216 = vmin.f32 %v3192, 1.0
        %v4217 = vmin.f32 %v3193, 1.0
        %v4218 = vmin.f32 %v3194, 1.0
        %v4219 = vmin.f32 %v3195, 1.0
        %v4220 = vmin.f32 %v3196, 1.0
        %v4221 = vmin.f32 %v3197, 1.0
        %v4222 = vmin.f32 %v3198, 1.0
        %v4223 = vmin.f32 %v3199, 1.0
        %v4224 = vmin.f32 %v3200, 1.0
        %v4225 = vmin.f32 %v3201, 1.0
        %v4226 = vmin.f32 %v3202, 1.0
        %v4227 = vmin.f32 %v3203, 1.0
        %v4228 = vmin.f32 %v3204, 1.0
        %v4229 = vmin.f32 %v3205, 1.0
        %v4230 = vmin.f32 %v3206, 1.0
        %v4231 = vmin.f32 %v3207, 1.0
        %v4232 = vmin.f32 %v3208, 1.0
        %v4233 = vmin.f32 %v3209, 1.0
        %v4234 = vmin.f32 %v3210, 1.0
        %v4235 = vmin.f32 %v3211, 1.0
        %4236 = vst [vmem:[%s137] sm:$0xff] %v3212
        %4237 = vst [vmem:[%s137 + $0x8] sm:$0xff] %v3213
        %4238 = vst [vmem:[%s137 + $0x10] sm:$0xff] %v3214
        %4239 = vst [vmem:[%s137 + $0x18] sm:$0xff] %v3215
        %4240 = vst [vmem:[%s137 + $0x20] sm:$0xff] %v3216
        %4241 = vst [vmem:[%s137 + $0x28] sm:$0xff] %v3217
        %4242 = vst [vmem:[%s137 + $0x30] sm:$0xff] %v3218
        %4243 = vst [vmem:[%s137 + $0x38] sm:$0xff] %v3219
        %4244 = vst [vmem:[%s137 + $0x40] sm:$0xff] %v3220
        %4245 = vst [vmem:[%s137 + $0x48] sm:$0xff] %v3221
        %4246 = vst [vmem:[%s137 + $0x50] sm:$0xff] %v3222
        %4247 = vst [vmem:[%s137 + $0x58] sm:$0xff] %v3223
        %4248 = vst [vmem:[%s137 + $0x60] sm:$0xff] %v3224
        %4249 = vst [vmem:[%s137 + $0x68] sm:$0xff] %v3225
        %4250 = vst [vmem:[%s137 + $0x70] sm:$0xff] %v3226
        %4251 = vst [vmem:[%s137 + $0x78] sm:$0xff] %v3227
        %4252 = vst [vmem:[%s137 + $0x80] sm:$0xff] %v3228
        %4253 = vst [vmem:[%s137 + $0x88] sm:$0xff] %v3229
        %4254 = vst [vmem:[%s137 + $0x90] sm:$0xff] %v3230
        %4255 = vst [vmem:[%s137 + $0x98] sm:$0xff] %v3231
        %4256 = vst [vmem:[%s137 + $0xa0] sm:$0xff] %v3232
        %4257 = vst [vmem:[%s137 + $0xa8] sm:$0xff] %v3233
        %4258 = vst [vmem:[%s137 + $0xb0] sm:$0xff] %v3234
        %4259 = vst [vmem:[%s137 + $0xb8] sm:$0xff] %v3235
        %4260 = vst [vmem:[%s137 + $0xc0] sm:$0xff] %v3236
        %4261 = vst [vmem:[%s137 + $0xc8] sm:$0xff] %v3237
        %4262 = vst [vmem:[%s137 + $0xd0] sm:$0xff] %v3238
        %4263 = vst [vmem:[%s137 + $0xd8] sm:$0xff] %v3239
        %4264 = vst [vmem:[%s137 + $0xe0] sm:$0xff] %v3240
        %4265 = vst [vmem:[%s137 + $0xe8] sm:$0xff] %v3241
        %4266 = vst [vmem:[%s137 + $0xf0] sm:$0xff] %v3242
        %4267 = vst [vmem:[%s137 + $0xf8] sm:$0xff] %v3243
        %4268 = vst [vmem:[%s137 + $0x100] sm:$0xff] %v3244
        %4269 = vst [vmem:[%s137 + $0x108] sm:$0xff] %v3245
        %4270 = vst [vmem:[%s137 + $0x110] sm:$0xff] %v3246
        %4271 = vst [vmem:[%s137 + $0x118] sm:$0xff] %v3247
        %4272 = vst [vmem:[%s137 + $0x120] sm:$0xff] %v3248
        %4273 = vst [vmem:[%s137 + $0x128] sm:$0xff] %v3249
        %4274 = vst [vmem:[%s137 + $0x130] sm:$0xff] %v3250
        %4275 = vst [vmem:[%s137 + $0x138] sm:$0xff] %v3251
        %4276 = vst [vmem:[%s137 + $0x140] sm:$0xff] %v3252
        %4277 = vst [vmem:[%s137 + $0x148] sm:$0xff] %v3253
        %4278 = vst [vmem:[%s137 + $0x150] sm:$0xff] %v3254
        %4279 = vst [vmem:[%s137 + $0x158] sm:$0xff] %v3255
        %4280 = vst [vmem:[%s137 + $0x160] sm:$0xff] %v3256
        %4281 = vst [vmem:[%s137 + $0x168] sm:$0xff] %v3257
        %4282 = vst [vmem:[%s137 + $0x170] sm:$0xff] %v3258
        %4283 = vst [vmem:[%s137 + $0x178] sm:$0xff] %v3259
        %4284 = vst [vmem:[%s137 + $0x180] sm:$0xff] %v3260
        %4285 = vst [vmem:[%s137 + $0x188] sm:$0xff] %v3261
        %4286 = vst [vmem:[%s137 + $0x190] sm:$0xff] %v3262
        %4287 = vst [vmem:[%s137 + $0x198] sm:$0xff] %v3263
        %4288 = vst [vmem:[%s137 + $0x1a0] sm:$0xff] %v3264
        %4289 = vst [vmem:[%s137 + $0x1a8] sm:$0xff] %v3265
        %4290 = vst [vmem:[%s137 + $0x1b0] sm:$0xff] %v3266
        %4291 = vst [vmem:[%s137 + $0x1b8] sm:$0xff] %v3267
        %4292 = vst [vmem:[%s137 + $0x1c0] sm:$0xff] %v3268
        %4293 = vst [vmem:[%s137 + $0x1c8] sm:$0xff] %v3269
        %4294 = vst [vmem:[%s137 + $0x1d0] sm:$0xff] %v3270
        %4295 = vst [vmem:[%s137 + $0x1d8] sm:$0xff] %v3271
        %4296 = vst [vmem:[%s137 + $0x1e0] sm:$0xff] %v3272
        %4297 = vst [vmem:[%s137 + $0x1e8] sm:$0xff] %v3273
        %4298 = vst [vmem:[%s137 + $0x1f0] sm:$0xff] %v3274
        %4299 = vst [vmem:[%s137 + $0x1f8] sm:$0xff] %v3275
        %4300 = vst [vmem:[%s137 + $0x200] sm:$0xff] %v3276
        %4301 = vst [vmem:[%s137 + $0x208] sm:$0xff] %v3277
        %4302 = vst [vmem:[%s137 + $0x210] sm:$0xff] %v3278
        %4303 = vst [vmem:[%s137 + $0x218] sm:$0xff] %v3279
        %4304 = vst [vmem:[%s137 + $0x220] sm:$0xff] %v3280
        %4305 = vst [vmem:[%s137 + $0x228] sm:$0xff] %v3281
        %4306 = vst [vmem:[%s137 + $0x230] sm:$0xff] %v3282
        %4307 = vst [vmem:[%s137 + $0x238] sm:$0xff] %v3283
        %4308 = vst [vmem:[%s137 + $0x240] sm:$0xff] %v3284
        %4309 = vst [vmem:[%s137 + $0x248] sm:$0xff] %v3285
        %4310 = vst [vmem:[%s137 + $0x250] sm:$0xff] %v3286
        %4311 = vst [vmem:[%s137 + $0x258] sm:$0xff] %v3287
        %4312 = vst [vmem:[%s137 + $0x260] sm:$0xff] %v3288
        %4313 = vst [vmem:[%s137 + $0x268] sm:$0xff] %v3289
        %4314 = vst [vmem:[%s137 + $0x270] sm:$0xff] %v3290
        %4315 = vst [vmem:[%s137 + $0x278] sm:$0xff] %v3291
        %4316 = vst [vmem:[%s137 + $0x280] sm:$0xff] %v3292
        %4317 = vst [vmem:[%s137 + $0x288] sm:$0xff] %v3293
        %4318 = vst [vmem:[%s137 + $0x290] sm:$0xff] %v3294
        %4319 = vst [vmem:[%s137 + $0x298] sm:$0xff] %v3295
        %4320 = vst [vmem:[%s137 + $0x2a0] sm:$0xff] %v3296
        %4321 = vst [vmem:[%s137 + $0x2a8] sm:$0xff] %v3297
        %4322 = vst [vmem:[%s137 + $0x2b0] sm:$0xff] %v3298
        %4323 = vst [vmem:[%s137 + $0x2b8] sm:$0xff] %v3299
        %4324 = vst [vmem:[%s137 + $0x2c0] sm:$0xff] %v3300
        %4325 = vst [vmem:[%s137 + $0x2c8] sm:$0xff] %v3301
        %4326 = vst [vmem:[%s137 + $0x2d0] sm:$0xff] %v3302
        %4327 = vst [vmem:[%s137 + $0x2d8] sm:$0xff] %v3303
        %4328 = vst [vmem:[%s137 + $0x2e0] sm:$0xff] %v3304
        %4329 = vst [vmem:[%s137 + $0x2e8] sm:$0xff] %v3305
        %4330 = vst [vmem:[%s137 + $0x2f0] sm:$0xff] %v3306
        %4331 = vst [vmem:[%s137 + $0x2f8] sm:$0xff] %v3307
        %4332 = vst [vmem:[%s137 + $0x300] sm:$0xff] %v3308
        %4333 = vst [vmem:[%s137 + $0x308] sm:$0xff] %v3309
        %4334 = vst [vmem:[%s137 + $0x310] sm:$0xff] %v3310
        %4335 = vst [vmem:[%s137 + $0x318] sm:$0xff] %v3311
        %4336 = vst [vmem:[%s137 + $0x320] sm:$0xff] %v3312
        %4337 = vst [vmem:[%s137 + $0x328] sm:$0xff] %v3313
        %4338 = vst [vmem:[%s137 + $0x330] sm:$0xff] %v3314
        %4339 = vst [vmem:[%s137 + $0x338] sm:$0xff] %v3315
        %4340 = vst [vmem:[%s137 + $0x340] sm:$0xff] %v3316
        %4341 = vst [vmem:[%s137 + $0x348] sm:$0xff] %v3317
        %4342 = vst [vmem:[%s137 + $0x350] sm:$0xff] %v3318
        %4343 = vst [vmem:[%s137 + $0x358] sm:$0xff] %v3319
        %4344 = vst [vmem:[%s137 + $0x360] sm:$0xff] %v3320
        %4345 = vst [vmem:[%s137 + $0x368] sm:$0xff] %v3321
        %4346 = vst [vmem:[%s137 + $0x370] sm:$0xff] %v3322
        %4347 = vst [vmem:[%s137 + $0x378] sm:$0xff] %v3323
        %4348 = vst [vmem:[%s137 + $0x380] sm:$0xff] %v3324
        %4349 = vst [vmem:[%s137 + $0x388] sm:$0xff] %v3325
        %4350 = vst [vmem:[%s137 + $0x390] sm:$0xff] %v3326
        %4351 = vst [vmem:[%s137 + $0x398] sm:$0xff] %v3327
        %4352 = vst [vmem:[%s137 + $0x3a0] sm:$0xff] %v3328
        %4353 = vst [vmem:[%s137 + $0x3a8] sm:$0xff] %v3329
        %4354 = vst [vmem:[%s137 + $0x3b0] sm:$0xff] %v3330
        %4355 = vst [vmem:[%s137 + $0x3b8] sm:$0xff] %v3331
        %4356 = vst [vmem:[%s137 + $0x3c0] sm:$0xff] %v3332
        %4357 = vst [vmem:[%s137 + $0x3c8] sm:$0xff] %v3333
        %4358 = vst [vmem:[%s137 + $0x3d0] sm:$0xff] %v3334
        %4359 = vst [vmem:[%s137 + $0x3d8] sm:$0xff] %v3335
        %4360 = vst [vmem:[%s137 + $0x3e0] sm:$0xff] %v3336
        %4361 = vst [vmem:[%s137 + $0x3e8] sm:$0xff] %v3337
        %4362 = vst [vmem:[%s137 + $0x3f0] sm:$0xff] %v3338
        %4363 = vst [vmem:[%s137 + $0x3f8] sm:$0xff] %v3339
        %4364 = vst [vmem:[%s137 + $0x400] sm:$0xff] %v3340
        %4365 = vst [vmem:[%s137 + $0x408] sm:$0xff] %v3341
        %4366 = vst [vmem:[%s137 + $0x410] sm:$0xff] %v3342
        %4367 = vst [vmem:[%s137 + $0x418] sm:$0xff] %v3343
        %4368 = vst [vmem:[%s137 + $0x420] sm:$0xff] %v3344
        %4369 = vst [vmem:[%s137 + $0x428] sm:$0xff] %v3345
        %4370 = vst [vmem:[%s137 + $0x430] sm:$0xff] %v3346
        %4371 = vst [vmem:[%s137 + $0x438] sm:$0xff] %v3347
        %4372 = vst [vmem:[%s137 + $0x440] sm:$0xff] %v3348
        %4373 = vst [vmem:[%s137 + $0x448] sm:$0xff] %v3349
        %4374 = vst [vmem:[%s137 + $0x450] sm:$0xff] %v3350
        %4375 = vst [vmem:[%s137 + $0x458] sm:$0xff] %v3351
        %4376 = vst [vmem:[%s137 + $0x460] sm:$0xff] %v3352
        %4377 = vst [vmem:[%s137 + $0x468] sm:$0xff] %v3353
        %4378 = vst [vmem:[%s137 + $0x470] sm:$0xff] %v3354
        %4379 = vst [vmem:[%s137 + $0x478] sm:$0xff] %v3355
        %4380 = vst [vmem:[%s137 + $0x480] sm:$0xff] %v3356
        %4381 = vst [vmem:[%s137 + $0x488] sm:$0xff] %v3357
        %4382 = vst [vmem:[%s137 + $0x490] sm:$0xff] %v3358
        %4383 = vst [vmem:[%s137 + $0x498] sm:$0xff] %v3359
        %4384 = vst [vmem:[%s137 + $0x4a0] sm:$0xff] %v3360
        %4385 = vst [vmem:[%s137 + $0x4a8] sm:$0xff] %v3361
        %4386 = vst [vmem:[%s137 + $0x4b0] sm:$0xff] %v3362
        %4387 = vst [vmem:[%s137 + $0x4b8] sm:$0xff] %v3363
        %4388 = vst [vmem:[%s137 + $0x4c0] sm:$0xff] %v3364
        %4389 = vst [vmem:[%s137 + $0x4c8] sm:$0xff] %v3365
        %4390 = vst [vmem:[%s137 + $0x4d0] sm:$0xff] %v3366
        %4391 = vst [vmem:[%s137 + $0x4d8] sm:$0xff] %v3367
        %4392 = vst [vmem:[%s137 + $0x4e0] sm:$0xff] %v3368
        %4393 = vst [vmem:[%s137 + $0x4e8] sm:$0xff] %v3369
        %4394 = vst [vmem:[%s137 + $0x4f0] sm:$0xff] %v3370
        %4395 = vst [vmem:[%s137 + $0x4f8] sm:$0xff] %v3371
        %4396 = vst [vmem:[%s137 + $0x500] sm:$0xff] %v3372
        %4397 = vst [vmem:[%s137 + $0x508] sm:$0xff] %v3373
        %4398 = vst [vmem:[%s137 + $0x510] sm:$0xff] %v3374
        %4399 = vst [vmem:[%s137 + $0x518] sm:$0xff] %v3375
        %4400 = vst [vmem:[%s137 + $0x520] sm:$0xff] %v3376
        %4401 = vst [vmem:[%s137 + $0x528] sm:$0xff] %v3377
        %4402 = vst [vmem:[%s137 + $0x530] sm:$0xff] %v3378
        %4403 = vst [vmem:[%s137 + $0x538] sm:$0xff] %v3379
        %4404 = vst [vmem:[%s137 + $0x540] sm:$0xff] %v3380
        %4405 = vst [vmem:[%s137 + $0x548] sm:$0xff] %v3381
        %4406 = vst [vmem:[%s137 + $0x550] sm:$0xff] %v3382
        %4407 = vst [vmem:[%s137 + $0x558] sm:$0xff] %v3383
        %4408 = vst [vmem:[%s137 + $0x560] sm:$0xff] %v3384
        %4409 = vst [vmem:[%s137 + $0x568] sm:$0xff] %v3385
        %4410 = vst [vmem:[%s137 + $0x570] sm:$0xff] %v3386
        %4411 = vst [vmem:[%s137 + $0x578] sm:$0xff] %v3387
        %4412 = vst [vmem:[%s137 + $0x580] sm:$0xff] %v3388
        %4413 = vst [vmem:[%s137 + $0x588] sm:$0xff] %v3389
        %4414 = vst [vmem:[%s137 + $0x590] sm:$0xff] %v3390
        %4415 = vst [vmem:[%s137 + $0x598] sm:$0xff] %v3391
        %4416 = vst [vmem:[%s137 + $0x5a0] sm:$0xff] %v3392
        %4417 = vst [vmem:[%s137 + $0x5a8] sm:$0xff] %v3393
        %4418 = vst [vmem:[%s137 + $0x5b0] sm:$0xff] %v3394
        %4419 = vst [vmem:[%s137 + $0x5b8] sm:$0xff] %v3395
        %4420 = vst [vmem:[%s137 + $0x5c0] sm:$0xff] %v3396
        %4421 = vst [vmem:[%s137 + $0x5c8] sm:$0xff] %v3397
        %4422 = vst [vmem:[%s137 + $0x5d0] sm:$0xff] %v3398
        %4423 = vst [vmem:[%s137 + $0x5d8] sm:$0xff] %v3399
        %4424 = vst [vmem:[%s137 + $0x5e0] sm:$0xff] %v3400
        %4425 = vst [vmem:[%s137 + $0x5e8] sm:$0xff] %v3401
        %4426 = vst [vmem:[%s137 + $0x5f0] sm:$0xff] %v3402
        %4427 = vst [vmem:[%s137 + $0x5f8] sm:$0xff] %v3403
        %4428 = vst [vmem:[%s137 + $0x600] sm:$0xff] %v3404
        %4429 = vst [vmem:[%s137 + $0x608] sm:$0xff] %v3405
        %4430 = vst [vmem:[%s137 + $0x610] sm:$0xff] %v3406
        %4431 = vst [vmem:[%s137 + $0x618] sm:$0xff] %v3407
        %4432 = vst [vmem:[%s137 + $0x620] sm:$0xff] %v3408
        %4433 = vst [vmem:[%s137 + $0x628] sm:$0xff] %v3409
        %4434 = vst [vmem:[%s137 + $0x630] sm:$0xff] %v3410
        %4435 = vst [vmem:[%s137 + $0x638] sm:$0xff] %v3411
        %4436 = vst [vmem:[%s137 + $0x640] sm:$0xff] %v3412
        %4437 = vst [vmem:[%s137 + $0x648] sm:$0xff] %v3413
        %4438 = vst [vmem:[%s137 + $0x650] sm:$0xff] %v3414
        %4439 = vst [vmem:[%s137 + $0x658] sm:$0xff] %v3415
        %4440 = vst [vmem:[%s137 + $0x660] sm:$0xff] %v3416
        %4441 = vst [vmem:[%s137 + $0x668] sm:$0xff] %v3417
        %4442 = vst [vmem:[%s137 + $0x670] sm:$0xff] %v3418
        %4443 = vst [vmem:[%s137 + $0x678] sm:$0xff] %v3419
        %4444 = vst [vmem:[%s137 + $0x680] sm:$0xff] %v3420
        %4445 = vst [vmem:[%s137 + $0x688] sm:$0xff] %v3421
        %4446 = vst [vmem:[%s137 + $0x690] sm:$0xff] %v3422
        %4447 = vst [vmem:[%s137 + $0x698] sm:$0xff] %v3423
        %4448 = vst [vmem:[%s137 + $0x6a0] sm:$0xff] %v3424
        %4449 = vst [vmem:[%s137 + $0x6a8] sm:$0xff] %v3425
        %4450 = vst [vmem:[%s137 + $0x6b0] sm:$0xff] %v3426
        %4451 = vst [vmem:[%s137 + $0x6b8] sm:$0xff] %v3427
        %4452 = vst [vmem:[%s137 + $0x6c0] sm:$0xff] %v3428
        %4453 = vst [vmem:[%s137 + $0x6c8] sm:$0xff] %v3429
        %4454 = vst [vmem:[%s137 + $0x6d0] sm:$0xff] %v3430
        %4455 = vst [vmem:[%s137 + $0x6d8] sm:$0xff] %v3431
        %4456 = vst [vmem:[%s137 + $0x6e0] sm:$0xff] %v3432
        %4457 = vst [vmem:[%s137 + $0x6e8] sm:$0xff] %v3433
        %4458 = vst [vmem:[%s137 + $0x6f0] sm:$0xff] %v3434
        %4459 = vst [vmem:[%s137 + $0x6f8] sm:$0xff] %v3435
        %4460 = vst [vmem:[%s137 + $0x700] sm:$0xff] %v3436
        %4461 = vst [vmem:[%s137 + $0x708] sm:$0xff] %v3437
        %4462 = vst [vmem:[%s137 + $0x710] sm:$0xff] %v3438
        %4463 = vst [vmem:[%s137 + $0x718] sm:$0xff] %v3439
        %4464 = vst [vmem:[%s137 + $0x720] sm:$0xff] %v3440
        %4465 = vst [vmem:[%s137 + $0x728] sm:$0xff] %v3441
        %4466 = vst [vmem:[%s137 + $0x730] sm:$0xff] %v3442
        %4467 = vst [vmem:[%s137 + $0x738] sm:$0xff] %v3443
        %4468 = vst [vmem:[%s137 + $0x740] sm:$0xff] %v3444
        %4469 = vst [vmem:[%s137 + $0x748] sm:$0xff] %v3445
        %4470 = vst [vmem:[%s137 + $0x750] sm:$0xff] %v3446
        %4471 = vst [vmem:[%s137 + $0x758] sm:$0xff] %v3447
        %4472 = vst [vmem:[%s137 + $0x760] sm:$0xff] %v3448
        %4473 = vst [vmem:[%s137 + $0x768] sm:$0xff] %v3449
        %4474 = vst [vmem:[%s137 + $0x770] sm:$0xff] %v3450
        %4475 = vst [vmem:[%s137 + $0x778] sm:$0xff] %v3451
        %4476 = vst [vmem:[%s137 + $0x780] sm:$0xff] %v3452
        %4477 = vst [vmem:[%s137 + $0x788] sm:$0xff] %v3453
        %4478 = vst [vmem:[%s137 + $0x790] sm:$0xff] %v3454
        %4479 = vst [vmem:[%s137 + $0x798] sm:$0xff] %v3455
        %4480 = vst [vmem:[%s137 + $0x7a0] sm:$0xff] %v3456
        %4481 = vst [vmem:[%s137 + $0x7a8] sm:$0xff] %v3457
        %4482 = vst [vmem:[%s137 + $0x7b0] sm:$0xff] %v3458
        %4483 = vst [vmem:[%s137 + $0x7b8] sm:$0xff] %v3459
        %4484 = vst [vmem:[%s137 + $0x7c0] sm:$0xff] %v3460
        %4485 = vst [vmem:[%s137 + $0x7c8] sm:$0xff] %v3461
        %4486 = vst [vmem:[%s137 + $0x7d0] sm:$0xff] %v3462
        %4487 = vst [vmem:[%s137 + $0x7d8] sm:$0xff] %v3463
        %4488 = vst [vmem:[%s137 + $0x7e0] sm:$0xff] %v3464
        %4489 = vst [vmem:[%s137 + $0x7e8] sm:$0xff] %v3465
        %4490 = vst [vmem:[%s137 + $0x7f0] sm:$0xff] %v3466
        %4491 = vst [vmem:[%s137 + $0x7f8] sm:$0xff] %v3467
        %4492 = vst [vmem:[%s137 + $0x800] sm:$0xff] %v3468
        %4493 = vst [vmem:[%s137 + $0x808] sm:$0xff] %v3469
        %4494 = vst [vmem:[%s137 + $0x810] sm:$0xff] %v3470
        %4495 = vst [vmem:[%s137 + $0x818] sm:$0xff] %v3471
        %4496 = vst [vmem:[%s137 + $0x820] sm:$0xff] %v3472
        %4497 = vst [vmem:[%s137 + $0x828] sm:$0xff] %v3473
        %4498 = vst [vmem:[%s137 + $0x830] sm:$0xff] %v3474
        %4499 = vst [vmem:[%s137 + $0x838] sm:$0xff] %v3475
        %4500 = vst [vmem:[%s137 + $0x840] sm:$0xff] %v3476
        %4501 = vst [vmem:[%s137 + $0x848] sm:$0xff] %v3477
        %4502 = vst [vmem:[%s137 + $0x850] sm:$0xff] %v3478
        %4503 = vst [vmem:[%s137 + $0x858] sm:$0xff] %v3479
        %4504 = vst [vmem:[%s137 + $0x860] sm:$0xff] %v3480
        %4505 = vst [vmem:[%s137 + $0x868] sm:$0xff] %v3481
        %4506 = vst [vmem:[%s137 + $0x870] sm:$0xff] %v3482
        %4507 = vst [vmem:[%s137 + $0x878] sm:$0xff] %v3483
        %4508 = vst [vmem:[%s137 + $0x880] sm:$0xff] %v3484
        %4509 = vst [vmem:[%s137 + $0x888] sm:$0xff] %v3485
        %4510 = vst [vmem:[%s137 + $0x890] sm:$0xff] %v3486
        %4511 = vst [vmem:[%s137 + $0x898] sm:$0xff] %v3487
        %4512 = vst [vmem:[%s137 + $0x8a0] sm:$0xff] %v3488
        %4513 = vst [vmem:[%s137 + $0x8a8] sm:$0xff] %v3489
        %4514 = vst [vmem:[%s137 + $0x8b0] sm:$0xff] %v3490
        %4515 = vst [vmem:[%s137 + $0x8b8] sm:$0xff] %v3491
        %4516 = vst [vmem:[%s137 + $0x8c0] sm:$0xff] %v3492
        %4517 = vst [vmem:[%s137 + $0x8c8] sm:$0xff] %v3493
        %4518 = vst [vmem:[%s137 + $0x8d0] sm:$0xff] %v3494
        %4519 = vst [vmem:[%s137 + $0x8d8] sm:$0xff] %v3495
        %4520 = vst [vmem:[%s137 + $0x8e0] sm:$0xff] %v3496
        %4521 = vst [vmem:[%s137 + $0x8e8] sm:$0xff] %v3497
        %4522 = vst [vmem:[%s137 + $0x8f0] sm:$0xff] %v3498
        %4523 = vst [vmem:[%s137 + $0x8f8] sm:$0xff] %v3499
        %4524 = vst [vmem:[%s137 + $0x900] sm:$0xff] %v3500
        %4525 = vst [vmem:[%s137 + $0x908] sm:$0xff] %v3501
        %4526 = vst [vmem:[%s137 + $0x910] sm:$0xff] %v3502
        %4527 = vst [vmem:[%s137 + $0x918] sm:$0xff] %v3503
        %4528 = vst [vmem:[%s137 + $0x920] sm:$0xff] %v3504
        %4529 = vst [vmem:[%s137 + $0x928] sm:$0xff] %v3505
        %4530 = vst [vmem:[%s137 + $0x930] sm:$0xff] %v3506
        %4531 = vst [vmem:[%s137 + $0x938] sm:$0xff] %v3507
        %4532 = vst [vmem:[%s137 + $0x940] sm:$0xff] %v3508
        %4533 = vst [vmem:[%s137 + $0x948] sm:$0xff] %v3509
        %4534 = vst [vmem:[%s137 + $0x950] sm:$0xff] %v3510
        %4535 = vst [vmem:[%s137 + $0x958] sm:$0xff] %v3511
        %4536 = vst [vmem:[%s137 + $0x960] sm:$0xff] %v3512
        %4537 = vst [vmem:[%s137 + $0x968] sm:$0xff] %v3513
        %4538 = vst [vmem:[%s137 + $0x970] sm:$0xff] %v3514
        %4539 = vst [vmem:[%s137 + $0x978] sm:$0xff] %v3515
        %4540 = vst [vmem:[%s137 + $0x980] sm:$0xff] %v3516
        %4541 = vst [vmem:[%s137 + $0x988] sm:$0xff] %v3517
        %4542 = vst [vmem:[%s137 + $0x990] sm:$0xff] %v3518
        %4543 = vst [vmem:[%s137 + $0x998] sm:$0xff] %v3519
        %4544 = vst [vmem:[%s137 + $0x9a0] sm:$0xff] %v3520
        %4545 = vst [vmem:[%s137 + $0x9a8] sm:$0xff] %v3521
        %4546 = vst [vmem:[%s137 + $0x9b0] sm:$0xff] %v3522
        %4547 = vst [vmem:[%s137 + $0x9b8] sm:$0xff] %v3523
        %4548 = vst [vmem:[%s137 + $0x9c0] sm:$0xff] %v3524
        %4549 = vst [vmem:[%s137 + $0x9c8] sm:$0xff] %v3525
        %4550 = vst [vmem:[%s137 + $0x9d0] sm:$0xff] %v3526
        %4551 = vst [vmem:[%s137 + $0x9d8] sm:$0xff] %v3527
        %4552 = vst [vmem:[%s137 + $0x9e0] sm:$0xff] %v3528
        %4553 = vst [vmem:[%s137 + $0x9e8] sm:$0xff] %v3529
        %4554 = vst [vmem:[%s137 + $0x9f0] sm:$0xff] %v3530
        %4555 = vst [vmem:[%s137 + $0x9f8] sm:$0xff] %v3531
        %4556 = vst [vmem:[%s137 + $0xa00] sm:$0xff] %v3532
        %4557 = vst [vmem:[%s137 + $0xa08] sm:$0xff] %v3533
        %4558 = vst [vmem:[%s137 + $0xa10] sm:$0xff] %v3534
        %4559 = vst [vmem:[%s137 + $0xa18] sm:$0xff] %v3535
        %4560 = vst [vmem:[%s137 + $0xa20] sm:$0xff] %v3536
        %4561 = vst [vmem:[%s137 + $0xa28] sm:$0xff] %v3537
        %4562 = vst [vmem:[%s137 + $0xa30] sm:$0xff] %v3538
        %4563 = vst [vmem:[%s137 + $0xa38] sm:$0xff] %v3539
        %4564 = vst [vmem:[%s137 + $0xa40] sm:$0xff] %v3540
        %4565 = vst [vmem:[%s137 + $0xa48] sm:$0xff] %v3541
        %4566 = vst [vmem:[%s137 + $0xa50] sm:$0xff] %v3542
        %4567 = vst [vmem:[%s137 + $0xa58] sm:$0xff] %v3543
        %4568 = vst [vmem:[%s137 + $0xa60] sm:$0xff] %v3544
        %4569 = vst [vmem:[%s137 + $0xa68] sm:$0xff] %v3545
        %4570 = vst [vmem:[%s137 + $0xa70] sm:$0xff] %v3546
        %4571 = vst [vmem:[%s137 + $0xa78] sm:$0xff] %v3547
        %4572 = vst [vmem:[%s137 + $0xa80] sm:$0xff] %v3548
        %4573 = vst [vmem:[%s137 + $0xa88] sm:$0xff] %v3549
        %4574 = vst [vmem:[%s137 + $0xa90] sm:$0xff] %v3550
        %4575 = vst [vmem:[%s137 + $0xa98] sm:$0xff] %v3551
        %4576 = vst [vmem:[%s137 + $0xaa0] sm:$0xff] %v3552
        %4577 = vst [vmem:[%s137 + $0xaa8] sm:$0xff] %v3553
        %4578 = vst [vmem:[%s137 + $0xab0] sm:$0xff] %v3554
        %4579 = vst [vmem:[%s137 + $0xab8] sm:$0xff] %v3555
        %4580 = vst [vmem:[%s137 + $0xac0] sm:$0xff] %v3556
        %4581 = vst [vmem:[%s137 + $0xac8] sm:$0xff] %v3557
        %4582 = vst [vmem:[%s137 + $0xad0] sm:$0xff] %v3558
        %4583 = vst [vmem:[%s137 + $0xad8] sm:$0xff] %v3559
        %4584 = vst [vmem:[%s137 + $0xae0] sm:$0xff] %v3560
        %4585 = vst [vmem:[%s137 + $0xae8] sm:$0xff] %v3561
        %4586 = vst [vmem:[%s137 + $0xaf0] sm:$0xff] %v3562
        %4587 = vst [vmem:[%s137 + $0xaf8] sm:$0xff] %v3563
        %4588 = vst [vmem:[%s137 + $0xb00] sm:$0xff] %v3564
        %4589 = vst [vmem:[%s137 + $0xb08] sm:$0xff] %v3565
        %4590 = vst [vmem:[%s137 + $0xb10] sm:$0xff] %v3566
        %4591 = vst [vmem:[%s137 + $0xb18] sm:$0xff] %v3567
        %4592 = vst [vmem:[%s137 + $0xb20] sm:$0xff] %v3568
        %4593 = vst [vmem:[%s137 + $0xb28] sm:$0xff] %v3569
        %4594 = vst [vmem:[%s137 + $0xb30] sm:$0xff] %v3570
        %4595 = vst [vmem:[%s137 + $0xb38] sm:$0xff] %v3571
        %4596 = vst [vmem:[%s137 + $0xb40] sm:$0xff] %v3572
        %4597 = vst [vmem:[%s137 + $0xb48] sm:$0xff] %v3573
        %4598 = vst [vmem:[%s137 + $0xb50] sm:$0xff] %v3574
        %4599 = vst [vmem:[%s137 + $0xb58] sm:$0xff] %v3575
        %4600 = vst [vmem:[%s137 + $0xb60] sm:$0xff] %v3576
        %4601 = vst [vmem:[%s137 + $0xb68] sm:$0xff] %v3577
        %4602 = vst [vmem:[%s137 + $0xb70] sm:$0xff] %v3578
        %4603 = vst [vmem:[%s137 + $0xb78] sm:$0xff] %v3579
        %4604 = vst [vmem:[%s137 + $0xb80] sm:$0xff] %v3580
        %4605 = vst [vmem:[%s137 + $0xb88] sm:$0xff] %v3581
        %4606 = vst [vmem:[%s137 + $0xb90] sm:$0xff] %v3582
        %4607 = vst [vmem:[%s137 + $0xb98] sm:$0xff] %v3583
        %4608 = vst [vmem:[%s137 + $0xba0] sm:$0xff] %v3584
        %4609 = vst [vmem:[%s137 + $0xba8] sm:$0xff] %v3585
        %4610 = vst [vmem:[%s137 + $0xbb0] sm:$0xff] %v3586
        %4611 = vst [vmem:[%s137 + $0xbb8] sm:$0xff] %v3587
        %4612 = vst [vmem:[%s137 + $0xbc0] sm:$0xff] %v3588
        %4613 = vst [vmem:[%s137 + $0xbc8] sm:$0xff] %v3589
        %4614 = vst [vmem:[%s137 + $0xbd0] sm:$0xff] %v3590
        %4615 = vst [vmem:[%s137 + $0xbd8] sm:$0xff] %v3591
        %4616 = vst [vmem:[%s137 + $0xbe0] sm:$0xff] %v3592
        %4617 = vst [vmem:[%s137 + $0xbe8] sm:$0xff] %v3593
        %4618 = vst [vmem:[%s137 + $0xbf0] sm:$0xff] %v3594
        %4619 = vst [vmem:[%s137 + $0xbf8] sm:$0xff] %v3595
        %4620 = vst [vmem:[%s137 + $0xc00] sm:$0xff] %v3596
        %4621 = vst [vmem:[%s137 + $0xc08] sm:$0xff] %v3597
        %4622 = vst [vmem:[%s137 + $0xc10] sm:$0xff] %v3598
        %4623 = vst [vmem:[%s137 + $0xc18] sm:$0xff] %v3599
        %4624 = vst [vmem:[%s137 + $0xc20] sm:$0xff] %v3600
        %4625 = vst [vmem:[%s137 + $0xc28] sm:$0xff] %v3601
        %4626 = vst [vmem:[%s137 + $0xc30] sm:$0xff] %v3602
        %4627 = vst [vmem:[%s137 + $0xc38] sm:$0xff] %v3603
        %4628 = vst [vmem:[%s137 + $0xc40] sm:$0xff] %v3604
        %4629 = vst [vmem:[%s137 + $0xc48] sm:$0xff] %v3605
        %4630 = vst [vmem:[%s137 + $0xc50] sm:$0xff] %v3606
        %4631 = vst [vmem:[%s137 + $0xc58] sm:$0xff] %v3607
        %4632 = vst [vmem:[%s137 + $0xc60] sm:$0xff] %v3608
        %4633 = vst [vmem:[%s137 + $0xc68] sm:$0xff] %v3609
        %4634 = vst [vmem:[%s137 + $0xc70] sm:$0xff] %v3610
        %4635 = vst [vmem:[%s137 + $0xc78] sm:$0xff] %v3611
        %4636 = vst [vmem:[%s137 + $0xc80] sm:$0xff] %v3612
        %4637 = vst [vmem:[%s137 + $0xc88] sm:$0xff] %v3613
        %4638 = vst [vmem:[%s137 + $0xc90] sm:$0xff] %v3614
        %4639 = vst [vmem:[%s137 + $0xc98] sm:$0xff] %v3615
        %4640 = vst [vmem:[%s137 + $0xca0] sm:$0xff] %v3616
        %4641 = vst [vmem:[%s137 + $0xca8] sm:$0xff] %v3617
        %4642 = vst [vmem:[%s137 + $0xcb0] sm:$0xff] %v3618
        %4643 = vst [vmem:[%s137 + $0xcb8] sm:$0xff] %v3619
        %4644 = vst [vmem:[%s137 + $0xcc0] sm:$0xff] %v3620
        %4645 = vst [vmem:[%s137 + $0xcc8] sm:$0xff] %v3621
        %4646 = vst [vmem:[%s137 + $0xcd0] sm:$0xff] %v3622
        %4647 = vst [vmem:[%s137 + $0xcd8] sm:$0xff] %v3623
        %4648 = vst [vmem:[%s137 + $0xce0] sm:$0xff] %v3624
        %4649 = vst [vmem:[%s137 + $0xce8] sm:$0xff] %v3625
        %4650 = vst [vmem:[%s137 + $0xcf0] sm:$0xff] %v3626
        %4651 = vst [vmem:[%s137 + $0xcf8] sm:$0xff] %v3627
        %4652 = vst [vmem:[%s137 + $0xd00] sm:$0xff] %v3628
        %4653 = vst [vmem:[%s137 + $0xd08] sm:$0xff] %v3629
        %4654 = vst [vmem:[%s137 + $0xd10] sm:$0xff] %v3630
        %4655 = vst [vmem:[%s137 + $0xd18] sm:$0xff] %v3631
        %4656 = vst [vmem:[%s137 + $0xd20] sm:$0xff] %v3632
        %4657 = vst [vmem:[%s137 + $0xd28] sm:$0xff] %v3633
        %4658 = vst [vmem:[%s137 + $0xd30] sm:$0xff] %v3634
        %4659 = vst [vmem:[%s137 + $0xd38] sm:$0xff] %v3635
        %4660 = vst [vmem:[%s137 + $0xd40] sm:$0xff] %v3636
        %4661 = vst [vmem:[%s137 + $0xd48] sm:$0xff] %v3637
        %4662 = vst [vmem:[%s137 + $0xd50] sm:$0xff] %v3638
        %4663 = vst [vmem:[%s137 + $0xd58] sm:$0xff] %v3639
        %4664 = vst [vmem:[%s137 + $0xd60] sm:$0xff] %v3640
        %4665 = vst [vmem:[%s137 + $0xd68] sm:$0xff] %v3641
        %4666 = vst [vmem:[%s137 + $0xd70] sm:$0xff] %v3642
        %4667 = vst [vmem:[%s137 + $0xd78] sm:$0xff] %v3643
        %4668 = vst [vmem:[%s137 + $0xd80] sm:$0xff] %v3644
        %4669 = vst [vmem:[%s137 + $0xd88] sm:$0xff] %v3645
        %4670 = vst [vmem:[%s137 + $0xd90] sm:$0xff] %v3646
        %4671 = vst [vmem:[%s137 + $0xd98] sm:$0xff] %v3647
        %4672 = vst [vmem:[%s137 + $0xda0] sm:$0xff] %v3648
        %4673 = vst [vmem:[%s137 + $0xda8] sm:$0xff] %v3649
        %4674 = vst [vmem:[%s137 + $0xdb0] sm:$0xff] %v3650
        %4675 = vst [vmem:[%s137 + $0xdb8] sm:$0xff] %v3651
        %4676 = vst [vmem:[%s137 + $0xdc0] sm:$0xff] %v3652
        %4677 = vst [vmem:[%s137 + $0xdc8] sm:$0xff] %v3653
        %4678 = vst [vmem:[%s137 + $0xdd0] sm:$0xff] %v3654
        %4679 = vst [vmem:[%s137 + $0xdd8] sm:$0xff] %v3655
        %4680 = vst [vmem:[%s137 + $0xde0] sm:$0xff] %v3656
        %4681 = vst [vmem:[%s137 + $0xde8] sm:$0xff] %v3657
        %4682 = vst [vmem:[%s137 + $0xdf0] sm:$0xff] %v3658
        %4683 = vst [vmem:[%s137 + $0xdf8] sm:$0xff] %v3659
        %4684 = vst [vmem:[%s137 + $0xe00] sm:$0xff] %v3660
        %4685 = vst [vmem:[%s137 + $0xe08] sm:$0xff] %v3661
        %4686 = vst [vmem:[%s137 + $0xe10] sm:$0xff] %v3662
        %4687 = vst [vmem:[%s137 + $0xe18] sm:$0xff] %v3663
        %4688 = vst [vmem:[%s137 + $0xe20] sm:$0xff] %v3664
        %4689 = vst [vmem:[%s137 + $0xe28] sm:$0xff] %v3665
        %4690 = vst [vmem:[%s137 + $0xe30] sm:$0xff] %v3666
        %4691 = vst [vmem:[%s137 + $0xe38] sm:$0xff] %v3667
        %4692 = vst [vmem:[%s137 + $0xe40] sm:$0xff] %v3668
        %4693 = vst [vmem:[%s137 + $0xe48] sm:$0xff] %v3669
        %4694 = vst [vmem:[%s137 + $0xe50] sm:$0xff] %v3670
        %4695 = vst [vmem:[%s137 + $0xe58] sm:$0xff] %v3671
        %4696 = vst [vmem:[%s137 + $0xe60] sm:$0xff] %v3672
        %4697 = vst [vmem:[%s137 + $0xe68] sm:$0xff] %v3673
        %4698 = vst [vmem:[%s137 + $0xe70] sm:$0xff] %v3674
        %4699 = vst [vmem:[%s137 + $0xe78] sm:$0xff] %v3675
        %4700 = vst [vmem:[%s137 + $0xe80] sm:$0xff] %v3676
        %4701 = vst [vmem:[%s137 + $0xe88] sm:$0xff] %v3677
        %4702 = vst [vmem:[%s137 + $0xe90] sm:$0xff] %v3678
        %4703 = vst [vmem:[%s137 + $0xe98] sm:$0xff] %v3679
        %4704 = vst [vmem:[%s137 + $0xea0] sm:$0xff] %v3680
        %4705 = vst [vmem:[%s137 + $0xea8] sm:$0xff] %v3681
        %4706 = vst [vmem:[%s137 + $0xeb0] sm:$0xff] %v3682
        %4707 = vst [vmem:[%s137 + $0xeb8] sm:$0xff] %v3683
        %4708 = vst [vmem:[%s137 + $0xec0] sm:$0xff] %v3684
        %4709 = vst [vmem:[%s137 + $0xec8] sm:$0xff] %v3685
        %4710 = vst [vmem:[%s137 + $0xed0] sm:$0xff] %v3686
        %4711 = vst [vmem:[%s137 + $0xed8] sm:$0xff] %v3687
        %4712 = vst [vmem:[%s137 + $0xee0] sm:$0xff] %v3688
        %4713 = vst [vmem:[%s137 + $0xee8] sm:$0xff] %v3689
        %4714 = vst [vmem:[%s137 + $0xef0] sm:$0xff] %v3690
        %4715 = vst [vmem:[%s137 + $0xef8] sm:$0xff] %v3691
        %4716 = vst [vmem:[%s137 + $0xf00] sm:$0xff] %v3692
        %4717 = vst [vmem:[%s137 + $0xf08] sm:$0xff] %v3693
        %4718 = vst [vmem:[%s137 + $0xf10] sm:$0xff] %v3694
        %4719 = vst [vmem:[%s137 + $0xf18] sm:$0xff] %v3695
        %4720 = vst [vmem:[%s137 + $0xf20] sm:$0xff] %v3696
        %4721 = vst [vmem:[%s137 + $0xf28] sm:$0xff] %v3697
        %4722 = vst [vmem:[%s137 + $0xf30] sm:$0xff] %v3698
        %4723 = vst [vmem:[%s137 + $0xf38] sm:$0xff] %v3699
        %4724 = vst [vmem:[%s137 + $0xf40] sm:$0xff] %v3700
        %4725 = vst [vmem:[%s137 + $0xf48] sm:$0xff] %v3701
        %4726 = vst [vmem:[%s137 + $0xf50] sm:$0xff] %v3702
        %4727 = vst [vmem:[%s137 + $0xf58] sm:$0xff] %v3703
        %4728 = vst [vmem:[%s137 + $0xf60] sm:$0xff] %v3704
        %4729 = vst [vmem:[%s137 + $0xf68] sm:$0xff] %v3705
        %4730 = vst [vmem:[%s137 + $0xf70] sm:$0xff] %v3706
        %4731 = vst [vmem:[%s137 + $0xf78] sm:$0xff] %v3707
        %4732 = vst [vmem:[%s137 + $0xf80] sm:$0xff] %v3708
        %4733 = vst [vmem:[%s137 + $0xf88] sm:$0xff] %v3709
        %4734 = vst [vmem:[%s137 + $0xf90] sm:$0xff] %v3710
        %4735 = vst [vmem:[%s137 + $0xf98] sm:$0xff] %v3711
        %4736 = vst [vmem:[%s137 + $0xfa0] sm:$0xff] %v3712
        %4737 = vst [vmem:[%s137 + $0xfa8] sm:$0xff] %v3713
        %4738 = vst [vmem:[%s137 + $0xfb0] sm:$0xff] %v3714
        %4739 = vst [vmem:[%s137 + $0xfb8] sm:$0xff] %v3715
        %4740 = vst [vmem:[%s137 + $0xfc0] sm:$0xff] %v3716
        %4741 = vst [vmem:[%s137 + $0xfc8] sm:$0xff] %v3717
        %4742 = vst [vmem:[%s137 + $0xfd0] sm:$0xff] %v3718
        %4743 = vst [vmem:[%s137 + $0xfd8] sm:$0xff] %v3719
        %4744 = vst [vmem:[%s137 + $0xfe0] sm:$0xff] %v3720
        %4745 = vst [vmem:[%s137 + $0xfe8] sm:$0xff] %v3721
        %4746 = vst [vmem:[%s137 + $0xff0] sm:$0xff] %v3722
        %4747 = vst [vmem:[%s137 + $0xff8] sm:$0xff] %v3723
        %4748 = vst [vmem:[%s137 + $0x1000] sm:$0xff] %v3724
        %4749 = vst [vmem:[%s137 + $0x1008] sm:$0xff] %v3725
        %4750 = vst [vmem:[%s137 + $0x1010] sm:$0xff] %v3726
        %4751 = vst [vmem:[%s137 + $0x1018] sm:$0xff] %v3727
        %4752 = vst [vmem:[%s137 + $0x1020] sm:$0xff] %v3728
        %4753 = vst [vmem:[%s137 + $0x1028] sm:$0xff] %v3729
        %4754 = vst [vmem:[%s137 + $0x1030] sm:$0xff] %v3730
        %4755 = vst [vmem:[%s137 + $0x1038] sm:$0xff] %v3731
        %4756 = vst [vmem:[%s137 + $0x1040] sm:$0xff] %v3732
        %4757 = vst [vmem:[%s137 + $0x1048] sm:$0xff] %v3733
        %4758 = vst [vmem:[%s137 + $0x1050] sm:$0xff] %v3734
        %4759 = vst [vmem:[%s137 + $0x1058] sm:$0xff] %v3735
        %4760 = vst [vmem:[%s137 + $0x1060] sm:$0xff] %v3736
        %4761 = vst [vmem:[%s137 + $0x1068] sm:$0xff] %v3737
        %4762 = vst [vmem:[%s137 + $0x1070] sm:$0xff] %v3738
        %4763 = vst [vmem:[%s137 + $0x1078] sm:$0xff] %v3739
        %4764 = vst [vmem:[%s137 + $0x1080] sm:$0xff] %v3740
        %4765 = vst [vmem:[%s137 + $0x1088] sm:$0xff] %v3741
        %4766 = vst [vmem:[%s137 + $0x1090] sm:$0xff] %v3742
        %4767 = vst [vmem:[%s137 + $0x1098] sm:$0xff] %v3743
        %4768 = vst [vmem:[%s137 + $0x10a0] sm:$0xff] %v3744
        %4769 = vst [vmem:[%s137 + $0x10a8] sm:$0xff] %v3745
        %4770 = vst [vmem:[%s137 + $0x10b0] sm:$0xff] %v3746
        %4771 = vst [vmem:[%s137 + $0x10b8] sm:$0xff] %v3747
        %4772 = vst [vmem:[%s137 + $0x10c0] sm:$0xff] %v3748
        %4773 = vst [vmem:[%s137 + $0x10c8] sm:$0xff] %v3749
        %4774 = vst [vmem:[%s137 + $0x10d0] sm:$0xff] %v3750
        %4775 = vst [vmem:[%s137 + $0x10d8] sm:$0xff] %v3751
        %4776 = vst [vmem:[%s137 + $0x10e0] sm:$0xff] %v3752
        %4777 = vst [vmem:[%s137 + $0x10e8] sm:$0xff] %v3753
        %4778 = vst [vmem:[%s137 + $0x10f0] sm:$0xff] %v3754
        %4779 = vst [vmem:[%s137 + $0x10f8] sm:$0xff] %v3755
        %4780 = vst [vmem:[%s137 + $0x1100] sm:$0xff] %v3756
        %4781 = vst [vmem:[%s137 + $0x1108] sm:$0xff] %v3757
        %4782 = vst [vmem:[%s137 + $0x1110] sm:$0xff] %v3758
        %4783 = vst [vmem:[%s137 + $0x1118] sm:$0xff] %v3759
        %4784 = vst [vmem:[%s137 + $0x1120] sm:$0xff] %v3760
        %4785 = vst [vmem:[%s137 + $0x1128] sm:$0xff] %v3761
        %4786 = vst [vmem:[%s137 + $0x1130] sm:$0xff] %v3762
        %4787 = vst [vmem:[%s137 + $0x1138] sm:$0xff] %v3763
        %4788 = vst [vmem:[%s137 + $0x1140] sm:$0xff] %v3764
        %4789 = vst [vmem:[%s137 + $0x1148] sm:$0xff] %v3765
        %4790 = vst [vmem:[%s137 + $0x1150] sm:$0xff] %v3766
        %4791 = vst [vmem:[%s137 + $0x1158] sm:$0xff] %v3767
        %4792 = vst [vmem:[%s137 + $0x1160] sm:$0xff] %v3768
        %4793 = vst [vmem:[%s137 + $0x1168] sm:$0xff] %v3769
        %4794 = vst [vmem:[%s137 + $0x1170] sm:$0xff] %v3770
        %4795 = vst [vmem:[%s137 + $0x1178] sm:$0xff] %v3771
        %4796 = vst [vmem:[%s137 + $0x1180] sm:$0xff] %v3772
        %4797 = vst [vmem:[%s137 + $0x1188] sm:$0xff] %v3773
        %4798 = vst [vmem:[%s137 + $0x1190] sm:$0xff] %v3774
        %4799 = vst [vmem:[%s137 + $0x1198] sm:$0xff] %v3775
        %4800 = vst [vmem:[%s137 + $0x11a0] sm:$0xff] %v3776
        %4801 = vst [vmem:[%s137 + $0x11a8] sm:$0xff] %v3777
        %4802 = vst [vmem:[%s137 + $0x11b0] sm:$0xff] %v3778
        %4803 = vst [vmem:[%s137 + $0x11b8] sm:$0xff] %v3779
        %4804 = vst [vmem:[%s137 + $0x11c0] sm:$0xff] %v3780
        %4805 = vst [vmem:[%s137 + $0x11c8] sm:$0xff] %v3781
        %4806 = vst [vmem:[%s137 + $0x11d0] sm:$0xff] %v3782
        %4807 = vst [vmem:[%s137 + $0x11d8] sm:$0xff] %v3783
        %4808 = vst [vmem:[%s137 + $0x11e0] sm:$0xff] %v3784
        %4809 = vst [vmem:[%s137 + $0x11e8] sm:$0xff] %v3785
        %4810 = vst [vmem:[%s137 + $0x11f0] sm:$0xff] %v3786
        %4811 = vst [vmem:[%s137 + $0x11f8] sm:$0xff] %v3787
        %4812 = vst [vmem:[%s137 + $0x1200] sm:$0xff] %v3788
        %4813 = vst [vmem:[%s137 + $0x1208] sm:$0xff] %v3789
        %4814 = vst [vmem:[%s137 + $0x1210] sm:$0xff] %v3790
        %4815 = vst [vmem:[%s137 + $0x1218] sm:$0xff] %v3791
        %4816 = vst [vmem:[%s137 + $0x1220] sm:$0xff] %v3792
        %4817 = vst [vmem:[%s137 + $0x1228] sm:$0xff] %v3793
        %4818 = vst [vmem:[%s137 + $0x1230] sm:$0xff] %v3794
        %4819 = vst [vmem:[%s137 + $0x1238] sm:$0xff] %v3795
        %4820 = vst [vmem:[%s137 + $0x1240] sm:$0xff] %v3796
        %4821 = vst [vmem:[%s137 + $0x1248] sm:$0xff] %v3797
        %4822 = vst [vmem:[%s137 + $0x1250] sm:$0xff] %v3798
        %4823 = vst [vmem:[%s137 + $0x1258] sm:$0xff] %v3799
        %4824 = vst [vmem:[%s137 + $0x1260] sm:$0xff] %v3800
        %4825 = vst [vmem:[%s137 + $0x1268] sm:$0xff] %v3801
        %4826 = vst [vmem:[%s137 + $0x1270] sm:$0xff] %v3802
        %4827 = vst [vmem:[%s137 + $0x1278] sm:$0xff] %v3803
        %4828 = vst [vmem:[%s137 + $0x1280] sm:$0xff] %v3804
        %4829 = vst [vmem:[%s137 + $0x1288] sm:$0xff] %v3805
        %4830 = vst [vmem:[%s137 + $0x1290] sm:$0xff] %v3806
        %4831 = vst [vmem:[%s137 + $0x1298] sm:$0xff] %v3807
        %4832 = vst [vmem:[%s137 + $0x12a0] sm:$0xff] %v3808
        %4833 = vst [vmem:[%s137 + $0x12a8] sm:$0xff] %v3809
        %4834 = vst [vmem:[%s137 + $0x12b0] sm:$0xff] %v3810
        %4835 = vst [vmem:[%s137 + $0x12b8] sm:$0xff] %v3811
        %4836 = vst [vmem:[%s137 + $0x12c0] sm:$0xff] %v3812
        %4837 = vst [vmem:[%s137 + $0x12c8] sm:$0xff] %v3813
        %4838 = vst [vmem:[%s137 + $0x12d0] sm:$0xff] %v3814
        %4839 = vst [vmem:[%s137 + $0x12d8] sm:$0xff] %v3815
        %4840 = vst [vmem:[%s137 + $0x12e0] sm:$0xff] %v3816
        %4841 = vst [vmem:[%s137 + $0x12e8] sm:$0xff] %v3817
        %4842 = vst [vmem:[%s137 + $0x12f0] sm:$0xff] %v3818
        %4843 = vst [vmem:[%s137 + $0x12f8] sm:$0xff] %v3819
        %4844 = vst [vmem:[%s137 + $0x1300] sm:$0xff] %v3820
        %4845 = vst [vmem:[%s137 + $0x1308] sm:$0xff] %v3821
        %4846 = vst [vmem:[%s137 + $0x1310] sm:$0xff] %v3822
        %4847 = vst [vmem:[%s137 + $0x1318] sm:$0xff] %v3823
        %4848 = vst [vmem:[%s137 + $0x1320] sm:$0xff] %v3824
        %4849 = vst [vmem:[%s137 + $0x1328] sm:$0xff] %v3825
        %4850 = vst [vmem:[%s137 + $0x1330] sm:$0xff] %v3826
        %4851 = vst [vmem:[%s137 + $0x1338] sm:$0xff] %v3827
        %4852 = vst [vmem:[%s137 + $0x1340] sm:$0xff] %v3828
        %4853 = vst [vmem:[%s137 + $0x1348] sm:$0xff] %v3829
        %4854 = vst [vmem:[%s137 + $0x1350] sm:$0xff] %v3830
        %4855 = vst [vmem:[%s137 + $0x1358] sm:$0xff] %v3831
        %4856 = vst [vmem:[%s137 + $0x1360] sm:$0xff] %v3832
        %4857 = vst [vmem:[%s137 + $0x1368] sm:$0xff] %v3833
        %4858 = vst [vmem:[%s137 + $0x1370] sm:$0xff] %v3834
        %4859 = vst [vmem:[%s137 + $0x1378] sm:$0xff] %v3835
        %4860 = vst [vmem:[%s137 + $0x1380] sm:$0xff] %v3836
        %4861 = vst [vmem:[%s137 + $0x1388] sm:$0xff] %v3837
        %4862 = vst [vmem:[%s137 + $0x1390] sm:$0xff] %v3838
        %4863 = vst [vmem:[%s137 + $0x1398] sm:$0xff] %v3839
        %4864 = vst [vmem:[%s137 + $0x13a0] sm:$0xff] %v3840
        %4865 = vst [vmem:[%s137 + $0x13a8] sm:$0xff] %v3841
        %4866 = vst [vmem:[%s137 + $0x13b0] sm:$0xff] %v3842
        %4867 = vst [vmem:[%s137 + $0x13b8] sm:$0xff] %v3843
        %4868 = vst [vmem:[%s137 + $0x13c0] sm:$0xff] %v3844
        %4869 = vst [vmem:[%s137 + $0x13c8] sm:$0xff] %v3845
        %4870 = vst [vmem:[%s137 + $0x13d0] sm:$0xff] %v3846
        %4871 = vst [vmem:[%s137 + $0x13d8] sm:$0xff] %v3847
        %4872 = vst [vmem:[%s137 + $0x13e0] sm:$0xff] %v3848
        %4873 = vst [vmem:[%s137 + $0x13e8] sm:$0xff] %v3849
        %4874 = vst [vmem:[%s137 + $0x13f0] sm:$0xff] %v3850
        %4875 = vst [vmem:[%s137 + $0x13f8] sm:$0xff] %v3851
        %4876 = vst [vmem:[%s137 + $0x1400] sm:$0xff] %v3852
        %4877 = vst [vmem:[%s137 + $0x1408] sm:$0xff] %v3853
        %4878 = vst [vmem:[%s137 + $0x1410] sm:$0xff] %v3854
        %4879 = vst [vmem:[%s137 + $0x1418] sm:$0xff] %v3855
        %4880 = vst [vmem:[%s137 + $0x1420] sm:$0xff] %v3856
        %4881 = vst [vmem:[%s137 + $0x1428] sm:$0xff] %v3857
        %4882 = vst [vmem:[%s137 + $0x1430] sm:$0xff] %v3858
        %4883 = vst [vmem:[%s137 + $0x1438] sm:$0xff] %v3859
        %4884 = vst [vmem:[%s137 + $0x1440] sm:$0xff] %v3860
        %4885 = vst [vmem:[%s137 + $0x1448] sm:$0xff] %v3861
        %4886 = vst [vmem:[%s137 + $0x1450] sm:$0xff] %v3862
        %4887 = vst [vmem:[%s137 + $0x1458] sm:$0xff] %v3863
        %4888 = vst [vmem:[%s137 + $0x1460] sm:$0xff] %v3864
        %4889 = vst [vmem:[%s137 + $0x1468] sm:$0xff] %v3865
        %4890 = vst [vmem:[%s137 + $0x1470] sm:$0xff] %v3866
        %4891 = vst [vmem:[%s137 + $0x1478] sm:$0xff] %v3867
        %4892 = vst [vmem:[%s137 + $0x1480] sm:$0xff] %v3868
        %4893 = vst [vmem:[%s137 + $0x1488] sm:$0xff] %v3869
        %4894 = vst [vmem:[%s137 + $0x1490] sm:$0xff] %v3870
        %4895 = vst [vmem:[%s137 + $0x1498] sm:$0xff] %v3871
        %4896 = vst [vmem:[%s137 + $0x14a0] sm:$0xff] %v3872
        %4897 = vst [vmem:[%s137 + $0x14a8] sm:$0xff] %v3873
        %4898 = vst [vmem:[%s137 + $0x14b0] sm:$0xff] %v3874
        %4899 = vst [vmem:[%s137 + $0x14b8] sm:$0xff] %v3875
        %4900 = vst [vmem:[%s137 + $0x14c0] sm:$0xff] %v3876
        %4901 = vst [vmem:[%s137 + $0x14c8] sm:$0xff] %v3877
        %4902 = vst [vmem:[%s137 + $0x14d0] sm:$0xff] %v3878
        %4903 = vst [vmem:[%s137 + $0x14d8] sm:$0xff] %v3879
        %4904 = vst [vmem:[%s137 + $0x14e0] sm:$0xff] %v3880
        %4905 = vst [vmem:[%s137 + $0x14e8] sm:$0xff] %v3881
        %4906 = vst [vmem:[%s137 + $0x14f0] sm:$0xff] %v3882
        %4907 = vst [vmem:[%s137 + $0x14f8] sm:$0xff] %v3883
        %4908 = vst [vmem:[%s137 + $0x1500] sm:$0xff] %v3884
        %4909 = vst [vmem:[%s137 + $0x1508] sm:$0xff] %v3885
        %4910 = vst [vmem:[%s137 + $0x1510] sm:$0xff] %v3886
        %4911 = vst [vmem:[%s137 + $0x1518] sm:$0xff] %v3887
        %4912 = vst [vmem:[%s137 + $0x1520] sm:$0xff] %v3888
        %4913 = vst [vmem:[%s137 + $0x1528] sm:$0xff] %v3889
        %4914 = vst [vmem:[%s137 + $0x1530] sm:$0xff] %v3890
        %4915 = vst [vmem:[%s137 + $0x1538] sm:$0xff] %v3891
        %4916 = vst [vmem:[%s137 + $0x1540] sm:$0xff] %v3892
        %4917 = vst [vmem:[%s137 + $0x1548] sm:$0xff] %v3893
        %4918 = vst [vmem:[%s137 + $0x1550] sm:$0xff] %v3894
        %4919 = vst [vmem:[%s137 + $0x1558] sm:$0xff] %v3895
        %4920 = vst [vmem:[%s137 + $0x1560] sm:$0xff] %v3896
        %4921 = vst [vmem:[%s137 + $0x1568] sm:$0xff] %v3897
        %4922 = vst [vmem:[%s137 + $0x1570] sm:$0xff] %v3898
        %4923 = vst [vmem:[%s137 + $0x1578] sm:$0xff] %v3899
        %4924 = vst [vmem:[%s137 + $0x1580] sm:$0xff] %v3900
        %4925 = vst [vmem:[%s137 + $0x1588] sm:$0xff] %v3901
        %4926 = vst [vmem:[%s137 + $0x1590] sm:$0xff] %v3902
        %4927 = vst [vmem:[%s137 + $0x1598] sm:$0xff] %v3903
        %4928 = vst [vmem:[%s137 + $0x15a0] sm:$0xff] %v3904
        %4929 = vst [vmem:[%s137 + $0x15a8] sm:$0xff] %v3905
        %4930 = vst [vmem:[%s137 + $0x15b0] sm:$0xff] %v3906
        %4931 = vst [vmem:[%s137 + $0x15b8] sm:$0xff] %v3907
        %4932 = vst [vmem:[%s137 + $0x15c0] sm:$0xff] %v3908
        %4933 = vst [vmem:[%s137 + $0x15c8] sm:$0xff] %v3909
        %4934 = vst [vmem:[%s137 + $0x15d0] sm:$0xff] %v3910
        %4935 = vst [vmem:[%s137 + $0x15d8] sm:$0xff] %v3911
        %4936 = vst [vmem:[%s137 + $0x15e0] sm:$0xff] %v3912
        %4937 = vst [vmem:[%s137 + $0x15e8] sm:$0xff] %v3913
        %4938 = vst [vmem:[%s137 + $0x15f0] sm:$0xff] %v3914
        %4939 = vst [vmem:[%s137 + $0x15f8] sm:$0xff] %v3915
        %4940 = vst [vmem:[%s137 + $0x1600] sm:$0xff] %v3916
        %4941 = vst [vmem:[%s137 + $0x1608] sm:$0xff] %v3917
        %4942 = vst [vmem:[%s137 + $0x1610] sm:$0xff] %v3918
        %4943 = vst [vmem:[%s137 + $0x1618] sm:$0xff] %v3919
        %4944 = vst [vmem:[%s137 + $0x1620] sm:$0xff] %v3920
        %4945 = vst [vmem:[%s137 + $0x1628] sm:$0xff] %v3921
        %4946 = vst [vmem:[%s137 + $0x1630] sm:$0xff] %v3922
        %4947 = vst [vmem:[%s137 + $0x1638] sm:$0xff] %v3923
        %4948 = vst [vmem:[%s137 + $0x1640] sm:$0xff] %v3924
        %4949 = vst [vmem:[%s137 + $0x1648] sm:$0xff] %v3925
        %4950 = vst [vmem:[%s137 + $0x1650] sm:$0xff] %v3926
        %4951 = vst [vmem:[%s137 + $0x1658] sm:$0xff] %v3927
        %4952 = vst [vmem:[%s137 + $0x1660] sm:$0xff] %v3928
        %4953 = vst [vmem:[%s137 + $0x1668] sm:$0xff] %v3929
        %4954 = vst [vmem:[%s137 + $0x1670] sm:$0xff] %v3930
        %4955 = vst [vmem:[%s137 + $0x1678] sm:$0xff] %v3931
        %4956 = vst [vmem:[%s137 + $0x1680] sm:$0xff] %v3932
        %4957 = vst [vmem:[%s137 + $0x1688] sm:$0xff] %v3933
        %4958 = vst [vmem:[%s137 + $0x1690] sm:$0xff] %v3934
        %4959 = vst [vmem:[%s137 + $0x1698] sm:$0xff] %v3935
        %4960 = vst [vmem:[%s137 + $0x16a0] sm:$0xff] %v3936
        %4961 = vst [vmem:[%s137 + $0x16a8] sm:$0xff] %v3937
        %4962 = vst [vmem:[%s137 + $0x16b0] sm:$0xff] %v3938
        %4963 = vst [vmem:[%s137 + $0x16b8] sm:$0xff] %v3939
        %4964 = vst [vmem:[%s137 + $0x16c0] sm:$0xff] %v3940
        %4965 = vst [vmem:[%s137 + $0x16c8] sm:$0xff] %v3941
        %4966 = vst [vmem:[%s137 + $0x16d0] sm:$0xff] %v3942
        %4967 = vst [vmem:[%s137 + $0x16d8] sm:$0xff] %v3943
        %4968 = vst [vmem:[%s137 + $0x16e0] sm:$0xff] %v3944
        %4969 = vst [vmem:[%s137 + $0x16e8] sm:$0xff] %v3945
        %4970 = vst [vmem:[%s137 + $0x16f0] sm:$0xff] %v3946
        %4971 = vst [vmem:[%s137 + $0x16f8] sm:$0xff] %v3947
        %4972 = vst [vmem:[%s137 + $0x1700] sm:$0xff] %v3948
        %4973 = vst [vmem:[%s137 + $0x1708] sm:$0xff] %v3949
        %4974 = vst [vmem:[%s137 + $0x1710] sm:$0xff] %v3950
        %4975 = vst [vmem:[%s137 + $0x1718] sm:$0xff] %v3951
        %4976 = vst [vmem:[%s137 + $0x1720] sm:$0xff] %v3952
        %4977 = vst [vmem:[%s137 + $0x1728] sm:$0xff] %v3953
        %4978 = vst [vmem:[%s137 + $0x1730] sm:$0xff] %v3954
        %4979 = vst [vmem:[%s137 + $0x1738] sm:$0xff] %v3955
        %4980 = vst [vmem:[%s137 + $0x1740] sm:$0xff] %v3956
        %4981 = vst [vmem:[%s137 + $0x1748] sm:$0xff] %v3957
        %4982 = vst [vmem:[%s137 + $0x1750] sm:$0xff] %v3958
        %4983 = vst [vmem:[%s137 + $0x1758] sm:$0xff] %v3959
        %4984 = vst [vmem:[%s137 + $0x1760] sm:$0xff] %v3960
        %4985 = vst [vmem:[%s137 + $0x1768] sm:$0xff] %v3961
        %4986 = vst [vmem:[%s137 + $0x1770] sm:$0xff] %v3962
        %4987 = vst [vmem:[%s137 + $0x1778] sm:$0xff] %v3963
        %4988 = vst [vmem:[%s137 + $0x1780] sm:$0xff] %v3964
        %4989 = vst [vmem:[%s137 + $0x1788] sm:$0xff] %v3965
        %4990 = vst [vmem:[%s137 + $0x1790] sm:$0xff] %v3966
        %4991 = vst [vmem:[%s137 + $0x1798] sm:$0xff] %v3967
        %4992 = vst [vmem:[%s137 + $0x17a0] sm:$0xff] %v3968
        %4993 = vst [vmem:[%s137 + $0x17a8] sm:$0xff] %v3969
        %4994 = vst [vmem:[%s137 + $0x17b0] sm:$0xff] %v3970
        %4995 = vst [vmem:[%s137 + $0x17b8] sm:$0xff] %v3971
        %4996 = vst [vmem:[%s137 + $0x17c0] sm:$0xff] %v3972
        %4997 = vst [vmem:[%s137 + $0x17c8] sm:$0xff] %v3973
        %4998 = vst [vmem:[%s137 + $0x17d0] sm:$0xff] %v3974
        %4999 = vst [vmem:[%s137 + $0x17d8] sm:$0xff] %v3975
        %5000 = vst [vmem:[%s137 + $0x17e0] sm:$0xff] %v3976
        %5001 = vst [vmem:[%s137 + $0x17e8] sm:$0xff] %v3977
        %5002 = vst [vmem:[%s137 + $0x17f0] sm:$0xff] %v3978
        %5003 = vst [vmem:[%s137 + $0x17f8] sm:$0xff] %v3979
        %5004 = vst [vmem:[%s137 + $0x1800] sm:$0xff] %v3980
        %5005 = vst [vmem:[%s137 + $0x1808] sm:$0xff] %v3981
        %5006 = vst [vmem:[%s137 + $0x1810] sm:$0xff] %v3982
        %5007 = vst [vmem:[%s137 + $0x1818] sm:$0xff] %v3983
        %5008 = vst [vmem:[%s137 + $0x1820] sm:$0xff] %v3984
        %5009 = vst [vmem:[%s137 + $0x1828] sm:$0xff] %v3985
        %5010 = vst [vmem:[%s137 + $0x1830] sm:$0xff] %v3986
        %5011 = vst [vmem:[%s137 + $0x1838] sm:$0xff] %v3987
        %5012 = vst [vmem:[%s137 + $0x1840] sm:$0xff] %v3988
        %5013 = vst [vmem:[%s137 + $0x1848] sm:$0xff] %v3989
        %5014 = vst [vmem:[%s137 + $0x1850] sm:$0xff] %v3990
        %5015 = vst [vmem:[%s137 + $0x1858] sm:$0xff] %v3991
        %5016 = vst [vmem:[%s137 + $0x1860] sm:$0xff] %v3992
        %5017 = vst [vmem:[%s137 + $0x1868] sm:$0xff] %v3993
        %5018 = vst [vmem:[%s137 + $0x1870] sm:$0xff] %v3994
        %5019 = vst [vmem:[%s137 + $0x1878] sm:$0xff] %v3995
        %5020 = vst [vmem:[%s137 + $0x1880] sm:$0xff] %v3996
        %5021 = vst [vmem:[%s137 + $0x1888] sm:$0xff] %v3997
        %5022 = vst [vmem:[%s137 + $0x1890] sm:$0xff] %v3998
        %5023 = vst [vmem:[%s137 + $0x1898] sm:$0xff] %v3999
        %5024 = vst [vmem:[%s137 + $0x18a0] sm:$0xff] %v4000
        %5025 = vst [vmem:[%s137 + $0x18a8] sm:$0xff] %v4001
        %5026 = vst [vmem:[%s137 + $0x18b0] sm:$0xff] %v4002
        %5027 = vst [vmem:[%s137 + $0x18b8] sm:$0xff] %v4003
        %5028 = vst [vmem:[%s137 + $0x18c0] sm:$0xff] %v4004
        %5029 = vst [vmem:[%s137 + $0x18c8] sm:$0xff] %v4005
        %5030 = vst [vmem:[%s137 + $0x18d0] sm:$0xff] %v4006
        %5031 = vst [vmem:[%s137 + $0x18d8] sm:$0xff] %v4007
        %5032 = vst [vmem:[%s137 + $0x18e0] sm:$0xff] %v4008
        %5033 = vst [vmem:[%s137 + $0x18e8] sm:$0xff] %v4009
        %5034 = vst [vmem:[%s137 + $0x18f0] sm:$0xff] %v4010
        %5035 = vst [vmem:[%s137 + $0x18f8] sm:$0xff] %v4011
        %5036 = vst [vmem:[%s137 + $0x1900] sm:$0xff] %v4012
        %5037 = vst [vmem:[%s137 + $0x1908] sm:$0xff] %v4013
        %5038 = vst [vmem:[%s137 + $0x1910] sm:$0xff] %v4014
        %5039 = vst [vmem:[%s137 + $0x1918] sm:$0xff] %v4015
        %5040 = vst [vmem:[%s137 + $0x1920] sm:$0xff] %v4016
        %5041 = vst [vmem:[%s137 + $0x1928] sm:$0xff] %v4017
        %5042 = vst [vmem:[%s137 + $0x1930] sm:$0xff] %v4018
        %5043 = vst [vmem:[%s137 + $0x1938] sm:$0xff] %v4019
        %5044 = vst [vmem:[%s137 + $0x1940] sm:$0xff] %v4020
        %5045 = vst [vmem:[%s137 + $0x1948] sm:$0xff] %v4021
        %5046 = vst [vmem:[%s137 + $0x1950] sm:$0xff] %v4022
        %5047 = vst [vmem:[%s137 + $0x1958] sm:$0xff] %v4023
        %5048 = vst [vmem:[%s137 + $0x1960] sm:$0xff] %v4024
        %5049 = vst [vmem:[%s137 + $0x1968] sm:$0xff] %v4025
        %5050 = vst [vmem:[%s137 + $0x1970] sm:$0xff] %v4026
        %5051 = vst [vmem:[%s137 + $0x1978] sm:$0xff] %v4027
        %5052 = vst [vmem:[%s137 + $0x1980] sm:$0xff] %v4028
        %5053 = vst [vmem:[%s137 + $0x1988] sm:$0xff] %v4029
        %5054 = vst [vmem:[%s137 + $0x1990] sm:$0xff] %v4030
        %5055 = vst [vmem:[%s137 + $0x1998] sm:$0xff] %v4031
        %5056 = vst [vmem:[%s137 + $0x19a0] sm:$0xff] %v4032
        %5057 = vst [vmem:[%s137 + $0x19a8] sm:$0xff] %v4033
        %5058 = vst [vmem:[%s137 + $0x19b0] sm:$0xff] %v4034
        %5059 = vst [vmem:[%s137 + $0x19b8] sm:$0xff] %v4035
        %5060 = vst [vmem:[%s137 + $0x19c0] sm:$0xff] %v4036
        %5061 = vst [vmem:[%s137 + $0x19c8] sm:$0xff] %v4037
        %5062 = vst [vmem:[%s137 + $0x19d0] sm:$0xff] %v4038
        %5063 = vst [vmem:[%s137 + $0x19d8] sm:$0xff] %v4039
        %5064 = vst [vmem:[%s137 + $0x19e0] sm:$0xff] %v4040
        %5065 = vst [vmem:[%s137 + $0x19e8] sm:$0xff] %v4041
        %5066 = vst [vmem:[%s137 + $0x19f0] sm:$0xff] %v4042
        %5067 = vst [vmem:[%s137 + $0x19f8] sm:$0xff] %v4043
        %5068 = vst [vmem:[%s137 + $0x1a00] sm:$0xff] %v4044
        %5069 = vst [vmem:[%s137 + $0x1a08] sm:$0xff] %v4045
        %5070 = vst [vmem:[%s137 + $0x1a10] sm:$0xff] %v4046
        %5071 = vst [vmem:[%s137 + $0x1a18] sm:$0xff] %v4047
        %5072 = vst [vmem:[%s137 + $0x1a20] sm:$0xff] %v4048
        %5073 = vst [vmem:[%s137 + $0x1a28] sm:$0xff] %v4049
        %5074 = vst [vmem:[%s137 + $0x1a30] sm:$0xff] %v4050
        %5075 = vst [vmem:[%s137 + $0x1a38] sm:$0xff] %v4051
        %5076 = vst [vmem:[%s137 + $0x1a40] sm:$0xff] %v4052
        %5077 = vst [vmem:[%s137 + $0x1a48] sm:$0xff] %v4053
        %5078 = vst [vmem:[%s137 + $0x1a50] sm:$0xff] %v4054
        %5079 = vst [vmem:[%s137 + $0x1a58] sm:$0xff] %v4055
        %5080 = vst [vmem:[%s137 + $0x1a60] sm:$0xff] %v4056
        %5081 = vst [vmem:[%s137 + $0x1a68] sm:$0xff] %v4057
        %5082 = vst [vmem:[%s137 + $0x1a70] sm:$0xff] %v4058
        %5083 = vst [vmem:[%s137 + $0x1a78] sm:$0xff] %v4059
        %5084 = vst [vmem:[%s137 + $0x1a80] sm:$0xff] %v4060
        %5085 = vst [vmem:[%s137 + $0x1a88] sm:$0xff] %v4061
        %5086 = vst [vmem:[%s137 + $0x1a90] sm:$0xff] %v4062
        %5087 = vst [vmem:[%s137 + $0x1a98] sm:$0xff] %v4063
        %5088 = vst [vmem:[%s137 + $0x1aa0] sm:$0xff] %v4064
        %5089 = vst [vmem:[%s137 + $0x1aa8] sm:$0xff] %v4065
        %5090 = vst [vmem:[%s137 + $0x1ab0] sm:$0xff] %v4066
        %5091 = vst [vmem:[%s137 + $0x1ab8] sm:$0xff] %v4067
        %5092 = vst [vmem:[%s137 + $0x1ac0] sm:$0xff] %v4068
        %5093 = vst [vmem:[%s137 + $0x1ac8] sm:$0xff] %v4069
        %5094 = vst [vmem:[%s137 + $0x1ad0] sm:$0xff] %v4070
        %5095 = vst [vmem:[%s137 + $0x1ad8] sm:$0xff] %v4071
        %5096 = vst [vmem:[%s137 + $0x1ae0] sm:$0xff] %v4072
        %5097 = vst [vmem:[%s137 + $0x1ae8] sm:$0xff] %v4073
        %5098 = vst [vmem:[%s137 + $0x1af0] sm:$0xff] %v4074
        %5099 = vst [vmem:[%s137 + $0x1af8] sm:$0xff] %v4075
        %5100 = vst [vmem:[%s137 + $0x1b00] sm:$0xff] %v4076
        %5101 = vst [vmem:[%s137 + $0x1b08] sm:$0xff] %v4077
        %5102 = vst [vmem:[%s137 + $0x1b10] sm:$0xff] %v4078
        %5103 = vst [vmem:[%s137 + $0x1b18] sm:$0xff] %v4079
        %5104 = vst [vmem:[%s137 + $0x1b20] sm:$0xff] %v4080
        %5105 = vst [vmem:[%s137 + $0x1b28] sm:$0xff] %v4081
        %5106 = vst [vmem:[%s137 + $0x1b30] sm:$0xff] %v4082
        %5107 = vst [vmem:[%s137 + $0x1b38] sm:$0xff] %v4083
        %5108 = vst [vmem:[%s137 + $0x1b40] sm:$0xff] %v4084
        %5109 = vst [vmem:[%s137 + $0x1b48] sm:$0xff] %v4085
        %5110 = vst [vmem:[%s137 + $0x1b50] sm:$0xff] %v4086
        %5111 = vst [vmem:[%s137 + $0x1b58] sm:$0xff] %v4087
        %5112 = vst [vmem:[%s137 + $0x1b60] sm:$0xff] %v4088
        %5113 = vst [vmem:[%s137 + $0x1b68] sm:$0xff] %v4089
        %5114 = vst [vmem:[%s137 + $0x1b70] sm:$0xff] %v4090
        %5115 = vst [vmem:[%s137 + $0x1b78] sm:$0xff] %v4091
        %5116 = vst [vmem:[%s137 + $0x1b80] sm:$0xff] %v4092
        %5117 = vst [vmem:[%s137 + $0x1b88] sm:$0xff] %v4093
        %5118 = vst [vmem:[%s137 + $0x1b90] sm:$0xff] %v4094
        %5119 = vst [vmem:[%s137 + $0x1b98] sm:$0xff] %v4095
        %5120 = vst [vmem:[%s137 + $0x1ba0] sm:$0xff] %v4096
        %5121 = vst [vmem:[%s137 + $0x1ba8] sm:$0xff] %v4097
        %5122 = vst [vmem:[%s137 + $0x1bb0] sm:$0xff] %v4098
        %5123 = vst [vmem:[%s137 + $0x1bb8] sm:$0xff] %v4099
        %5124 = vst [vmem:[%s137 + $0x1bc0] sm:$0xff] %v4100
        %5125 = vst [vmem:[%s137 + $0x1bc8] sm:$0xff] %v4101
        %5126 = vst [vmem:[%s137 + $0x1bd0] sm:$0xff] %v4102
        %5127 = vst [vmem:[%s137 + $0x1bd8] sm:$0xff] %v4103
        %5128 = vst [vmem:[%s137 + $0x1be0] sm:$0xff] %v4104
        %5129 = vst [vmem:[%s137 + $0x1be8] sm:$0xff] %v4105
        %5130 = vst [vmem:[%s137 + $0x1bf0] sm:$0xff] %v4106
        %5131 = vst [vmem:[%s137 + $0x1bf8] sm:$0xff] %v4107
        %5132 = vst [vmem:[%s137 + $0x1c00] sm:$0xff] %v4108
        %5133 = vst [vmem:[%s137 + $0x1c08] sm:$0xff] %v4109
        %5134 = vst [vmem:[%s137 + $0x1c10] sm:$0xff] %v4110
        %5135 = vst [vmem:[%s137 + $0x1c18] sm:$0xff] %v4111
        %5136 = vst [vmem:[%s137 + $0x1c20] sm:$0xff] %v4112
        %5137 = vst [vmem:[%s137 + $0x1c28] sm:$0xff] %v4113
        %5138 = vst [vmem:[%s137 + $0x1c30] sm:$0xff] %v4114
        %5139 = vst [vmem:[%s137 + $0x1c38] sm:$0xff] %v4115
        %5140 = vst [vmem:[%s137 + $0x1c40] sm:$0xff] %v4116
        %5141 = vst [vmem:[%s137 + $0x1c48] sm:$0xff] %v4117
        %5142 = vst [vmem:[%s137 + $0x1c50] sm:$0xff] %v4118
        %5143 = vst [vmem:[%s137 + $0x1c58] sm:$0xff] %v4119
        %5144 = vst [vmem:[%s137 + $0x1c60] sm:$0xff] %v4120
        %5145 = vst [vmem:[%s137 + $0x1c68] sm:$0xff] %v4121
        %5146 = vst [vmem:[%s137 + $0x1c70] sm:$0xff] %v4122
        %5147 = vst [vmem:[%s137 + $0x1c78] sm:$0xff] %v4123
        %5148 = vst [vmem:[%s137 + $0x1c80] sm:$0xff] %v4124
        %5149 = vst [vmem:[%s137 + $0x1c88] sm:$0xff] %v4125
        %5150 = vst [vmem:[%s137 + $0x1c90] sm:$0xff] %v4126
        %5151 = vst [vmem:[%s137 + $0x1c98] sm:$0xff] %v4127
        %5152 = vst [vmem:[%s137 + $0x1ca0] sm:$0xff] %v4128
        %5153 = vst [vmem:[%s137 + $0x1ca8] sm:$0xff] %v4129
        %5154 = vst [vmem:[%s137 + $0x1cb0] sm:$0xff] %v4130
        %5155 = vst [vmem:[%s137 + $0x1cb8] sm:$0xff] %v4131
        %5156 = vst [vmem:[%s137 + $0x1cc0] sm:$0xff] %v4132
        %5157 = vst [vmem:[%s137 + $0x1cc8] sm:$0xff] %v4133
        %5158 = vst [vmem:[%s137 + $0x1cd0] sm:$0xff] %v4134
        %5159 = vst [vmem:[%s137 + $0x1cd8] sm:$0xff] %v4135
        %5160 = vst [vmem:[%s137 + $0x1ce0] sm:$0xff] %v4136
        %5161 = vst [vmem:[%s137 + $0x1ce8] sm:$0xff] %v4137
        %5162 = vst [vmem:[%s137 + $0x1cf0] sm:$0xff] %v4138
        %5163 = vst [vmem:[%s137 + $0x1cf8] sm:$0xff] %v4139
        %5164 = vst [vmem:[%s137 + $0x1d00] sm:$0xff] %v4140
        %5165 = vst [vmem:[%s137 + $0x1d08] sm:$0xff] %v4141
        %5166 = vst [vmem:[%s137 + $0x1d10] sm:$0xff] %v4142
        %5167 = vst [vmem:[%s137 + $0x1d18] sm:$0xff] %v4143
        %5168 = vst [vmem:[%s137 + $0x1d20] sm:$0xff] %v4144
        %5169 = vst [vmem:[%s137 + $0x1d28] sm:$0xff] %v4145
        %5170 = vst [vmem:[%s137 + $0x1d30] sm:$0xff] %v4146
        %5171 = vst [vmem:[%s137 + $0x1d38] sm:$0xff] %v4147
        %5172 = vst [vmem:[%s137 + $0x1d40] sm:$0xff] %v4148
        %5173 = vst [vmem:[%s137 + $0x1d48] sm:$0xff] %v4149
        %5174 = vst [vmem:[%s137 + $0x1d50] sm:$0xff] %v4150
        %5175 = vst [vmem:[%s137 + $0x1d58] sm:$0xff] %v4151
        %5176 = vst [vmem:[%s137 + $0x1d60] sm:$0xff] %v4152
        %5177 = vst [vmem:[%s137 + $0x1d68] sm:$0xff] %v4153
        %5178 = vst [vmem:[%s137 + $0x1d70] sm:$0xff] %v4154
        %5179 = vst [vmem:[%s137 + $0x1d78] sm:$0xff] %v4155
        %5180 = vst [vmem:[%s137 + $0x1d80] sm:$0xff] %v4156
        %5181 = vst [vmem:[%s137 + $0x1d88] sm:$0xff] %v4157
        %5182 = vst [vmem:[%s137 + $0x1d90] sm:$0xff] %v4158
        %5183 = vst [vmem:[%s137 + $0x1d98] sm:$0xff] %v4159
        %5184 = vst [vmem:[%s137 + $0x1da0] sm:$0xff] %v4160
        %5185 = vst [vmem:[%s137 + $0x1da8] sm:$0xff] %v4161
        %5186 = vst [vmem:[%s137 + $0x1db0] sm:$0xff] %v4162
        %5187 = vst [vmem:[%s137 + $0x1db8] sm:$0xff] %v4163
        %5188 = vst [vmem:[%s137 + $0x1dc0] sm:$0xff] %v4164
        %5189 = vst [vmem:[%s137 + $0x1dc8] sm:$0xff] %v4165
        %5190 = vst [vmem:[%s137 + $0x1dd0] sm:$0xff] %v4166
        %5191 = vst [vmem:[%s137 + $0x1dd8] sm:$0xff] %v4167
        %5192 = vst [vmem:[%s137 + $0x1de0] sm:$0xff] %v4168
        %5193 = vst [vmem:[%s137 + $0x1de8] sm:$0xff] %v4169
        %5194 = vst [vmem:[%s137 + $0x1df0] sm:$0xff] %v4170
        %5195 = vst [vmem:[%s137 + $0x1df8] sm:$0xff] %v4171
        %5196 = vst [vmem:[%s137 + $0x1e00] sm:$0xff] %v4172
        %5197 = vst [vmem:[%s137 + $0x1e08] sm:$0xff] %v4173
        %5198 = vst [vmem:[%s137 + $0x1e10] sm:$0xff] %v4174
        %5199 = vst [vmem:[%s137 + $0x1e18] sm:$0xff] %v4175
        %5200 = vst [vmem:[%s137 + $0x1e20] sm:$0xff] %v4176
        %5201 = vst [vmem:[%s137 + $0x1e28] sm:$0xff] %v4177
        %5202 = vst [vmem:[%s137 + $0x1e30] sm:$0xff] %v4178
        %5203 = vst [vmem:[%s137 + $0x1e38] sm:$0xff] %v4179
        %5204 = vst [vmem:[%s137 + $0x1e40] sm:$0xff] %v4180
        %5205 = vst [vmem:[%s137 + $0x1e48] sm:$0xff] %v4181
        %5206 = vst [vmem:[%s137 + $0x1e50] sm:$0xff] %v4182
        %5207 = vst [vmem:[%s137 + $0x1e58] sm:$0xff] %v4183
        %5208 = vst [vmem:[%s137 + $0x1e60] sm:$0xff] %v4184
        %5209 = vst [vmem:[%s137 + $0x1e68] sm:$0xff] %v4185
        %5210 = vst [vmem:[%s137 + $0x1e70] sm:$0xff] %v4186
        %5211 = vst [vmem:[%s137 + $0x1e78] sm:$0xff] %v4187
        %5212 = vst [vmem:[%s137 + $0x1e80] sm:$0xff] %v4188
        %5213 = vst [vmem:[%s137 + $0x1e88] sm:$0xff] %v4189
        %5214 = vst [vmem:[%s137 + $0x1e90] sm:$0xff] %v4190
        %5215 = vst [vmem:[%s137 + $0x1e98] sm:$0xff] %v4191
        %5216 = vst [vmem:[%s137 + $0x1ea0] sm:$0xff] %v4192
        %5217 = vst [vmem:[%s137 + $0x1ea8] sm:$0xff] %v4193
        %5218 = vst [vmem:[%s137 + $0x1eb0] sm:$0xff] %v4194
        %5219 = vst [vmem:[%s137 + $0x1eb8] sm:$0xff] %v4195
        %5220 = vst [vmem:[%s137 + $0x1ec0] sm:$0xff] %v4196
        %5221 = vst [vmem:[%s137 + $0x1ec8] sm:$0xff] %v4197
        %5222 = vst [vmem:[%s137 + $0x1ed0] sm:$0xff] %v4198
        %5223 = vst [vmem:[%s137 + $0x1ed8] sm:$0xff] %v4199
        %5224 = vst [vmem:[%s137 + $0x1ee0] sm:$0xff] %v4200
        %5225 = vst [vmem:[%s137 + $0x1ee8] sm:$0xff] %v4201
        %5226 = vst [vmem:[%s137 + $0x1ef0] sm:$0xff] %v4202
        %5227 = vst [vmem:[%s137 + $0x1ef8] sm:$0xff] %v4203
        %5228 = vst [vmem:[%s137 + $0x1f00] sm:$0xff] %v4204
        %5229 = vst [vmem:[%s137 + $0x1f08] sm:$0xff] %v4205
        %5230 = vst [vmem:[%s137 + $0x1f10] sm:$0xff] %v4206
        %5231 = vst [vmem:[%s137 + $0x1f18] sm:$0xff] %v4207
        %5232 = vst [vmem:[%s137 + $0x1f20] sm:$0xff] %v4208
        %5233 = vst [vmem:[%s137 + $0x1f28] sm:$0xff] %v4209
        %5234 = vst [vmem:[%s137 + $0x1f30] sm:$0xff] %v4210
        %5235 = vst [vmem:[%s137 + $0x1f38] sm:$0xff] %v4211
        %5236 = vst [vmem:[%s137 + $0x1f40] sm:$0xff] %v4212
        %5237 = vst [vmem:[%s137 + $0x1f48] sm:$0xff] %v4213
        %5238 = vst [vmem:[%s137 + $0x1f50] sm:$0xff] %v4214
        %5239 = vst [vmem:[%s137 + $0x1f58] sm:$0xff] %v4215
        %5240 = vst [vmem:[%s137 + $0x1f60] sm:$0xff] %v4216
        %5241 = vst [vmem:[%s137 + $0x1f68] sm:$0xff] %v4217
        %5242 = vst [vmem:[%s137 + $0x1f70] sm:$0xff] %v4218
        %5243 = vst [vmem:[%s137 + $0x1f78] sm:$0xff] %v4219
        %5244 = vst [vmem:[%s137 + $0x1f80] sm:$0xff] %v4220
        %5245 = vst [vmem:[%s137 + $0x1f88] sm:$0xff] %v4221
        %5246 = vst [vmem:[%s137 + $0x1f90] sm:$0xff] %v4222
        %5247 = vst [vmem:[%s137 + $0x1f98] sm:$0xff] %v4223
        %5248 = vst [vmem:[%s137 + $0x1fa0] sm:$0xff] %v4224
        %5249 = vst [vmem:[%s137 + $0x1fa8] sm:$0xff] %v4225
        %5250 = vst [vmem:[%s137 + $0x1fb0] sm:$0xff] %v4226
        %5251 = vst [vmem:[%s137 + $0x1fb8] sm:$0xff] %v4227
        %5252 = vst [vmem:[%s137 + $0x1fc0] sm:$0xff] %v4228
        %5253 = vst [vmem:[%s137 + $0x1fc8] sm:$0xff] %v4229
        %5254 = vst [vmem:[%s137 + $0x1fd0] sm:$0xff] %v4230
        %5255 = vst [vmem:[%s137 + $0x1fd8] sm:$0xff] %v4231
        %5256 = vst [vmem:[%s137 + $0x1fe0] sm:$0xff] %v4232
        %5257 = vst [vmem:[%s137 + $0x1fe8] sm:$0xff] %v4233
        %5258 = vst [vmem:[%s137 + $0x1ff0] sm:$0xff] %v4234
        %5259 = vst [vmem:[%s137 + $0x1ff8] sm:$0xff] %v4235
        %s5260 = sand.u32 %s52, 1
        %s5261 = scalar_lea.sflag [#allocation4], %s5260
        %s5262 = sand.u32 %s52, 1
        %s5263 = smul.addr %s5262, 8192
        %s5264 = scalar_lea.vmem [#allocation5], %s5263
        // Predicated region
        $region29: #{tpu_custom_call.1} parent=23 // pred_check
          %p5265 = pneg %p62
        $region30: #{tpu_custom_call.1} parent=23 // pred_check_branch
          %5267 = sbr.rel (%p5265) target = $region32
        $region31: #{tpu_custom_call.1} parent=23 // pred_region
          %s5268 = smul.u32 128, %s18
          %5270 = vsyncadd %s5261, 0
          %s5271 = smul.addr %s5268, 8
          %s5272 = smul.addr %s5271, 8
          %s5273 = scalar_lea.hbm %s1, %s5272
          %s5274 = sshll.u32 %s5264, 4
          %s5275 = int_to_ptr.vmem [resolvable:$true] %s5274
          %s5276 = sshll.u32 %s5273, 4
          %s5277 = int_to_ptr.hbm [resolvable:$true] %s5276
          %5282 = dma.vmem_to_hbm [thread:$0]  %s5275, 131072, %s5277, %s5261, 1024, 1024, 64
        $region32: #{tpu_custom_call.1} parent=23 // pred_fallthru
          _
      $region24: #{tpu_custom_call.1} parent=5 // pred_fallthru
        _
      %p5283 = scmp.le.s32.totalorder 2, %s13
      // Predicated region
      $region33: #{tpu_custom_call.1} parent=5 // pred_check
        %p5284 = pneg %p5283
      $region34: #{tpu_custom_call.1} parent=5 // pred_check_branch
        %5286 = sbr.rel (%p5284) target = $region36
      $region35: #{tpu_custom_call.1} parent=5 // pred_region
        %s5287 = ssub.s32 %s13, 2
        // Predicated region
        $region37: #{tpu_custom_call.1} parent=35 // pred_check
          %p5288 = pneg %p68
        $region38: #{tpu_custom_call.1} parent=35 // pred_check_branch
          %5290 = sbr.rel (%p5288) target = $region40
        $region39: #{tpu_custom_call.1} parent=35 // pred_region
          %s5291 = sand.u32 %s53, 1
          %s5292 = scalar_lea.sflag [#allocation4], %s5291
          %s5293 = sand.u32 %s53, 1
          %s5294 = smul.addr %s5293, 8192
          %s5295 = scalar_lea.vmem [#allocation5], %s5294
          %5297 = dma.done %s5292, 131072
        $region40: #{tpu_custom_call.1} parent=35 // pred_fallthru
          _
      $region36: #{tpu_custom_call.1} parent=5 // pred_fallthru
        _
    $region6: #{tpu_custom_call.1} parent=1 // loop_footer
      %s17 = sadd.s32 1, %s13
    $region7: #{tpu_custom_call.1} parent=1 // loop_footer_branch
      %12 = sbr.rel target = $region3
    $region8: #{tpu_custom_call.1} parent=1 // loop_exit
      _
    %5298 = vsyncpa [#allocation3], 1
    %s5299 = scalar_lea.sflag [#allocation3], 1
    %5300 = vsyncpa %s5299, 1
    %5301 = vsyncpa [#allocation4], 1
    %s5302 = scalar_lea.sflag [#allocation4], 1
    %5303 = vsyncpa %s5302, 1

</llo_original>
